<compile_context>
chip_gen: v6e
topology: v6e:2x2x1
jax: 0.10.0
libtpu: 0.0.40
codegen_flags: <defaults>
</compile_context>

<pallas_src>
import functools

import jax
import jax.numpy as jnp
from jax import lax
from jax.experimental import pallas as pl
from jax.experimental.pallas import tpu as pltpu


def _round_up(x, m):
    return ((x + m - 1) // m) * m


# ----------------------------------------------------------------------------
# Fused 3x3 SAME conv + bias + ReLU + 2x2 max-pool (stride 2).
# One grid step == one image.  Cin == 1 -> VPU broadcast mul-add; Cin > 1 ->
# per-row MXU dots.  Pooled output is written directly; the unpooled
# activation lives only in VMEM/vregs.
# ----------------------------------------------------------------------------
def _conv3x3_relu_pool_kernel(x_ref, w_ref, b_ref, o_ref, rowbuf_ref, *,
                              H, W, Cin, Cout):
    # x_ref : (1, H+2, W+2, Cin)    padded NHWC image
    # w_ref : (3, 3, Cin, Cout)     HWIO weights
    # b_ref : (1, Cout)
    # o_ref : (1, H//2, W//2, Cout) pooled output
    # rowbuf_ref: VMEM scratch (W, Cout) used for the horizontal pool.
    Ho, Wo = H // 2, W // 2
    bias = b_ref[...]                                        # (1, Cout)

    def body(r, carry):
        row_max = None
        for dy in range(2):                                  # two conv rows per pooled row
            h = 2 * r + dy
            acc = jnp.zeros((W, Cout), jnp.float32)
            for ky in range(3):
                for kx in range(3):
                    xs = x_ref[0, h + ky, pl.ds(kx, W), :]   # (W, Cin)
                    wt = w_ref[ky, kx]                       # (Cin, Cout)
                    if Cin == 1:
                        acc = acc + xs * wt                  # VPU outer product
                    else:
                        acc = acc + jnp.dot(
                            xs, wt, preferred_element_type=jnp.float32)
            row_max = acc if row_max is None else jnp.maximum(row_max, acc)
        # bias + ReLU commute with max-pool (monotone) -> apply once per row.
        row = jnp.maximum(row_max + bias, 0.0)               # (W, Cout)
        rowbuf_ref[...] = row
        pooled = jnp.maximum(rowbuf_ref[pl.ds(0, Wo, 2), :],  # even columns
                             rowbuf_ref[pl.ds(1, Wo, 2), :])  # odd columns
        o_ref[0, r] = pooled
        return carry

    lax.fori_loop(0, Ho, body, 0)


def conv3x3_relu_pool(x_nhwc, w_oihw, b):
    N, H, W, Cin = x_nhwc.shape
    Cout = w_oihw.shape[0]
    Ho, Wo = H // 2, W // 2
    xp = jnp.pad(x_nhwc, ((0, 0), (1, 1), (1, 1), (0, 0)))   # SAME padding
    w_hwio = jnp.transpose(w_oihw, (2, 3, 1, 0))             # (3,3,Cin,Cout)
    kern = functools.partial(_conv3x3_relu_pool_kernel,
                             H=H, W=W, Cin=Cin, Cout=Cout)
    return pl.pallas_call(
        kern,
        out_shape=jax.ShapeDtypeStruct((N, Ho, Wo, Cout), jnp.float32),
        grid=(N,),
        in_specs=[
            pl.BlockSpec((1, H + 2, W + 2, Cin), lambda n: (n, 0, 0, 0)),
            pl.BlockSpec((3, 3, Cin, Cout), lambda n: (0, 0, 0, 0)),
            pl.BlockSpec((1, Cout), lambda n: (0, 0)),
        ],
        out_specs=pl.BlockSpec((1, Ho, Wo, Cout), lambda n: (n, 0, 0, 0)),
        scratch_shapes=[pltpu.VMEM((W, Cout), jnp.float32)],
        compiler_params=pltpu.CompilerParams(
            dimension_semantics=("parallel",),
            vmem_limit_bytes=32 * 1024 * 1024),
    )(xp, w_hwio, b.reshape(1, Cout))


# ----------------------------------------------------------------------------
# Fused fc1 (+ReLU) + fc2 in a single kernel.  fc2's tiny weight/bias stay
# VMEM-resident; the fc1 hidden activation never round-trips HBM.
# ----------------------------------------------------------------------------
def _fc_fused_kernel(x_ref, w1_ref, b1_ref, w2_ref, b2_ref, o_ref):
    h = jnp.dot(x_ref[...], w1_ref[...], preferred_element_type=jnp.float32)
    h = jnp.maximum(h + b1_ref[...], 0.0)
    y = jnp.dot(h, w2_ref[...], preferred_element_type=jnp.float32) + b2_ref[...]
    o_ref[...] = y.astype(o_ref.dtype)


def fc1_fc2_fused(x, w1, b1, w2, b2):
    # x: (M, K); w1: (K, Hf); w2: (Hf, O)
    M, K = x.shape
    Hf = w1.shape[1]
    O = w2.shape[1]
    # M tiling: always >= 2 grid steps and an even step count (pipelining +
    # both v7x TensorCores), tm a multiple of 8, capped so one (tm, K) f32
    # block stays ~3 MiB (fits v5e's 16 MiB scoped VMEM with double-buffering).
    Mp = _round_up(max(M, 2), 16)
    tm = min(256, Mp // 2)
    Mp = _round_up(Mp, 2 * tm)
    xpad = x if Mp == M else jnp.pad(x, ((0, Mp - M), (0, 0)))
    out = pl.pallas_call(
        _fc_fused_kernel,
        out_shape=jax.ShapeDtypeStruct((Mp, O), jnp.float32),
        grid=(Mp // tm,),
        in_specs=[
            pl.BlockSpec((tm, K), lambda i: (i, 0)),
            pl.BlockSpec((K, Hf), lambda i: (0, 0)),
            pl.BlockSpec((1, Hf), lambda i: (0, 0)),
            pl.BlockSpec((Hf, O), lambda i: (0, 0)),
            pl.BlockSpec((1, O), lambda i: (0, 0)),
        ],
        out_specs=pl.BlockSpec((tm, O), lambda i: (i, 0)),
        compiler_params=pltpu.CompilerParams(
            dimension_semantics=("parallel",),
            vmem_limit_bytes=32 * 1024 * 1024),
    )(xpad, w1, b1.reshape(1, Hf), w2, b2.reshape(1, O))
    return out[:M]


# ----------------------------------------------------------------------------
# Forward pass (NCHW external interface, NHWC internally)
# ----------------------------------------------------------------------------
def conv_test_net_forward(x_nchw, params):
    w1, b1, w2, b2, wf1, bf1, wf2, bf2 = params
    N = x_nchw.shape[0]
    x = jnp.transpose(x_nchw, (0, 2, 3, 1))                # (N, 28, 28, 1)
    y = conv3x3_relu_pool(x, w1, b1)                       # (N, 14, 14, 32)
    y = conv3x3_relu_pool(y, w2, b2)                       # (N,  7,  7, 64)
    Ho, Wo, C = y.shape[1], y.shape[2], y.shape[3]
    flat = y.reshape(N, Ho * Wo * C)                       # NHWC flatten (free)
    # torch flattens NCHW; fold that permutation into fc1's weight columns
    # instead of transposing the activation.
    j = jnp.arange(Ho * Wo * C)
    h_idx = j // (Wo * C)
    w_idx = (j // C) % Wo
    c_idx = j % C
    i_of_j = c_idx * (Ho * Wo) + h_idx * Wo + w_idx
    w1p = wf1[:, i_of_j].T                                 # (3136, 128)
    return fc1_fc2_fused(flat, w1p, bf1, wf2.T, bf2)       # (N, 10)


# ----------------------------------------------------------------------------
# Parameters + pure-JAX reference
# ----------------------------------------------------------------------------
def init_params(key):
    ks = jax.random.split(key, 8)

    def u(k, shape, fan_in):
        bound = 1.0 / jnp.sqrt(jnp.float32(fan_in))
        return jax.random.uniform(k, shape, jnp.float32, -bound, bound)

    w1 = u(ks[0], (32, 1, 3, 3), 9)        # conv1.weight (OIHW)
    b1 = u(ks[1], (32,), 9)                # conv1.bias
    w2 = u(ks[2], (64, 32, 3, 3), 288)     # conv2.weight
    b2 = u(ks[3], (64,), 288)              # conv2.bias
    wf1 = u(ks[4], (128, 3136), 3136)      # fc1.weight (out, in)
    bf1 = u(ks[5], (128,), 3136)           # fc1.bias
    wf2 = u(ks[6], (10, 128), 128)         # fc2.weight
    bf2 = u(ks[7], (10,), 128)             # fc2.bias
    return (w1, b1, w2, b2, wf1, bf1, wf2, bf2)


def reference_forward(x_nchw, params):
    """Pure-JAX reference for correctness checking."""
    w1, b1, w2, b2, wf1, bf1, wf2, bf2 = params

    def conv(x, w, b):
        y = lax.conv_general_dilated(
            x, w, (1, 1), "SAME",
            dimension_numbers=("NCHW", "OIHW", "NCHW"),
            precision=lax.Precision.HIGHEST)
        return jax.nn.relu(y + b[None, :, None, None])

    def pool(x):
        return lax.reduce_window(x, -jnp.inf, lax.max,
                                 (1, 1, 2, 2), (1, 1, 2, 2), "VALID")

    y = pool(conv(x_nchw, w1, b1))
    y = pool(conv(y, w2, b2))
    y = y.reshape(y.shape[0], -1)
    y = jax.nn.relu(jnp.dot(y, wf1.T, precision=lax.Precision.HIGHEST) + bf1)
    return jnp.dot(y, wf2.T, precision=lax.Precision.HIGHEST) + bf2


if __name__ == "__main__":
    key = jax.random.PRNGKey(0)
    pkey, xkey = jax.random.split(key)
    params = init_params(pkey)
    # fc1's 3136 = 64 * 7 * 7 => 28x28 single-channel input images.
    x = jax.random.normal(xkey, (2, 1, 28, 28), jnp.float32)

    out = jax.jit(conv_test_net_forward)(x, params)
    out = jax.block_until_ready(out)

    ref = reference_forward(x, params)
    assert out.shape == (2, 10), out.shape
    max_err = float(jnp.max(jnp.abs(out - ref)))
    assert jnp.allclose(out, ref, atol=1e-3, rtol=1e-3), f"max_err={max_err}"
    print("KERNEL_OK")
</pallas_src>

<mosaic_0001>
module attributes {stable_mosaic.version = 11 : i64} {
  func.func @_conv3x3_relu_pool_kernel(%arg0: i32, %arg1: memref<1x30x30x1xf32, #tpu.memory_space<vmem>>, %arg2: memref<3x3x1x32xf32, #tpu.memory_space<vmem>>, %arg3: memref<1x32xf32, #tpu.memory_space<vmem>>, %arg4: memref<1x14x14x32xf32, #tpu.memory_space<vmem>>, %arg5: memref<28x32xf32, #tpu.memory_space<vmem>>) attributes {dimension_semantics = [#tpu.dimension_semantics<parallel>], iteration_bounds = array<i64: 2>, scalar_prefetch = 0 : i64, scratch_operands = 1 : i64, tpu.core_type = #tpu.core_type<tc>, window_params = [{transform_indices = @transform_0, window_bounds = array<i64: 1, 30, 30, 1>}, {pipeline_mode = #tpu.pipeline_mode<synchronous>, transform_indices = @transform_1, window_bounds = array<i64: 3, 3, 1, 32>}, {pipeline_mode = #tpu.pipeline_mode<synchronous>, transform_indices = @transform_2, window_bounds = array<i64: 1, 32>}, {transform_indices = @transform_3, window_bounds = array<i64: 1, 14, 14, 32>}]} {
    %c0 = arith.constant 0 : index
    %c0_0 = arith.constant 0 : index
    %0 = vector.load %arg3[%c0, %c0_0] : memref<1x32xf32, #tpu.memory_space<vmem>>, vector<1x32xf32>
    %c0_i32 = arith.constant 0 : i32
    %c14_i32 = arith.constant 14 : i32
    %1 = arith.addi %c0_i32, %c14_i32 : i32
    %c1_i32 = arith.constant 1 : i32
    scf.for %arg6 = %c0_i32 to %1 step %c1_i32  : i32 {
      %c2_i32 = arith.constant 2 : i32
      %2 = arith.muli %c2_i32, %arg6 : i32
      %c0_i32_2 = arith.constant 0 : i32
      %3 = arith.addi %2, %c0_i32_2 : i32
      %cst = arith.constant 0.000000e+00 : f32
      %4 = vector.broadcast %cst : f32 to vector<28x32xf32>
      %c0_i32_3 = arith.constant 0 : i32
      %5 = arith.addi %3, %c0_i32_3 : i32
      %c0_4 = arith.constant 0 : index
      %6 = arith.index_cast %5 : i32 to index
      %c0_5 = arith.constant 0 : index
      %c0_6 = arith.constant 0 : index
      %7 = vector.load %arg1[%c0_4, %6, %c0_5, %c0_6] : memref<1x30x30x1xf32, #tpu.memory_space<vmem>>, vector<1x1x28x1xf32>
      %8 = vector.shape_cast %7 : vector<1x1x28x1xf32> to vector<28x1xf32>
      %c0_7 = arith.constant 0 : index
      %c0_8 = arith.constant 0 : index
      %c0_9 = arith.constant 0 : index
      %c0_10 = arith.constant 0 : index
      %9 = vector.load %arg2[%c0_7, %c0_8, %c0_9, %c0_10] : memref<3x3x1x32xf32, #tpu.memory_space<vmem>>, vector<1x1x1x32xf32>
      %10 = vector.shape_cast %9 : vector<1x1x1x32xf32> to vector<1x32xf32>
      %11 = vector.broadcast %8 : vector<28x1xf32> to vector<28x32xf32>
      %12 = vector.broadcast %10 : vector<1x32xf32> to vector<28x32xf32>
      %13 = arith.mulf %11, %12 : vector<28x32xf32>
      %14 = arith.addf %4, %13 : vector<28x32xf32>
      %c0_i32_11 = arith.constant 0 : i32
      %15 = arith.addi %3, %c0_i32_11 : i32
      %c0_12 = arith.constant 0 : index
      %16 = arith.index_cast %15 : i32 to index
      %c1 = arith.constant 1 : index
      %c0_13 = arith.constant 0 : index
      %17 = vector.load %arg1[%c0_12, %16, %c1, %c0_13] : memref<1x30x30x1xf32, #tpu.memory_space<vmem>>, vector<1x1x28x1xf32>
      %18 = vector.shape_cast %17 : vector<1x1x28x1xf32> to vector<28x1xf32>
      %c0_14 = arith.constant 0 : index
      %c1_15 = arith.constant 1 : index
      %c0_16 = arith.constant 0 : index
      %c0_17 = arith.constant 0 : index
      %19 = vector.load %arg2[%c0_14, %c1_15, %c0_16, %c0_17] : memref<3x3x1x32xf32, #tpu.memory_space<vmem>>, vector<1x1x1x32xf32>
      %20 = vector.shape_cast %19 : vector<1x1x1x32xf32> to vector<1x32xf32>
      %21 = vector.broadcast %18 : vector<28x1xf32> to vector<28x32xf32>
      %22 = vector.broadcast %20 : vector<1x32xf32> to vector<28x32xf32>
      %23 = arith.mulf %21, %22 : vector<28x32xf32>
      %24 = arith.addf %14, %23 : vector<28x32xf32>
      %c0_i32_18 = arith.constant 0 : i32
      %25 = arith.addi %3, %c0_i32_18 : i32
      %c0_19 = arith.constant 0 : index
      %26 = arith.index_cast %25 : i32 to index
      %c2 = arith.constant 2 : index
      %c0_20 = arith.constant 0 : index
      %27 = vector.load %arg1[%c0_19, %26, %c2, %c0_20] : memref<1x30x30x1xf32, #tpu.memory_space<vmem>>, vector<1x1x28x1xf32>
      %28 = vector.shape_cast %27 : vector<1x1x28x1xf32> to vector<28x1xf32>
      %c0_21 = arith.constant 0 : index
      %c2_22 = arith.constant 2 : index
      %c0_23 = arith.constant 0 : index
      %c0_24 = arith.constant 0 : index
      %29 = vector.load %arg2[%c0_21, %c2_22, %c0_23, %c0_24] : memref<3x3x1x32xf32, #tpu.memory_space<vmem>>, vector<1x1x1x32xf32>
      %30 = vector.shape_cast %29 : vector<1x1x1x32xf32> to vector<1x32xf32>
      %31 = vector.broadcast %28 : vector<28x1xf32> to vector<28x32xf32>
      %32 = vector.broadcast %30 : vector<1x32xf32> to vector<28x32xf32>
      %33 = arith.mulf %31, %32 : vector<28x32xf32>
      %34 = arith.addf %24, %33 : vector<28x32xf32>
      %c1_i32_25 = arith.constant 1 : i32
      %35 = arith.addi %3, %c1_i32_25 : i32
      %c0_26 = arith.constant 0 : index
      %36 = arith.index_cast %35 : i32 to index
      %c0_27 = arith.constant 0 : index
      %c0_28 = arith.constant 0 : index
      %37 = vector.load %arg1[%c0_26, %36, %c0_27, %c0_28] : memref<1x30x30x1xf32, #tpu.memory_space<vmem>>, vector<1x1x28x1xf32>
      %38 = vector.shape_cast %37 : vector<1x1x28x1xf32> to vector<28x1xf32>
      %c1_29 = arith.constant 1 : index
      %c0_30 = arith.constant 0 : index
      %c0_31 = arith.constant 0 : index
      %c0_32 = arith.constant 0 : index
      %39 = vector.load %arg2[%c1_29, %c0_30, %c0_31, %c0_32] : memref<3x3x1x32xf32, #tpu.memory_space<vmem>>, vector<1x1x1x32xf32>
      %40 = vector.shape_cast %39 : vector<1x1x1x32xf32> to vector<1x32xf32>
      %41 = vector.broadcast %38 : vector<28x1xf32> to vector<28x32xf32>
      %42 = vector.broadcast %40 : vector<1x32xf32> to vector<28x32xf32>
      %43 = arith.mulf %41, %42 : vector<28x32xf32>
      %44 = arith.addf %34, %43 : vector<28x32xf32>
      %c1_i32_33 = arith.constant 1 : i32
      %45 = arith.addi %3, %c1_i32_33 : i32
      %c0_34 = arith.constant 0 : index
      %46 = arith.index_cast %45 : i32 to index
      %c1_35 = arith.constant 1 : index
      %c0_36 = arith.constant 0 : index
      %47 = vector.load %arg1[%c0_34, %46, %c1_35, %c0_36] : memref<1x30x30x1xf32, #tpu.memory_space<vmem>>, vector<1x1x28x1xf32>
      %48 = vector.shape_cast %47 : vector<1x1x28x1xf32> to vector<28x1xf32>
      %c1_37 = arith.constant 1 : index
      %c1_38 = arith.constant 1 : index
      %c0_39 = arith.constant 0 : index
      %c0_40 = arith.constant 0 : index
      %49 = vector.load %arg2[%c1_37, %c1_38, %c0_39, %c0_40] : memref<3x3x1x32xf32, #tpu.memory_space<vmem>>, vector<1x1x1x32xf32>
      %50 = vector.shape_cast %49 : vector<1x1x1x32xf32> to vector<1x32xf32>
      %51 = vector.broadcast %48 : vector<28x1xf32> to vector<28x32xf32>
      %52 = vector.broadcast %50 : vector<1x32xf32> to vector<28x32xf32>
      %53 = arith.mulf %51, %52 : vector<28x32xf32>
      %54 = arith.addf %44, %53 : vector<28x32xf32>
      %c1_i32_41 = arith.constant 1 : i32
      %55 = arith.addi %3, %c1_i32_41 : i32
      %c0_42 = arith.constant 0 : index
      %56 = arith.index_cast %55 : i32 to index
      %c2_43 = arith.constant 2 : index
      %c0_44 = arith.constant 0 : index
      %57 = vector.load %arg1[%c0_42, %56, %c2_43, %c0_44] : memref<1x30x30x1xf32, #tpu.memory_space<vmem>>, vector<1x1x28x1xf32>
      %58 = vector.shape_cast %57 : vector<1x1x28x1xf32> to vector<28x1xf32>
      %c1_45 = arith.constant 1 : index
      %c2_46 = arith.constant 2 : index
      %c0_47 = arith.constant 0 : index
      %c0_48 = arith.constant 0 : index
      %59 = vector.load %arg2[%c1_45, %c2_46, %c0_47, %c0_48] : memref<3x3x1x32xf32, #tpu.memory_space<vmem>>, vector<1x1x1x32xf32>
      %60 = vector.shape_cast %59 : vector<1x1x1x32xf32> to vector<1x32xf32>
      %61 = vector.broadcast %58 : vector<28x1xf32> to vector<28x32xf32>
      %62 = vector.broadcast %60 : vector<1x32xf32> to vector<28x32xf32>
      %63 = arith.mulf %61, %62 : vector<28x32xf32>
      %64 = arith.addf %54, %63 : vector<28x32xf32>
      %c2_i32_49 = arith.constant 2 : i32
      %65 = arith.addi %3, %c2_i32_49 : i32
      %c0_50 = arith.constant 0 : index
      %66 = arith.index_cast %65 : i32 to index
      %c0_51 = arith.constant 0 : index
      %c0_52 = arith.constant 0 : index
      %67 = vector.load %arg1[%c0_50, %66, %c0_51, %c0_52] : memref<1x30x30x1xf32, #tpu.memory_space<vmem>>, vector<1x1x28x1xf32>
      %68 = vector.shape_cast %67 : vector<1x1x28x1xf32> to vector<28x1xf32>
      %c2_53 = arith.constant 2 : index
      %c0_54 = arith.constant 0 : index
      %c0_55 = arith.constant 0 : index
      %c0_56 = arith.constant 0 : index
      %69 = vector.load %arg2[%c2_53, %c0_54, %c0_55, %c0_56] : memref<3x3x1x32xf32, #tpu.memory_space<vmem>>, vector<1x1x1x32xf32>
      %70 = vector.shape_cast %69 : vector<1x1x1x32xf32> to vector<1x32xf32>
      %71 = vector.broadcast %68 : vector<28x1xf32> to vector<28x32xf32>
      %72 = vector.broadcast %70 : vector<1x32xf32> to vector<28x32xf32>
      %73 = arith.mulf %71, %72 : vector<28x32xf32>
      %74 = arith.addf %64, %73 : vector<28x32xf32>
      %c2_i32_57 = arith.constant 2 : i32
      %75 = arith.addi %3, %c2_i32_57 : i32
      %c0_58 = arith.constant 0 : index
      %76 = arith.index_cast %75 : i32 to index
      %c1_59 = arith.constant 1 : index
      %c0_60 = arith.constant 0 : index
      %77 = vector.load %arg1[%c0_58, %76, %c1_59, %c0_60] : memref<1x30x30x1xf32, #tpu.memory_space<vmem>>, vector<1x1x28x1xf32>
      %78 = vector.shape_cast %77 : vector<1x1x28x1xf32> to vector<28x1xf32>
      %c2_61 = arith.constant 2 : index
      %c1_62 = arith.constant 1 : index
      %c0_63 = arith.constant 0 : index
      %c0_64 = arith.constant 0 : index
      %79 = vector.load %arg2[%c2_61, %c1_62, %c0_63, %c0_64] : memref<3x3x1x32xf32, #tpu.memory_space<vmem>>, vector<1x1x1x32xf32>
      %80 = vector.shape_cast %79 : vector<1x1x1x32xf32> to vector<1x32xf32>
      %81 = vector.broadcast %78 : vector<28x1xf32> to vector<28x32xf32>
      %82 = vector.broadcast %80 : vector<1x32xf32> to vector<28x32xf32>
      %83 = arith.mulf %81, %82 : vector<28x32xf32>
      %84 = arith.addf %74, %83 : vector<28x32xf32>
      %c2_i32_65 = arith.constant 2 : i32
      %85 = arith.addi %3, %c2_i32_65 : i32
      %c0_66 = arith.constant 0 : index
      %86 = arith.index_cast %85 : i32 to index
      %c2_67 = arith.constant 2 : index
      %c0_68 = arith.constant 0 : index
      %87 = vector.load %arg1[%c0_66, %86, %c2_67, %c0_68] : memref<1x30x30x1xf32, #tpu.memory_space<vmem>>, vector<1x1x28x1xf32>
      %88 = vector.shape_cast %87 : vector<1x1x28x1xf32> to vector<28x1xf32>
      %c2_69 = arith.constant 2 : index
      %c2_70 = arith.constant 2 : index
      %c0_71 = arith.constant 0 : index
      %c0_72 = arith.constant 0 : index
      %89 = vector.load %arg2[%c2_69, %c2_70, %c0_71, %c0_72] : memref<3x3x1x32xf32, #tpu.memory_space<vmem>>, vector<1x1x1x32xf32>
      %90 = vector.shape_cast %89 : vector<1x1x1x32xf32> to vector<1x32xf32>
      %91 = vector.broadcast %88 : vector<28x1xf32> to vector<28x32xf32>
      %92 = vector.broadcast %90 : vector<1x32xf32> to vector<28x32xf32>
      %93 = arith.mulf %91, %92 : vector<28x32xf32>
      %94 = arith.addf %84, %93 : vector<28x32xf32>
      %c2_i32_73 = arith.constant 2 : i32
      %95 = arith.muli %c2_i32_73, %arg6 : i32
      %c1_i32_74 = arith.constant 1 : i32
      %96 = arith.addi %95, %c1_i32_74 : i32
      %cst_75 = arith.constant 0.000000e+00 : f32
      %97 = vector.broadcast %cst_75 : f32 to vector<28x32xf32>
      %c0_i32_76 = arith.constant 0 : i32
      %98 = arith.addi %96, %c0_i32_76 : i32
      %c0_77 = arith.constant 0 : index
      %99 = arith.index_cast %98 : i32 to index
      %c0_78 = arith.constant 0 : index
      %c0_79 = arith.constant 0 : index
      %100 = vector.load %arg1[%c0_77, %99, %c0_78, %c0_79] : memref<1x30x30x1xf32, #tpu.memory_space<vmem>>, vector<1x1x28x1xf32>
      %101 = vector.shape_cast %100 : vector<1x1x28x1xf32> to vector<28x1xf32>
      %c0_80 = arith.constant 0 : index
      %c0_81 = arith.constant 0 : index
      %c0_82 = arith.constant 0 : index
      %c0_83 = arith.constant 0 : index
      %102 = vector.load %arg2[%c0_80, %c0_81, %c0_82, %c0_83] : memref<3x3x1x32xf32, #tpu.memory_space<vmem>>, vector<1x1x1x32xf32>
      %103 = vector.shape_cast %102 : vector<1x1x1x32xf32> to vector<1x32xf32>
      %104 = vector.broadcast %101 : vector<28x1xf32> to vector<28x32xf32>
      %105 = vector.broadcast %103 : vector<1x32xf32> to vector<28x32xf32>
      %106 = arith.mulf %104, %105 : vector<28x32xf32>
      %107 = arith.addf %97, %106 : vector<28x32xf32>
      %c0_i32_84 = arith.constant 0 : i32
      %108 = arith.addi %96, %c0_i32_84 : i32
      %c0_85 = arith.constant 0 : index
      %109 = arith.index_cast %108 : i32 to index
      %c1_86 = arith.constant 1 : index
      %c0_87 = arith.constant 0 : index
      %110 = vector.load %arg1[%c0_85, %109, %c1_86, %c0_87] : memref<1x30x30x1xf32, #tpu.memory_space<vmem>>, vector<1x1x28x1xf32>
      %111 = vector.shape_cast %110 : vector<1x1x28x1xf32> to vector<28x1xf32>
      %c0_88 = arith.constant 0 : index
      %c1_89 = arith.constant 1 : index
      %c0_90 = arith.constant 0 : index
      %c0_91 = arith.constant 0 : index
      %112 = vector.load %arg2[%c0_88, %c1_89, %c0_90, %c0_91] : memref<3x3x1x32xf32, #tpu.memory_space<vmem>>, vector<1x1x1x32xf32>
      %113 = vector.shape_cast %112 : vector<1x1x1x32xf32> to vector<1x32xf32>
      %114 = vector.broadcast %111 : vector<28x1xf32> to vector<28x32xf32>
      %115 = vector.broadcast %113 : vector<1x32xf32> to vector<28x32xf32>
      %116 = arith.mulf %114, %115 : vector<28x32xf32>
      %117 = arith.addf %107, %116 : vector<28x32xf32>
      %c0_i32_92 = arith.constant 0 : i32
      %118 = arith.addi %96, %c0_i32_92 : i32
      %c0_93 = arith.constant 0 : index
      %119 = arith.index_cast %118 : i32 to index
      %c2_94 = arith.constant 2 : index
      %c0_95 = arith.constant 0 : index
      %120 = vector.load %arg1[%c0_93, %119, %c2_94, %c0_95] : memref<1x30x30x1xf32, #tpu.memory_space<vmem>>, vector<1x1x28x1xf32>
      %121 = vector.shape_cast %120 : vector<1x1x28x1xf32> to vector<28x1xf32>
      %c0_96 = arith.constant 0 : index
      %c2_97 = arith.constant 2 : index
      %c0_98 = arith.constant 0 : index
      %c0_99 = arith.constant 0 : index
      %122 = vector.load %arg2[%c0_96, %c2_97, %c0_98, %c0_99] : memref<3x3x1x32xf32, #tpu.memory_space<vmem>>, vector<1x1x1x32xf32>
      %123 = vector.shape_cast %122 : vector<1x1x1x32xf32> to vector<1x32xf32>
      %124 = vector.broadcast %121 : vector<28x1xf32> to vector<28x32xf32>
      %125 = vector.broadcast %123 : vector<1x32xf32> to vector<28x32xf32>
      %126 = arith.mulf %124, %125 : vector<28x32xf32>
      %127 = arith.addf %117, %126 : vector<28x32xf32>
      %c1_i32_100 = arith.constant 1 : i32
      %128 = arith.addi %96, %c1_i32_100 : i32
      %c0_101 = arith.constant 0 : index
      %129 = arith.index_cast %128 : i32 to index
      %c0_102 = arith.constant 0 : index
      %c0_103 = arith.constant 0 : index
      %130 = vector.load %arg1[%c0_101, %129, %c0_102, %c0_103] : memref<1x30x30x1xf32, #tpu.memory_space<vmem>>, vector<1x1x28x1xf32>
      %131 = vector.shape_cast %130 : vector<1x1x28x1xf32> to vector<28x1xf32>
      %c1_104 = arith.constant 1 : index
      %c0_105 = arith.constant 0 : index
      %c0_106 = arith.constant 0 : index
      %c0_107 = arith.constant 0 : index
      %132 = vector.load %arg2[%c1_104, %c0_105, %c0_106, %c0_107] : memref<3x3x1x32xf32, #tpu.memory_space<vmem>>, vector<1x1x1x32xf32>
      %133 = vector.shape_cast %132 : vector<1x1x1x32xf32> to vector<1x32xf32>
      %134 = vector.broadcast %131 : vector<28x1xf32> to vector<28x32xf32>
      %135 = vector.broadcast %133 : vector<1x32xf32> to vector<28x32xf32>
      %136 = arith.mulf %134, %135 : vector<28x32xf32>
      %137 = arith.addf %127, %136 : vector<28x32xf32>
      %c1_i32_108 = arith.constant 1 : i32
      %138 = arith.addi %96, %c1_i32_108 : i32
      %c0_109 = arith.constant 0 : index
      %139 = arith.index_cast %138 : i32 to index
      %c1_110 = arith.constant 1 : index
      %c0_111 = arith.constant 0 : index
      %140 = vector.load %arg1[%c0_109, %139, %c1_110, %c0_111] : memref<1x30x30x1xf32, #tpu.memory_space<vmem>>, vector<1x1x28x1xf32>
      %141 = vector.shape_cast %140 : vector<1x1x28x1xf32> to vector<28x1xf32>
      %c1_112 = arith.constant 1 : index
      %c1_113 = arith.constant 1 : index
      %c0_114 = arith.constant 0 : index
      %c0_115 = arith.constant 0 : index
      %142 = vector.load %arg2[%c1_112, %c1_113, %c0_114, %c0_115] : memref<3x3x1x32xf32, #tpu.memory_space<vmem>>, vector<1x1x1x32xf32>
      %143 = vector.shape_cast %142 : vector<1x1x1x32xf32> to vector<1x32xf32>
      %144 = vector.broadcast %141 : vector<28x1xf32> to vector<28x32xf32>
      %145 = vector.broadcast %143 : vector<1x32xf32> to vector<28x32xf32>
      %146 = arith.mulf %144, %145 : vector<28x32xf32>
      %147 = arith.addf %137, %146 : vector<28x32xf32>
      %c1_i32_116 = arith.constant 1 : i32
      %148 = arith.addi %96, %c1_i32_116 : i32
      %c0_117 = arith.constant 0 : index
      %149 = arith.index_cast %148 : i32 to index
      %c2_118 = arith.constant 2 : index
      %c0_119 = arith.constant 0 : index
      %150 = vector.load %arg1[%c0_117, %149, %c2_118, %c0_119] : memref<1x30x30x1xf32, #tpu.memory_space<vmem>>, vector<1x1x28x1xf32>
      %151 = vector.shape_cast %150 : vector<1x1x28x1xf32> to vector<28x1xf32>
      %c1_120 = arith.constant 1 : index
      %c2_121 = arith.constant 2 : index
      %c0_122 = arith.constant 0 : index
      %c0_123 = arith.constant 0 : index
      %152 = vector.load %arg2[%c1_120, %c2_121, %c0_122, %c0_123] : memref<3x3x1x32xf32, #tpu.memory_space<vmem>>, vector<1x1x1x32xf32>
      %153 = vector.shape_cast %152 : vector<1x1x1x32xf32> to vector<1x32xf32>
      %154 = vector.broadcast %151 : vector<28x1xf32> to vector<28x32xf32>
      %155 = vector.broadcast %153 : vector<1x32xf32> to vector<28x32xf32>
      %156 = arith.mulf %154, %155 : vector<28x32xf32>
      %157 = arith.addf %147, %156 : vector<28x32xf32>
      %c2_i32_124 = arith.constant 2 : i32
      %158 = arith.addi %96, %c2_i32_124 : i32
      %c0_125 = arith.constant 0 : index
      %159 = arith.index_cast %158 : i32 to index
      %c0_126 = arith.constant 0 : index
      %c0_127 = arith.constant 0 : index
      %160 = vector.load %arg1[%c0_125, %159, %c0_126, %c0_127] : memref<1x30x30x1xf32, #tpu.memory_space<vmem>>, vector<1x1x28x1xf32>
      %161 = vector.shape_cast %160 : vector<1x1x28x1xf32> to vector<28x1xf32>
      %c2_128 = arith.constant 2 : index
      %c0_129 = arith.constant 0 : index
      %c0_130 = arith.constant 0 : index
      %c0_131 = arith.constant 0 : index
      %162 = vector.load %arg2[%c2_128, %c0_129, %c0_130, %c0_131] : memref<3x3x1x32xf32, #tpu.memory_space<vmem>>, vector<1x1x1x32xf32>
      %163 = vector.shape_cast %162 : vector<1x1x1x32xf32> to vector<1x32xf32>
      %164 = vector.broadcast %161 : vector<28x1xf32> to vector<28x32xf32>
      %165 = vector.broadcast %163 : vector<1x32xf32> to vector<28x32xf32>
      %166 = arith.mulf %164, %165 : vector<28x32xf32>
      %167 = arith.addf %157, %166 : vector<28x32xf32>
      %c2_i32_132 = arith.constant 2 : i32
      %168 = arith.addi %96, %c2_i32_132 : i32
      %c0_133 = arith.constant 0 : index
      %169 = arith.index_cast %168 : i32 to index
      %c1_134 = arith.constant 1 : index
      %c0_135 = arith.constant 0 : index
      %170 = vector.load %arg1[%c0_133, %169, %c1_134, %c0_135] : memref<1x30x30x1xf32, #tpu.memory_space<vmem>>, vector<1x1x28x1xf32>
      %171 = vector.shape_cast %170 : vector<1x1x28x1xf32> to vector<28x1xf32>
      %c2_136 = arith.constant 2 : index
      %c1_137 = arith.constant 1 : index
      %c0_138 = arith.constant 0 : index
      %c0_139 = arith.constant 0 : index
      %172 = vector.load %arg2[%c2_136, %c1_137, %c0_138, %c0_139] : memref<3x3x1x32xf32, #tpu.memory_space<vmem>>, vector<1x1x1x32xf32>
      %173 = vector.shape_cast %172 : vector<1x1x1x32xf32> to vector<1x32xf32>
      %174 = vector.broadcast %171 : vector<28x1xf32> to vector<28x32xf32>
      %175 = vector.broadcast %173 : vector<1x32xf32> to vector<28x32xf32>
      %176 = arith.mulf %174, %175 : vector<28x32xf32>
      %177 = arith.addf %167, %176 : vector<28x32xf32>
      %c2_i32_140 = arith.constant 2 : i32
      %178 = arith.addi %96, %c2_i32_140 : i32
      %c0_141 = arith.constant 0 : index
      %179 = arith.index_cast %178 : i32 to index
      %c2_142 = arith.constant 2 : index
      %c0_143 = arith.constant 0 : index
      %180 = vector.load %arg1[%c0_141, %179, %c2_142, %c0_143] : memref<1x30x30x1xf32, #tpu.memory_space<vmem>>, vector<1x1x28x1xf32>
      %181 = vector.shape_cast %180 : vector<1x1x28x1xf32> to vector<28x1xf32>
      %c2_144 = arith.constant 2 : index
      %c2_145 = arith.constant 2 : index
      %c0_146 = arith.constant 0 : index
      %c0_147 = arith.constant 0 : index
      %182 = vector.load %arg2[%c2_144, %c2_145, %c0_146, %c0_147] : memref<3x3x1x32xf32, #tpu.memory_space<vmem>>, vector<1x1x1x32xf32>
      %183 = vector.shape_cast %182 : vector<1x1x1x32xf32> to vector<1x32xf32>
      %184 = vector.broadcast %181 : vector<28x1xf32> to vector<28x32xf32>
      %185 = vector.broadcast %183 : vector<1x32xf32> to vector<28x32xf32>
      %186 = arith.mulf %184, %185 : vector<28x32xf32>
      %187 = arith.addf %177, %186 : vector<28x32xf32>
      %188 = arith.maximumf %94, %187 : vector<28x32xf32>
      %189 = vector.broadcast %0 : vector<1x32xf32> to vector<28x32xf32>
      %190 = arith.addf %188, %189 : vector<28x32xf32>
      %cst_148 = arith.constant 0.000000e+00 : f32
      %191 = vector.broadcast %cst_148 : f32 to vector<28x32xf32>
      %192 = arith.maximumf %190, %191 : vector<28x32xf32>
      %c0_149 = arith.constant 0 : index
      %c0_150 = arith.constant 0 : index
      %193 = vector.load %arg5[%c0_149, %c0_150] : memref<28x32xf32, #tpu.memory_space<vmem>>, vector<28x32xf32>
      tpu.vector_store %arg5[%c0_149, %c0_150], %192 {strides = array<i32>} : memref<28x32xf32, #tpu.memory_space<vmem>>, vector<28x32xf32>,
      %c0_151 = arith.constant 0 : index
      %c0_152 = arith.constant 0 : index
      %194 = tpu.strided_load %arg5[%c0_151, %c0_152] {strides = array<i32: 2, 1>} : memref<28x32xf32, #tpu.memory_space<vmem>>, vector<14x32xf32>
      %c1_153 = arith.constant 1 : index
      %c0_154 = arith.constant 0 : index
      %195 = tpu.strided_load %arg5[%c1_153, %c0_154] {strides = array<i32: 2, 1>} : memref<28x32xf32, #tpu.memory_space<vmem>>, vector<14x32xf32>
      %196 = arith.maximumf %194, %195 : vector<14x32xf32>
      %c0_155 = arith.constant 0 : index
      %197 = arith.index_cast %arg6 : i32 to index
      %c0_156 = arith.constant 0 : index
      %c0_157 = arith.constant 0 : index
      %198 = vector.load %arg4[%c0_155, %197, %c0_156, %c0_157] : memref<1x14x14x32xf32, #tpu.memory_space<vmem>>, vector<1x1x14x32xf32>
      %199 = vector.shape_cast %198 : vector<1x1x14x32xf32> to vector<14x32xf32>
      %200 = vector.shape_cast %196 : vector<14x32xf32> to vector<1x1x14x32xf32>
      tpu.vector_store %arg4[%c0_155, %197, %c0_156, %c0_157], %200 {strides = array<i32>} : memref<1x14x14x32xf32, #tpu.memory_space<vmem>>, vector<1x1x14x32xf32>,
    }
    %c14_i32_1 = arith.constant 14 : i32
    return
  }
  func.func @transform_0(%arg0: i32) -> (i32, i32, i32, i32) {
    %c0_i32 = arith.constant 0 : i32
    %c0_i32_0 = arith.constant 0 : i32
    %c0_i32_1 = arith.constant 0 : i32
    %c0_i32_2 = arith.constant 0 : i32
    return %arg0, %c0_i32, %c0_i32_0, %c0_i32_1 : i32, i32, i32, i32
  }
  func.func @transform_1(%arg0: i32) -> (i32, i32, i32, i32) {
    %c0_i32 = arith.constant 0 : i32
    %c0_i32_0 = arith.constant 0 : i32
    %c0_i32_1 = arith.constant 0 : i32
    %c0_i32_2 = arith.constant 0 : i32
    %c0_i32_3 = arith.constant 0 : i32
    return %c0_i32, %c0_i32_0, %c0_i32_1, %c0_i32_2 : i32, i32, i32, i32
  }
  func.func @transform_2(%arg0: i32) -> (i32, i32) {
    %c0_i32 = arith.constant 0 : i32
    %c0_i32_0 = arith.constant 0 : i32
    %c0_i32_1 = arith.constant 0 : i32
    return %c0_i32, %c0_i32_0 : i32, i32
  }
  func.func @transform_3(%arg0: i32) -> (i32, i32, i32, i32) {
    %c0_i32 = arith.constant 0 : i32
    %c0_i32_0 = arith.constant 0 : i32
    %c0_i32_1 = arith.constant 0 : i32
    %c0_i32_2 = arith.constant 0 : i32
    return %arg0, %c0_i32, %c0_i32_0, %c0_i32_1 : i32, i32, i32, i32
  }
}

module attributes {stable_mosaic.version = 11 : i64} {
  func.func @_conv3x3_relu_pool_kernel(%arg0: i32, %arg1: memref<1x16x16x32xf32, #tpu.memory_space<vmem>>, %arg2: memref<3x3x32x64xf32, #tpu.memory_space<vmem>>, %arg3: memref<1x64xf32, #tpu.memory_space<vmem>>, %arg4: memref<1x7x7x64xf32, #tpu.memory_space<vmem>>, %arg5: memref<14x64xf32, #tpu.memory_space<vmem>>) attributes {dimension_semantics = [#tpu.dimension_semantics<parallel>], iteration_bounds = array<i64: 2>, scalar_prefetch = 0 : i64, scratch_operands = 1 : i64, tpu.core_type = #tpu.core_type<tc>, window_params = [{transform_indices = @transform_0, window_bounds = array<i64: 1, 16, 16, 32>}, {pipeline_mode = #tpu.pipeline_mode<synchronous>, transform_indices = @transform_1, window_bounds = array<i64: 3, 3, 32, 64>}, {pipeline_mode = #tpu.pipeline_mode<synchronous>, transform_indices = @transform_2, window_bounds = array<i64: 1, 64>}, {transform_indices = @transform_3, window_bounds = array<i64: 1, 7, 7, 64>}]} {
    %c0 = arith.constant 0 : index
    %c0_0 = arith.constant 0 : index
    %0 = vector.load %arg3[%c0, %c0_0] : memref<1x64xf32, #tpu.memory_space<vmem>>, vector<1x64xf32>
    %c0_i32 = arith.constant 0 : i32
    %c7_i32 = arith.constant 7 : i32
    %1 = arith.addi %c0_i32, %c7_i32 : i32
    %c1_i32 = arith.constant 1 : i32
    scf.for %arg6 = %c0_i32 to %1 step %c1_i32  : i32 {
      %c2_i32 = arith.constant 2 : i32
      %2 = arith.muli %c2_i32, %arg6 : i32
      %c0_i32_2 = arith.constant 0 : i32
      %3 = arith.addi %2, %c0_i32_2 : i32
      %cst = arith.constant 0.000000e+00 : f32
      %4 = vector.broadcast %cst : f32 to vector<14x64xf32>
      %c0_i32_3 = arith.constant 0 : i32
      %5 = arith.addi %3, %c0_i32_3 : i32
      %c0_4 = arith.constant 0 : index
      %6 = arith.index_cast %5 : i32 to index
      %c0_5 = arith.constant 0 : index
      %c0_6 = arith.constant 0 : index
      %7 = vector.load %arg1[%c0_4, %6, %c0_5, %c0_6] : memref<1x16x16x32xf32, #tpu.memory_space<vmem>>, vector<1x1x14x32xf32>
      %8 = vector.shape_cast %7 : vector<1x1x14x32xf32> to vector<14x32xf32>
      %c0_7 = arith.constant 0 : index
      %c0_8 = arith.constant 0 : index
      %c0_9 = arith.constant 0 : index
      %c0_10 = arith.constant 0 : index
      %9 = vector.load %arg2[%c0_7, %c0_8, %c0_9, %c0_10] : memref<3x3x32x64xf32, #tpu.memory_space<vmem>>, vector<1x1x32x64xf32>
      %10 = vector.shape_cast %9 : vector<1x1x32x64xf32> to vector<32x64xf32>
      %cst_11 = arith.constant dense<0.000000e+00> : vector<14x64xf32>
      %11 = tpu.matmul %8, %10, %cst_11 {dimension_numbers = #tpu.dot_dimension_numbers<[1], [0], [0], [1], [0, 0, 1, 1], [], []>} : vector<14x32xf32>, vector<32x64xf32>, vector<14x64xf32> -> vector<14x64xf32>
      %12 = arith.addf %4, %11 : vector<14x64xf32>
      %c0_i32_12 = arith.constant 0 : i32
      %13 = arith.addi %3, %c0_i32_12 : i32
      %c0_13 = arith.constant 0 : index
      %14 = arith.index_cast %13 : i32 to index
      %c1 = arith.constant 1 : index
      %c0_14 = arith.constant 0 : index
      %15 = vector.load %arg1[%c0_13, %14, %c1, %c0_14] : memref<1x16x16x32xf32, #tpu.memory_space<vmem>>, vector<1x1x14x32xf32>
      %16 = vector.shape_cast %15 : vector<1x1x14x32xf32> to vector<14x32xf32>
      %c0_15 = arith.constant 0 : index
      %c1_16 = arith.constant 1 : index
      %c0_17 = arith.constant 0 : index
      %c0_18 = arith.constant 0 : index
      %17 = vector.load %arg2[%c0_15, %c1_16, %c0_17, %c0_18] : memref<3x3x32x64xf32, #tpu.memory_space<vmem>>, vector<1x1x32x64xf32>
      %18 = vector.shape_cast %17 : vector<1x1x32x64xf32> to vector<32x64xf32>
      %cst_19 = arith.constant dense<0.000000e+00> : vector<14x64xf32>
      %19 = tpu.matmul %16, %18, %cst_19 {dimension_numbers = #tpu.dot_dimension_numbers<[1], [0], [0], [1], [0, 0, 1, 1], [], []>} : vector<14x32xf32>, vector<32x64xf32>, vector<14x64xf32> -> vector<14x64xf32>
      %20 = arith.addf %12, %19 : vector<14x64xf32>
      %c0_i32_20 = arith.constant 0 : i32
      %21 = arith.addi %3, %c0_i32_20 : i32
      %c0_21 = arith.constant 0 : index
      %22 = arith.index_cast %21 : i32 to index
      %c2 = arith.constant 2 : index
      %c0_22 = arith.constant 0 : index
      %23 = vector.load %arg1[%c0_21, %22, %c2, %c0_22] : memref<1x16x16x32xf32, #tpu.memory_space<vmem>>, vector<1x1x14x32xf32>
      %24 = vector.shape_cast %23 : vector<1x1x14x32xf32> to vector<14x32xf32>
      %c0_23 = arith.constant 0 : index
      %c2_24 = arith.constant 2 : index
      %c0_25 = arith.constant 0 : index
      %c0_26 = arith.constant 0 : index
      %25 = vector.load %arg2[%c0_23, %c2_24, %c0_25, %c0_26] : memref<3x3x32x64xf32, #tpu.memory_space<vmem>>, vector<1x1x32x64xf32>
      %26 = vector.shape_cast %25 : vector<1x1x32x64xf32> to vector<32x64xf32>
      %cst_27 = arith.constant dense<0.000000e+00> : vector<14x64xf32>
      %27 = tpu.matmul %24, %26, %cst_27 {dimension_numbers = #tpu.dot_dimension_numbers<[1], [0], [0], [1], [0, 0, 1, 1], [], []>} : vector<14x32xf32>, vector<32x64xf32>, vector<14x64xf32> -> vector<14x64xf32>
      %28 = arith.addf %20, %27 : vector<14x64xf32>
      %c1_i32_28 = arith.constant 1 : i32
      %29 = arith.addi %3, %c1_i32_28 : i32
      %c0_29 = arith.constant 0 : index
      %30 = arith.index_cast %29 : i32 to index
      %c0_30 = arith.constant 0 : index
      %c0_31 = arith.constant 0 : index
      %31 = vector.load %arg1[%c0_29, %30, %c0_30, %c0_31] : memref<1x16x16x32xf32, #tpu.memory_space<vmem>>, vector<1x1x14x32xf32>
      %32 = vector.shape_cast %31 : vector<1x1x14x32xf32> to vector<14x32xf32>
      %c1_32 = arith.constant 1 : index
      %c0_33 = arith.constant 0 : index
      %c0_34 = arith.constant 0 : index
      %c0_35 = arith.constant 0 : index
      %33 = vector.load %arg2[%c1_32, %c0_33, %c0_34, %c0_35] : memref<3x3x32x64xf32, #tpu.memory_space<vmem>>, vector<1x1x32x64xf32>
      %34 = vector.shape_cast %33 : vector<1x1x32x64xf32> to vector<32x64xf32>
      %cst_36 = arith.constant dense<0.000000e+00> : vector<14x64xf32>
      %35 = tpu.matmul %32, %34, %cst_36 {dimension_numbers = #tpu.dot_dimension_numbers<[1], [0], [0], [1], [0, 0, 1, 1], [], []>} : vector<14x32xf32>, vector<32x64xf32>, vector<14x64xf32> -> vector<14x64xf32>
      %36 = arith.addf %28, %35 : vector<14x64xf32>
      %c1_i32_37 = arith.constant 1 : i32
      %37 = arith.addi %3, %c1_i32_37 : i32
      %c0_38 = arith.constant 0 : index
      %38 = arith.index_cast %37 : i32 to index
      %c1_39 = arith.constant 1 : index
      %c0_40 = arith.constant 0 : index
      %39 = vector.load %arg1[%c0_38, %38, %c1_39, %c0_40] : memref<1x16x16x32xf32, #tpu.memory_space<vmem>>, vector<1x1x14x32xf32>
      %40 = vector.shape_cast %39 : vector<1x1x14x32xf32> to vector<14x32xf32>
      %c1_41 = arith.constant 1 : index
      %c1_42 = arith.constant 1 : index
      %c0_43 = arith.constant 0 : index
      %c0_44 = arith.constant 0 : index
      %41 = vector.load %arg2[%c1_41, %c1_42, %c0_43, %c0_44] : memref<3x3x32x64xf32, #tpu.memory_space<vmem>>, vector<1x1x32x64xf32>
      %42 = vector.shape_cast %41 : vector<1x1x32x64xf32> to vector<32x64xf32>
      %cst_45 = arith.constant dense<0.000000e+00> : vector<14x64xf32>
      %43 = tpu.matmul %40, %42, %cst_45 {dimension_numbers = #tpu.dot_dimension_numbers<[1], [0], [0], [1], [0, 0, 1, 1], [], []>} : vector<14x32xf32>, vector<32x64xf32>, vector<14x64xf32> -> vector<14x64xf32>
      %44 = arith.addf %36, %43 : vector<14x64xf32>
      %c1_i32_46 = arith.constant 1 : i32
      %45 = arith.addi %3, %c1_i32_46 : i32
      %c0_47 = arith.constant 0 : index
      %46 = arith.index_cast %45 : i32 to index
      %c2_48 = arith.constant 2 : index
      %c0_49 = arith.constant 0 : index
      %47 = vector.load %arg1[%c0_47, %46, %c2_48, %c0_49] : memref<1x16x16x32xf32, #tpu.memory_space<vmem>>, vector<1x1x14x32xf32>
      %48 = vector.shape_cast %47 : vector<1x1x14x32xf32> to vector<14x32xf32>
      %c1_50 = arith.constant 1 : index
      %c2_51 = arith.constant 2 : index
      %c0_52 = arith.constant 0 : index
      %c0_53 = arith.constant 0 : index
      %49 = vector.load %arg2[%c1_50, %c2_51, %c0_52, %c0_53] : memref<3x3x32x64xf32, #tpu.memory_space<vmem>>, vector<1x1x32x64xf32>
      %50 = vector.shape_cast %49 : vector<1x1x32x64xf32> to vector<32x64xf32>
      %cst_54 = arith.constant dense<0.000000e+00> : vector<14x64xf32>
      %51 = tpu.matmul %48, %50, %cst_54 {dimension_numbers = #tpu.dot_dimension_numbers<[1], [0], [0], [1], [0, 0, 1, 1], [], []>} : vector<14x32xf32>, vector<32x64xf32>, vector<14x64xf32> -> vector<14x64xf32>
      %52 = arith.addf %44, %51 : vector<14x64xf32>
      %c2_i32_55 = arith.constant 2 : i32
      %53 = arith.addi %3, %c2_i32_55 : i32
      %c0_56 = arith.constant 0 : index
      %54 = arith.index_cast %53 : i32 to index
      %c0_57 = arith.constant 0 : index
      %c0_58 = arith.constant 0 : index
      %55 = vector.load %arg1[%c0_56, %54, %c0_57, %c0_58] : memref<1x16x16x32xf32, #tpu.memory_space<vmem>>, vector<1x1x14x32xf32>
      %56 = vector.shape_cast %55 : vector<1x1x14x32xf32> to vector<14x32xf32>
      %c2_59 = arith.constant 2 : index
      %c0_60 = arith.constant 0 : index
      %c0_61 = arith.constant 0 : index
      %c0_62 = arith.constant 0 : index
      %57 = vector.load %arg2[%c2_59, %c0_60, %c0_61, %c0_62] : memref<3x3x32x64xf32, #tpu.memory_space<vmem>>, vector<1x1x32x64xf32>
      %58 = vector.shape_cast %57 : vector<1x1x32x64xf32> to vector<32x64xf32>
      %cst_63 = arith.constant dense<0.000000e+00> : vector<14x64xf32>
      %59 = tpu.matmul %56, %58, %cst_63 {dimension_numbers = #tpu.dot_dimension_numbers<[1], [0], [0], [1], [0, 0, 1, 1], [], []>} : vector<14x32xf32>, vector<32x64xf32>, vector<14x64xf32> -> vector<14x64xf32>
      %60 = arith.addf %52, %59 : vector<14x64xf32>
      %c2_i32_64 = arith.constant 2 : i32
      %61 = arith.addi %3, %c2_i32_64 : i32
      %c0_65 = arith.constant 0 : index
      %62 = arith.index_cast %61 : i32 to index
      %c1_66 = arith.constant 1 : index
      %c0_67 = arith.constant 0 : index
      %63 = vector.load %arg1[%c0_65, %62, %c1_66, %c0_67] : memref<1x16x16x32xf32, #tpu.memory_space<vmem>>, vector<1x1x14x32xf32>
      %64 = vector.shape_cast %63 : vector<1x1x14x32xf32> to vector<14x32xf32>
      %c2_68 = arith.constant 2 : index
      %c1_69 = arith.constant 1 : index
      %c0_70 = arith.constant 0 : index
      %c0_71 = arith.constant 0 : index
      %65 = vector.load %arg2[%c2_68, %c1_69, %c0_70, %c0_71] : memref<3x3x32x64xf32, #tpu.memory_space<vmem>>, vector<1x1x32x64xf32>
      %66 = vector.shape_cast %65 : vector<1x1x32x64xf32> to vector<32x64xf32>
      %cst_72 = arith.constant dense<0.000000e+00> : vector<14x64xf32>
      %67 = tpu.matmul %64, %66, %cst_72 {dimension_numbers = #tpu.dot_dimension_numbers<[1], [0], [0], [1], [0, 0, 1, 1], [], []>} : vector<14x32xf32>, vector<32x64xf32>, vector<14x64xf32> -> vector<14x64xf32>
      %68 = arith.addf %60, %67 : vector<14x64xf32>
      %c2_i32_73 = arith.constant 2 : i32
      %69 = arith.addi %3, %c2_i32_73 : i32
      %c0_74 = arith.constant 0 : index
      %70 = arith.index_cast %69 : i32 to index
      %c2_75 = arith.constant 2 : index
      %c0_76 = arith.constant 0 : index
      %71 = vector.load %arg1[%c0_74, %70, %c2_75, %c0_76] : memref<1x16x16x32xf32, #tpu.memory_space<vmem>>, vector<1x1x14x32xf32>
      %72 = vector.shape_cast %71 : vector<1x1x14x32xf32> to vector<14x32xf32>
      %c2_77 = arith.constant 2 : index
      %c2_78 = arith.constant 2 : index
      %c0_79 = arith.constant 0 : index
      %c0_80 = arith.constant 0 : index
      %73 = vector.load %arg2[%c2_77, %c2_78, %c0_79, %c0_80] : memref<3x3x32x64xf32, #tpu.memory_space<vmem>>, vector<1x1x32x64xf32>
      %74 = vector.shape_cast %73 : vector<1x1x32x64xf32> to vector<32x64xf32>
      %cst_81 = arith.constant dense<0.000000e+00> : vector<14x64xf32>
      %75 = tpu.matmul %72, %74, %cst_81 {dimension_numbers = #tpu.dot_dimension_numbers<[1], [0], [0], [1], [0, 0, 1, 1], [], []>} : vector<14x32xf32>, vector<32x64xf32>, vector<14x64xf32> -> vector<14x64xf32>
      %76 = arith.addf %68, %75 : vector<14x64xf32>
      %c2_i32_82 = arith.constant 2 : i32
      %77 = arith.muli %c2_i32_82, %arg6 : i32
      %c1_i32_83 = arith.constant 1 : i32
      %78 = arith.addi %77, %c1_i32_83 : i32
      %cst_84 = arith.constant 0.000000e+00 : f32
      %79 = vector.broadcast %cst_84 : f32 to vector<14x64xf32>
      %c0_i32_85 = arith.constant 0 : i32
      %80 = arith.addi %78, %c0_i32_85 : i32
      %c0_86 = arith.constant 0 : index
      %81 = arith.index_cast %80 : i32 to index
      %c0_87 = arith.constant 0 : index
      %c0_88 = arith.constant 0 : index
      %82 = vector.load %arg1[%c0_86, %81, %c0_87, %c0_88] : memref<1x16x16x32xf32, #tpu.memory_space<vmem>>, vector<1x1x14x32xf32>
      %83 = vector.shape_cast %82 : vector<1x1x14x32xf32> to vector<14x32xf32>
      %c0_89 = arith.constant 0 : index
      %c0_90 = arith.constant 0 : index
      %c0_91 = arith.constant 0 : index
      %c0_92 = arith.constant 0 : index
      %84 = vector.load %arg2[%c0_89, %c0_90, %c0_91, %c0_92] : memref<3x3x32x64xf32, #tpu.memory_space<vmem>>, vector<1x1x32x64xf32>
      %85 = vector.shape_cast %84 : vector<1x1x32x64xf32> to vector<32x64xf32>
      %cst_93 = arith.constant dense<0.000000e+00> : vector<14x64xf32>
      %86 = tpu.matmul %83, %85, %cst_93 {dimension_numbers = #tpu.dot_dimension_numbers<[1], [0], [0], [1], [0, 0, 1, 1], [], []>} : vector<14x32xf32>, vector<32x64xf32>, vector<14x64xf32> -> vector<14x64xf32>
      %87 = arith.addf %79, %86 : vector<14x64xf32>
      %c0_i32_94 = arith.constant 0 : i32
      %88 = arith.addi %78, %c0_i32_94 : i32
      %c0_95 = arith.constant 0 : index
      %89 = arith.index_cast %88 : i32 to index
      %c1_96 = arith.constant 1 : index
      %c0_97 = arith.constant 0 : index
      %90 = vector.load %arg1[%c0_95, %89, %c1_96, %c0_97] : memref<1x16x16x32xf32, #tpu.memory_space<vmem>>, vector<1x1x14x32xf32>
      %91 = vector.shape_cast %90 : vector<1x1x14x32xf32> to vector<14x32xf32>
      %c0_98 = arith.constant 0 : index
      %c1_99 = arith.constant 1 : index
      %c0_100 = arith.constant 0 : index
      %c0_101 = arith.constant 0 : index
      %92 = vector.load %arg2[%c0_98, %c1_99, %c0_100, %c0_101] : memref<3x3x32x64xf32, #tpu.memory_space<vmem>>, vector<1x1x32x64xf32>
      %93 = vector.shape_cast %92 : vector<1x1x32x64xf32> to vector<32x64xf32>
      %cst_102 = arith.constant dense<0.000000e+00> : vector<14x64xf32>
      %94 = tpu.matmul %91, %93, %cst_102 {dimension_numbers = #tpu.dot_dimension_numbers<[1], [0], [0], [1], [0, 0, 1, 1], [], []>} : vector<14x32xf32>, vector<32x64xf32>, vector<14x64xf32> -> vector<14x64xf32>
      %95 = arith.addf %87, %94 : vector<14x64xf32>
      %c0_i32_103 = arith.constant 0 : i32
      %96 = arith.addi %78, %c0_i32_103 : i32
      %c0_104 = arith.constant 0 : index
      %97 = arith.index_cast %96 : i32 to index
      %c2_105 = arith.constant 2 : index
      %c0_106 = arith.constant 0 : index
      %98 = vector.load %arg1[%c0_104, %97, %c2_105, %c0_106] : memref<1x16x16x32xf32, #tpu.memory_space<vmem>>, vector<1x1x14x32xf32>
      %99 = vector.shape_cast %98 : vector<1x1x14x32xf32> to vector<14x32xf32>
      %c0_107 = arith.constant 0 : index
      %c2_108 = arith.constant 2 : index
      %c0_109 = arith.constant 0 : index
      %c0_110 = arith.constant 0 : index
      %100 = vector.load %arg2[%c0_107, %c2_108, %c0_109, %c0_110] : memref<3x3x32x64xf32, #tpu.memory_space<vmem>>, vector<1x1x32x64xf32>
      %101 = vector.shape_cast %100 : vector<1x1x32x64xf32> to vector<32x64xf32>
      %cst_111 = arith.constant dense<0.000000e+00> : vector<14x64xf32>
      %102 = tpu.matmul %99, %101, %cst_111 {dimension_numbers = #tpu.dot_dimension_numbers<[1], [0], [0], [1], [0, 0, 1, 1], [], []>} : vector<14x32xf32>, vector<32x64xf32>, vector<14x64xf32> -> vector<14x64xf32>
      %103 = arith.addf %95, %102 : vector<14x64xf32>
      %c1_i32_112 = arith.constant 1 : i32
      %104 = arith.addi %78, %c1_i32_112 : i32
      %c0_113 = arith.constant 0 : index
      %105 = arith.index_cast %104 : i32 to index
      %c0_114 = arith.constant 0 : index
      %c0_115 = arith.constant 0 : index
      %106 = vector.load %arg1[%c0_113, %105, %c0_114, %c0_115] : memref<1x16x16x32xf32, #tpu.memory_space<vmem>>, vector<1x1x14x32xf32>
      %107 = vector.shape_cast %106 : vector<1x1x14x32xf32> to vector<14x32xf32>
      %c1_116 = arith.constant 1 : index
      %c0_117 = arith.constant 0 : index
      %c0_118 = arith.constant 0 : index
      %c0_119 = arith.constant 0 : index
      %108 = vector.load %arg2[%c1_116, %c0_117, %c0_118, %c0_119] : memref<3x3x32x64xf32, #tpu.memory_space<vmem>>, vector<1x1x32x64xf32>
      %109 = vector.shape_cast %108 : vector<1x1x32x64xf32> to vector<32x64xf32>
      %cst_120 = arith.constant dense<0.000000e+00> : vector<14x64xf32>
      %110 = tpu.matmul %107, %109, %cst_120 {dimension_numbers = #tpu.dot_dimension_numbers<[1], [0], [0], [1], [0, 0, 1, 1], [], []>} : vector<14x32xf32>, vector<32x64xf32>, vector<14x64xf32> -> vector<14x64xf32>
      %111 = arith.addf %103, %110 : vector<14x64xf32>
      %c1_i32_121 = arith.constant 1 : i32
      %112 = arith.addi %78, %c1_i32_121 : i32
      %c0_122 = arith.constant 0 : index
      %113 = arith.index_cast %112 : i32 to index
      %c1_123 = arith.constant 1 : index
      %c0_124 = arith.constant 0 : index
      %114 = vector.load %arg1[%c0_122, %113, %c1_123, %c0_124] : memref<1x16x16x32xf32, #tpu.memory_space<vmem>>, vector<1x1x14x32xf32>
      %115 = vector.shape_cast %114 : vector<1x1x14x32xf32> to vector<14x32xf32>
      %c1_125 = arith.constant 1 : index
      %c1_126 = arith.constant 1 : index
      %c0_127 = arith.constant 0 : index
      %c0_128 = arith.constant 0 : index
      %116 = vector.load %arg2[%c1_125, %c1_126, %c0_127, %c0_128] : memref<3x3x32x64xf32, #tpu.memory_space<vmem>>, vector<1x1x32x64xf32>
      %117 = vector.shape_cast %116 : vector<1x1x32x64xf32> to vector<32x64xf32>
      %cst_129 = arith.constant dense<0.000000e+00> : vector<14x64xf32>
      %118 = tpu.matmul %115, %117, %cst_129 {dimension_numbers = #tpu.dot_dimension_numbers<[1], [0], [0], [1], [0, 0, 1, 1], [], []>} : vector<14x32xf32>, vector<32x64xf32>, vector<14x64xf32> -> vector<14x64xf32>
      %119 = arith.addf %111, %118 : vector<14x64xf32>
      %c1_i32_130 = arith.constant 1 : i32
      %120 = arith.addi %78, %c1_i32_130 : i32
      %c0_131 = arith.constant 0 : index
      %121 = arith.index_cast %120 : i32 to index
      %c2_132 = arith.constant 2 : index
      %c0_133 = arith.constant 0 : index
      %122 = vector.load %arg1[%c0_131, %121, %c2_132, %c0_133] : memref<1x16x16x32xf32, #tpu.memory_space<vmem>>, vector<1x1x14x32xf32>
      %123 = vector.shape_cast %122 : vector<1x1x14x32xf32> to vector<14x32xf32>
      %c1_134 = arith.constant 1 : index
      %c2_135 = arith.constant 2 : index
      %c0_136 = arith.constant 0 : index
      %c0_137 = arith.constant 0 : index
      %124 = vector.load %arg2[%c1_134, %c2_135, %c0_136, %c0_137] : memref<3x3x32x64xf32, #tpu.memory_space<vmem>>, vector<1x1x32x64xf32>
      %125 = vector.shape_cast %124 : vector<1x1x32x64xf32> to vector<32x64xf32>
      %cst_138 = arith.constant dense<0.000000e+00> : vector<14x64xf32>
      %126 = tpu.matmul %123, %125, %cst_138 {dimension_numbers = #tpu.dot_dimension_numbers<[1], [0], [0], [1], [0, 0, 1, 1], [], []>} : vector<14x32xf32>, vector<32x64xf32>, vector<14x64xf32> -> vector<14x64xf32>
      %127 = arith.addf %119, %126 : vector<14x64xf32>
      %c2_i32_139 = arith.constant 2 : i32
      %128 = arith.addi %78, %c2_i32_139 : i32
      %c0_140 = arith.constant 0 : index
      %129 = arith.index_cast %128 : i32 to index
      %c0_141 = arith.constant 0 : index
      %c0_142 = arith.constant 0 : index
      %130 = vector.load %arg1[%c0_140, %129, %c0_141, %c0_142] : memref<1x16x16x32xf32, #tpu.memory_space<vmem>>, vector<1x1x14x32xf32>
      %131 = vector.shape_cast %130 : vector<1x1x14x32xf32> to vector<14x32xf32>
      %c2_143 = arith.constant 2 : index
      %c0_144 = arith.constant 0 : index
      %c0_145 = arith.constant 0 : index
      %c0_146 = arith.constant 0 : index
      %132 = vector.load %arg2[%c2_143, %c0_144, %c0_145, %c0_146] : memref<3x3x32x64xf32, #tpu.memory_space<vmem>>, vector<1x1x32x64xf32>
      %133 = vector.shape_cast %132 : vector<1x1x32x64xf32> to vector<32x64xf32>
      %cst_147 = arith.constant dense<0.000000e+00> : vector<14x64xf32>
      %134 = tpu.matmul %131, %133, %cst_147 {dimension_numbers = #tpu.dot_dimension_numbers<[1], [0], [0], [1], [0, 0, 1, 1], [], []>} : vector<14x32xf32>, vector<32x64xf32>, vector<14x64xf32> -> vector<14x64xf32>
      %135 = arith.addf %127, %134 : vector<14x64xf32>
      %c2_i32_148 = arith.constant 2 : i32
      %136 = arith.addi %78, %c2_i32_148 : i32
      %c0_149 = arith.constant 0 : index
      %137 = arith.index_cast %136 : i32 to index
      %c1_150 = arith.constant 1 : index
      %c0_151 = arith.constant 0 : index
      %138 = vector.load %arg1[%c0_149, %137, %c1_150, %c0_151] : memref<1x16x16x32xf32, #tpu.memory_space<vmem>>, vector<1x1x14x32xf32>
      %139 = vector.shape_cast %138 : vector<1x1x14x32xf32> to vector<14x32xf32>
      %c2_152 = arith.constant 2 : index
      %c1_153 = arith.constant 1 : index
      %c0_154 = arith.constant 0 : index
      %c0_155 = arith.constant 0 : index
      %140 = vector.load %arg2[%c2_152, %c1_153, %c0_154, %c0_155] : memref<3x3x32x64xf32, #tpu.memory_space<vmem>>, vector<1x1x32x64xf32>
      %141 = vector.shape_cast %140 : vector<1x1x32x64xf32> to vector<32x64xf32>
      %cst_156 = arith.constant dense<0.000000e+00> : vector<14x64xf32>
      %142 = tpu.matmul %139, %141, %cst_156 {dimension_numbers = #tpu.dot_dimension_numbers<[1], [0], [0], [1], [0, 0, 1, 1], [], []>} : vector<14x32xf32>, vector<32x64xf32>, vector<14x64xf32> -> vector<14x64xf32>
      %143 = arith.addf %135, %142 : vector<14x64xf32>
      %c2_i32_157 = arith.constant 2 : i32
      %144 = arith.addi %78, %c2_i32_157 : i32
      %c0_158 = arith.constant 0 : index
      %145 = arith.index_cast %144 : i32 to index
      %c2_159 = arith.constant 2 : index
      %c0_160 = arith.constant 0 : index
      %146 = vector.load %arg1[%c0_158, %145, %c2_159, %c0_160] : memref<1x16x16x32xf32, #tpu.memory_space<vmem>>, vector<1x1x14x32xf32>
      %147 = vector.shape_cast %146 : vector<1x1x14x32xf32> to vector<14x32xf32>
      %c2_161 = arith.constant 2 : index
      %c2_162 = arith.constant 2 : index
      %c0_163 = arith.constant 0 : index
      %c0_164 = arith.constant 0 : index
      %148 = vector.load %arg2[%c2_161, %c2_162, %c0_163, %c0_164] : memref<3x3x32x64xf32, #tpu.memory_space<vmem>>, vector<1x1x32x64xf32>
      %149 = vector.shape_cast %148 : vector<1x1x32x64xf32> to vector<32x64xf32>
      %cst_165 = arith.constant dense<0.000000e+00> : vector<14x64xf32>
      %150 = tpu.matmul %147, %149, %cst_165 {dimension_numbers = #tpu.dot_dimension_numbers<[1], [0], [0], [1], [0, 0, 1, 1], [], []>} : vector<14x32xf32>, vector<32x64xf32>, vector<14x64xf32> -> vector<14x64xf32>
      %151 = arith.addf %143, %150 : vector<14x64xf32>
      %152 = arith.maximumf %76, %151 : vector<14x64xf32>
      %153 = vector.broadcast %0 : vector<1x64xf32> to vector<14x64xf32>
      %154 = arith.addf %152, %153 : vector<14x64xf32>
      %cst_166 = arith.constant 0.000000e+00 : f32
      %155 = vector.broadcast %cst_166 : f32 to vector<14x64xf32>
      %156 = arith.maximumf %154, %155 : vector<14x64xf32>
      %c0_167 = arith.constant 0 : index
      %c0_168 = arith.constant 0 : index
      %157 = vector.load %arg5[%c0_167, %c0_168] : memref<14x64xf32, #tpu.memory_space<vmem>>, vector<14x64xf32>
      tpu.vector_store %arg5[%c0_167, %c0_168], %156 {strides = array<i32>} : memref<14x64xf32, #tpu.memory_space<vmem>>, vector<14x64xf32>,
      %c0_169 = arith.constant 0 : index
      %c0_170 = arith.constant 0 : index
      %158 = tpu.strided_load %arg5[%c0_169, %c0_170] {strides = array<i32: 2, 1>} : memref<14x64xf32, #tpu.memory_space<vmem>>, vector<7x64xf32>
      %c1_171 = arith.constant 1 : index
      %c0_172 = arith.constant 0 : index
      %159 = tpu.strided_load %arg5[%c1_171, %c0_172] {strides = array<i32: 2, 1>} : memref<14x64xf32, #tpu.memory_space<vmem>>, vector<7x64xf32>
      %160 = arith.maximumf %158, %159 : vector<7x64xf32>
      %c0_173 = arith.constant 0 : index
      %161 = arith.index_cast %arg6 : i32 to index
      %c0_174 = arith.constant 0 : index
      %c0_175 = arith.constant 0 : index
      %162 = vector.load %arg4[%c0_173, %161, %c0_174, %c0_175] : memref<1x7x7x64xf32, #tpu.memory_space<vmem>>, vector<1x1x7x64xf32>
      %163 = vector.shape_cast %162 : vector<1x1x7x64xf32> to vector<7x64xf32>
      %164 = vector.shape_cast %160 : vector<7x64xf32> to vector<1x1x7x64xf32>
      tpu.vector_store %arg4[%c0_173, %161, %c0_174, %c0_175], %164 {strides = array<i32>} : memref<1x7x7x64xf32, #tpu.memory_space<vmem>>, vector<1x1x7x64xf32>,
    }
    %c7_i32_1 = arith.constant 7 : i32
    return
  }
  func.func @transform_0(%arg0: i32) -> (i32, i32, i32, i32) {
    %c0_i32 = arith.constant 0 : i32
    %c0_i32_0 = arith.constant 0 : i32
    %c0_i32_1 = arith.constant 0 : i32
    %c0_i32_2 = arith.constant 0 : i32
    return %arg0, %c0_i32, %c0_i32_0, %c0_i32_1 : i32, i32, i32, i32
  }
  func.func @transform_1(%arg0: i32) -> (i32, i32, i32, i32) {
    %c0_i32 = arith.constant 0 : i32
    %c0_i32_0 = arith.constant 0 : i32
    %c0_i32_1 = arith.constant 0 : i32
    %c0_i32_2 = arith.constant 0 : i32
    %c0_i32_3 = arith.constant 0 : i32
    return %c0_i32, %c0_i32_0, %c0_i32_1, %c0_i32_2 : i32, i32, i32, i32
  }
  func.func @transform_2(%arg0: i32) -> (i32, i32) {
    %c0_i32 = arith.constant 0 : i32
    %c0_i32_0 = arith.constant 0 : i32
    %c0_i32_1 = arith.constant 0 : i32
    return %c0_i32, %c0_i32_0 : i32, i32
  }
  func.func @transform_3(%arg0: i32) -> (i32, i32, i32, i32) {
    %c0_i32 = arith.constant 0 : i32
    %c0_i32_0 = arith.constant 0 : i32
    %c0_i32_1 = arith.constant 0 : i32
    %c0_i32_2 = arith.constant 0 : i32
    return %arg0, %c0_i32, %c0_i32_0, %c0_i32_1 : i32, i32, i32, i32
  }
}

module attributes {stable_mosaic.version = 11 : i64} {
  func.func @_fc_fused_kernel(%arg0: i32, %arg1: memref<8x3136xf32, #tpu.memory_space<vmem>>, %arg2: memref<3136x128xf32, #tpu.memory_space<vmem>>, %arg3: memref<1x128xf32, #tpu.memory_space<vmem>>, %arg4: memref<128x10xf32, #tpu.memory_space<vmem>>, %arg5: memref<1x10xf32, #tpu.memory_space<vmem>>, %arg6: memref<8x10xf32, #tpu.memory_space<vmem>>) attributes {dimension_semantics = [#tpu.dimension_semantics<parallel>], iteration_bounds = array<i64: 2>, scalar_prefetch = 0 : i64, scratch_operands = 0 : i64, tpu.core_type = #tpu.core_type<tc>, window_params = [{transform_indices = @transform_0, window_bounds = array<i64: 8, 3136>}, {pipeline_mode = #tpu.pipeline_mode<synchronous>, transform_indices = @transform_1, window_bounds = array<i64: 3136, 128>}, {pipeline_mode = #tpu.pipeline_mode<synchronous>, transform_indices = @transform_2, window_bounds = array<i64: 1, 128>}, {pipeline_mode = #tpu.pipeline_mode<synchronous>, transform_indices = @transform_3, window_bounds = array<i64: 128, 10>}, {pipeline_mode = #tpu.pipeline_mode<synchronous>, transform_indices = @transform_4, window_bounds = array<i64: 1, 10>}, {transform_indices = @transform_5, window_bounds = array<i64: 8, 10>}]} {
    %c0 = arith.constant 0 : index
    %c0_0 = arith.constant 0 : index
    %0 = vector.load %arg1[%c0, %c0_0] : memref<8x3136xf32, #tpu.memory_space<vmem>>, vector<8x3136xf32>
    %c0_1 = arith.constant 0 : index
    %c0_2 = arith.constant 0 : index
    %1 = vector.load %arg2[%c0_1, %c0_2] : memref<3136x128xf32, #tpu.memory_space<vmem>>, vector<3136x128xf32>
    %cst = arith.constant dense<0.000000e+00> : vector<8x128xf32>
    %2 = tpu.matmul %0, %1, %cst {dimension_numbers = #tpu.dot_dimension_numbers<[1], [0], [0], [1], [0, 0, 1, 1], [], []>} : vector<8x3136xf32>, vector<3136x128xf32>, vector<8x128xf32> -> vector<8x128xf32>
    %c0_3 = arith.constant 0 : index
    %c0_4 = arith.constant 0 : index
    %3 = vector.load %arg3[%c0_3, %c0_4] : memref<1x128xf32, #tpu.memory_space<vmem>>, vector<1x128xf32>
    %4 = vector.broadcast %3 : vector<1x128xf32> to vector<8x128xf32>
    %5 = arith.addf %2, %4 : vector<8x128xf32>
    %cst_5 = arith.constant 0.000000e+00 : f32
    %6 = vector.broadcast %cst_5 : f32 to vector<8x128xf32>
    %7 = arith.maximumf %5, %6 : vector<8x128xf32>
    %c0_6 = arith.constant 0 : index
    %c0_7 = arith.constant 0 : index
    %8 = vector.load %arg4[%c0_6, %c0_7] : memref<128x10xf32, #tpu.memory_space<vmem>>, vector<128x10xf32>
    %cst_8 = arith.constant dense<0.000000e+00> : vector<8x10xf32>
    %9 = tpu.matmul %7, %8, %cst_8 {dimension_numbers = #tpu.dot_dimension_numbers<[1], [0], [0], [1], [0, 0, 1, 1], [], []>} : vector<8x128xf32>, vector<128x10xf32>, vector<8x10xf32> -> vector<8x10xf32>
    %c0_9 = arith.constant 0 : index
    %c0_10 = arith.constant 0 : index
    %10 = vector.load %arg5[%c0_9, %c0_10] : memref<1x10xf32, #tpu.memory_space<vmem>>, vector<1x10xf32>
    %11 = vector.broadcast %10 : vector<1x10xf32> to vector<8x10xf32>
    %12 = arith.addf %9, %11 : vector<8x10xf32>
    %c0_11 = arith.constant 0 : index
    %c0_12 = arith.constant 0 : index
    %13 = vector.load %arg6[%c0_11, %c0_12] : memref<8x10xf32, #tpu.memory_space<vmem>>, vector<8x10xf32>
    tpu.vector_store %arg6[%c0_11, %c0_12], %12 {strides = array<i32>} : memref<8x10xf32, #tpu.memory_space<vmem>>, vector<8x10xf32>,
    return
  }
  func.func @transform_0(%arg0: i32) -> (i32, i32) {
    %c0_i32 = arith.constant 0 : i32
    %c0_i32_0 = arith.constant 0 : i32
    return %arg0, %c0_i32 : i32, i32
  }
  func.func @transform_1(%arg0: i32) -> (i32, i32) {
    %c0_i32 = arith.constant 0 : i32
    %c0_i32_0 = arith.constant 0 : i32
    %c0_i32_1 = arith.constant 0 : i32
    return %c0_i32, %c0_i32_0 : i32, i32
  }
  func.func @transform_2(%arg0: i32) -> (i32, i32) {
    %c0_i32 = arith.constant 0 : i32
    %c0_i32_0 = arith.constant 0 : i32
    %c0_i32_1 = arith.constant 0 : i32
    return %c0_i32, %c0_i32_0 : i32, i32
  }
  func.func @transform_3(%arg0: i32) -> (i32, i32) {
    %c0_i32 = arith.constant 0 : i32
    %c0_i32_0 = arith.constant 0 : i32
    %c0_i32_1 = arith.constant 0 : i32
    return %c0_i32, %c0_i32_0 : i32, i32
  }
  func.func @transform_4(%arg0: i32) -> (i32, i32) {
    %c0_i32 = arith.constant 0 : i32
    %c0_i32_0 = arith.constant 0 : i32
    %c0_i32_1 = arith.constant 0 : i32
    return %c0_i32, %c0_i32_0 : i32, i32
  }
  func.func @transform_5(%arg0: i32) -> (i32, i32) {
    %c0_i32 = arith.constant 0 : i32
    %c0_i32_0 = arith.constant 0 : i32
    return %arg0, %c0_i32 : i32, i32
  }
}

</mosaic_0001>

<llo_original>
// kernel: conv_test_net_forward.3
$region0: #{conv_test_net_forward.3}
  #allocation0 [shape = 'u32[]', space=smem, size = 0x4, offset = 0x4, fixed_abs, tag = 'smem constant byte address 0x4 - core index']
  #allocation1 [shape = 'u32[144,128]{1,0:T(1,128)}', space=vmem, size = 0x12000, scoped, tag = 'internal scratch']
  #allocation2 [shape = 'f32[28,32]{1,0:T(8,128)}', space=vmem, size = 0x4000, scoped, tag = 'scratch operand']
  %s0 = inlined_call_operand.vmem [shape: f32[2,30,30,1], index: 0, kind: input, shape index: {}]
  %s1 = inlined_call_operand.vmem [shape: f32[3,3,1,32], index: 1, kind: input, shape index: {}]
  %s2 = inlined_call_operand.vmem [shape: f32[1,32], index: 2, kind: input, shape index: {}]
  %s3 = inlined_call_operand.vmem [shape: f32[2,14,14,32], index: 3, kind: output, shape index: {}]
  %s4 = sld [smem:[#allocation0]]
  $region52: #{conv_test_net_forward.3} parent=0
    _
  %s6 = ssub.s32 1, %s4
  %s7 = scalar_select 0, %s6, %s4
  loop: start=0, step=1, limit=4
  $region2: #{conv_test_net_forward.3} parent=0 // loop_pre_header
    _
  $region3: #{conv_test_net_forward.3} parent=0 // loop_header
    %s9 = sphi 0, %s13
    %p10 = scmp.ge.s32.totalorder %s9, 4
    %s19 = sphi 0, %s21
    %s22 = sphi 0, %s19
    %s23 = sphi 0, %s22
    %s39 = sphi 0, %s23
    %s43 = sphi 0, %s43
    %s45 = sphi 0, %s43
    %s46 = sphi 0, %s45
    %s60 = sphi 0, %s46
    %s64 = sphi 0, %s64
    %s66 = sphi 0, %s64
    %s67 = sphi 0, %s66
    %s81 = sphi 0, %s67
    %s87 = sphi 0, %s89
    %s90 = sphi 0, %s87
    %s91 = sphi 0, %s90
    %s107 = sphi 0, %s91
  $region4: #{conv_test_net_forward.3} parent=0 // loop_header_branch
    %12 = sbr.rel (%p10) target = $region8
  $region5: #{conv_test_net_forward.3} parent=0 // loop_body
    %s14 = ssub.s32 %s9, 1
    %s15 = ssub.s32 %s9, 2
    %s16 = sadd.s32 %s9, 1
    %s17 = ssub.s32 %s9, %s16
    %p18 = scmp.eq.s32.totalorder %s17, 0
    %s20 = sadd.s32 %s19, 1
    %s21 = scalar_select %p18, %s19, %s20
    %p24 = pneg %p18
    %p25 = scmp.eq.s32.totalorder %s9, 1
    %p26 = por %p24, %p25
    %p27 = scmp.ne.s32.totalorder %s19, %s22
    %p28 = scmp.eq.s32.totalorder %s9, 0
    %p29 = por %p27, %p28
    %p30 = scmp.ne.s32.totalorder %s19, %s22
    %p31 = scmp.eq.s32.totalorder %s14, 1
    %p32 = por %p30, %p31
    %p33 = scmp.ne.s32.totalorder %s22, %s23
    %p34 = scmp.eq.s32.totalorder %s14, 0
    %p35 = por %p33, %p34
    %p36 = scmp.ne.s32.totalorder %s22, %s23
    %p37 = scmp.eq.s32.totalorder %s15, 1
    %p38 = por %p36, %p37
    %p40 = scmp.ne.s32.totalorder %s23, %s39
    %p41 = scmp.eq.s32.totalorder %s15, 0
    %p42 = por %p40, %p41
    %s44 = sadd.s32 %s43, 1
    %p47 = scmp.eq.s32.totalorder %s9, 1
    %p48 = scmp.ne.s32.totalorder %s43, %s45
    %p49 = scmp.eq.s32.totalorder %s9, 0
    %p50 = por %p48, %p49
    %p51 = scmp.ne.s32.totalorder %s43, %s45
    %p52 = scmp.eq.s32.totalorder %s14, 1
    %p53 = por %p51, %p52
    %p54 = scmp.ne.s32.totalorder %s45, %s46
    %p55 = scmp.eq.s32.totalorder %s14, 0
    %p56 = por %p54, %p55
    %p57 = scmp.ne.s32.totalorder %s45, %s46
    %p58 = scmp.eq.s32.totalorder %s15, 1
    %p59 = por %p57, %p58
    %p61 = scmp.ne.s32.totalorder %s46, %s60
    %p62 = scmp.eq.s32.totalorder %s15, 0
    %p63 = por %p61, %p62
    %s65 = sadd.s32 %s64, 1
    %p68 = scmp.eq.s32.totalorder %s9, 1
    %p69 = scmp.ne.s32.totalorder %s64, %s66
    %p70 = scmp.eq.s32.totalorder %s9, 0
    %p71 = por %p69, %p70
    %p72 = scmp.ne.s32.totalorder %s64, %s66
    %p73 = scmp.eq.s32.totalorder %s14, 1
    %p74 = por %p72, %p73
    %p75 = scmp.ne.s32.totalorder %s66, %s67
    %p76 = scmp.eq.s32.totalorder %s14, 0
    %p77 = por %p75, %p76
    %p78 = scmp.ne.s32.totalorder %s66, %s67
    %p79 = scmp.eq.s32.totalorder %s15, 1
    %p80 = por %p78, %p79
    %p82 = scmp.ne.s32.totalorder %s67, %s81
    %p83 = scmp.eq.s32.totalorder %s15, 0
    %p84 = por %p82, %p83
    %s85 = ssub.s32 %s9, %s16
    %p86 = scmp.eq.s32.totalorder %s85, 0
    %s88 = sadd.s32 %s87, 1
    %s89 = scalar_select %p86, %s87, %s88
    %p92 = pneg %p86
    %p93 = scmp.eq.s32.totalorder %s9, 1
    %p94 = por %p92, %p93
    %p95 = scmp.ne.s32.totalorder %s87, %s90
    %p96 = scmp.eq.s32.totalorder %s9, 0
    %p97 = por %p95, %p96
    %p98 = scmp.ne.s32.totalorder %s87, %s90
    %p99 = scmp.eq.s32.totalorder %s14, 1
    %p100 = por %p98, %p99
    %p101 = scmp.ne.s32.totalorder %s90, %s91
    %p102 = scmp.eq.s32.totalorder %s14, 0
    %p103 = por %p101, %p102
    %p104 = scmp.ne.s32.totalorder %s90, %s91
    %p105 = scmp.eq.s32.totalorder %s15, 1
    %p106 = por %p104, %p105
    %p108 = scmp.ne.s32.totalorder %s91, %s107
    %p109 = scmp.eq.s32.totalorder %s15, 0
    %p110 = por %p108, %p109
    %p111 = scmp.le.s32.totalorder 1, %s9
    %p112 = scmp.lt.s32.totalorder %s9, 3
    %p113 = pnand %p111, %p112
    %p114 = pneg %p113
    // Predicated region
    $region9: #{conv_test_net_forward.3} parent=5 // pred_check
      _
    $region10: #{conv_test_net_forward.3} parent=5 // pred_check_branch
      %116 = sbr.rel (%p113) target = $region12
    $region11: #{conv_test_net_forward.3} parent=5 // pred_region
      %s117 = ssub.s32 %s9, 1
      // Predicated region
      $region13: #{conv_test_net_forward.3} parent=11 // pred_check
        %p118 = pneg %p56
      $region14: #{conv_test_net_forward.3} parent=11 // pred_check_branch
        %120 = sbr.rel (%p118) target = $region16
      $region15: #{conv_test_net_forward.3} parent=11 // pred_region
        _
      $region16: #{conv_test_net_forward.3} parent=11 // pred_fallthru
        _
      // Predicated region
      $region17: #{conv_test_net_forward.3} parent=11 // pred_check
        %p121 = pneg %p77
      $region18: #{conv_test_net_forward.3} parent=11 // pred_check_branch
        %123 = sbr.rel (%p121) target = $region20
      $region19: #{conv_test_net_forward.3} parent=11 // pred_region
        _
      $region20: #{conv_test_net_forward.3} parent=11 // pred_fallthru
        _
    $region12: #{conv_test_net_forward.3} parent=5 // pred_fallthru
      _
    %p124 = scmp.lt.s32.totalorder %s9, 2
    // Predicated region
    $region21: #{conv_test_net_forward.3} parent=5 // pred_check
      %p125 = pneg %p124
    $region22: #{conv_test_net_forward.3} parent=5 // pred_check_branch
      %127 = sbr.rel (%p125) target = $region24
    $region23: #{conv_test_net_forward.3} parent=5 // pred_region
      // Predicated region
      $region25: #{conv_test_net_forward.3} parent=23 // pred_check
        %p128 = pneg %p29
      $region26: #{conv_test_net_forward.3} parent=23 // pred_check_branch
        %130 = sbr.rel (%p128) target = $region28
      $region27: #{conv_test_net_forward.3} parent=23 // pred_region
        %p131 = scmp.lt.s32.totalorder %s9, 1
        %s132 = scalar_select %p131, %s9, 1
        %s133 = smul.addr %s132, 120
        %s134 = smul.addr %s133, 8
        %s135 = scalar_lea.vmem %s0, %s134
      $region28: #{conv_test_net_forward.3} parent=23 // pred_fallthru
        _
    $region24: #{conv_test_net_forward.3} parent=5 // pred_fallthru
      _
    %p136 = scmp.le.s32.totalorder 1, %s9
    %p137 = scmp.lt.s32.totalorder %s9, 3
    %p138 = pnand %p136, %p137
    %p139 = pneg %p138
    // Predicated region
    $region29: #{conv_test_net_forward.3} parent=5 // pred_check
      _
    $region30: #{conv_test_net_forward.3} parent=5 // pred_check_branch
      %141 = sbr.rel (%p138) target = $region32
    $region31: #{conv_test_net_forward.3} parent=5 // pred_region
      %s142 = ssub.s32 %s9, 1
      %p143 = scmp.lt.s32.totalorder %s14, 1
      %s144 = scalar_select %p143, %s14, 1
      %s145 = smul.addr %s144, 120
      %s146 = smul.addr %s145, 8
      %s147 = scalar_lea.vmem %s0, %s146
      %p148 = pneg %p35
      %p149 = pneg %p32
      %p150 = pneg %p56
      %p151 = pneg %p53
      %p152 = pneg %p77
      %p153 = pneg %p74
      %p154 = pneg %p103
      %p155 = pneg %p100
      %p156 = scmp.lt.s32.totalorder %s14, 1
      %s157 = scalar_select %p156, %s14, 1
      %s158 = smul.addr %s157, 28
      %s159 = smul.addr %s158, 8
      %s160 = scalar_lea.vmem %s3, %s159
      %p161 = scmp.lt.s32.totalorder %s14, 1
      %s162 = scalar_select %p161, %s14, 1
      %s163 = smul.addr %s162, 120
      %s164 = smul.addr %s163, 8
      %s165 = scalar_lea.vmem %s0, %s164
      %p166 = scmp.lt.s32.totalorder %s14, 1
      %s167 = scalar_select %p166, %s14, 1
      %s168 = smul.addr %s167, 28
      %s169 = smul.addr %s168, 8
      %s170 = scalar_lea.vmem %s3, %s169
      %v171 = vld [vmem:[%s2] sm:$0x1]
      loop: start=0, step=1, limit=14
      $region33: #{conv_test_net_forward.3} parent=31 // loop_pre_header
        _
      $region34: #{conv_test_net_forward.3} parent=31 // loop_header
        %s173 = sphi 0, %s177
        %p174 = scmp.ge.s32.totalorder %s173, 14
      $region35: #{conv_test_net_forward.3} parent=31 // loop_header_branch
        %176 = sbr.rel (%p174) target = $region39
      $region36: #{conv_test_net_forward.3} parent=31 // loop_body
        %s178 = smul.u32 %s173, 2
        %s179 = smul.u32 %s178, 32
        %s180 = scalar_lea.vmem %s165, %s179
        %v181 = vld [vmem:[%s180] sm:$0xff]
        %v182 = vld [vmem:[%s180 + $0x8] sm:$0xff]
        %v183 = vld [vmem:[%s180 + $0x10] sm:$0xff]
        %v184 = vld [vmem:[%s180 + $0x18] sm:$0xf]
        %v185 = vld [vmem:[%s1] sm:$0x1]
        %187 = vset.pattern.permute.xlu0 0
        %188 = vperm.xlu0 %187, %v181
        %v189 = vpop.permute.xlu0 %188
        %192 = vset.pattern.permute.xlu0 0
        %193 = vperm.xlu0 %192, %v182
        %v194 = vpop.permute.xlu0 %193
        %197 = vset.pattern.permute.xlu0 0
        %198 = vperm.xlu0 %197, %v183
        %v199 = vpop.permute.xlu0 %198
        %202 = vset.pattern.permute.xlu0 0
        %203 = vperm.xlu0 %202, %v184
        %v204 = vpop.permute.xlu0 %203
        %v207 = vlaneseq
        %v208 = vshrl.u32 %v207, 7
        %v209 = vsub.s32 0, %v208
        %v210 = vrot.slane %v185, %v209
        %v212 = vmul.f32 %v189, %v210
        %v213 = vmul.f32 %v194, %v210
        %v214 = vmul.f32 %v199, %v210
        %v215 = vmul.f32 %v204, %v210
        %v216 = vadd.f32 %v212, 0.0
        %v217 = vadd.f32 %v213, 0.0
        %v218 = vadd.f32 %v214, 0.0
        %v219 = vadd.f32 %v215, 0.0
        %v220 = vld [vmem:[%s180 + $0x1] sm:$0xff]
        %v221 = vld [vmem:[%s180 + $0x9] sm:$0xff]
        %v222 = vld [vmem:[%s180 + $0x11] sm:$0xff]
        %v223 = vld [vmem:[%s180 + $0x19] sm:$0xf]
        %s224 = scalar_lea.vmem %s1, 1
        %v225 = vld [vmem:[%s224] sm:$0x1]
        %227 = vset.pattern.permute.xlu0 0
        %228 = vperm.xlu0 %227, %v220
        %v229 = vpop.permute.xlu0 %228
        %232 = vset.pattern.permute.xlu0 0
        %233 = vperm.xlu0 %232, %v221
        %v234 = vpop.permute.xlu0 %233
        %237 = vset.pattern.permute.xlu0 0
        %238 = vperm.xlu0 %237, %v222
        %v239 = vpop.permute.xlu0 %238
        %242 = vset.pattern.permute.xlu0 0
        %243 = vperm.xlu0 %242, %v223
        %v244 = vpop.permute.xlu0 %243
        %v247 = vlaneseq
        %v248 = vshrl.u32 %v247, 7
        %v249 = vsub.s32 0, %v248
        %v250 = vrot.slane %v225, %v249
        %v252 = vmul.f32 %v229, %v250
        %v253 = vmul.f32 %v234, %v250
        %v254 = vmul.f32 %v239, %v250
        %v255 = vmul.f32 %v244, %v250
        %v256 = vadd.f32 %v216, %v252
        %v257 = vadd.f32 %v217, %v253
        %v258 = vadd.f32 %v218, %v254
        %v259 = vadd.f32 %v219, %v255
        %v260 = vld [vmem:[%s180 + $0x2] sm:$0xff]
        %v261 = vld [vmem:[%s180 + $0xa] sm:$0xff]
        %v262 = vld [vmem:[%s180 + $0x12] sm:$0xff]
        %v263 = vld [vmem:[%s180 + $0x1a] sm:$0xf]
        %s264 = scalar_lea.vmem %s1, 2
        %v265 = vld [vmem:[%s264] sm:$0x1]
        %267 = vset.pattern.permute.xlu0 0
        %268 = vperm.xlu0 %267, %v260
        %v269 = vpop.permute.xlu0 %268
        %272 = vset.pattern.permute.xlu0 0
        %273 = vperm.xlu0 %272, %v261
        %v274 = vpop.permute.xlu0 %273
        %277 = vset.pattern.permute.xlu0 0
        %278 = vperm.xlu0 %277, %v262
        %v279 = vpop.permute.xlu0 %278
        %282 = vset.pattern.permute.xlu0 0
        %283 = vperm.xlu0 %282, %v263
        %v284 = vpop.permute.xlu0 %283
        %v287 = vlaneseq
        %v288 = vshrl.u32 %v287, 7
        %v289 = vsub.s32 0, %v288
        %v290 = vrot.slane %v265, %v289
        %v292 = vmul.f32 %v269, %v290
        %v293 = vmul.f32 %v274, %v290
        %v294 = vmul.f32 %v279, %v290
        %v295 = vmul.f32 %v284, %v290
        %v296 = vadd.f32 %v256, %v292
        %v297 = vadd.f32 %v257, %v293
        %v298 = vadd.f32 %v258, %v294
        %v299 = vadd.f32 %v259, %v295
        %s300 = sadd.s32 %s178, 1
        %s301 = smul.u32 %s300, 32
        %s302 = scalar_lea.vmem %s165, %s301
        %v303 = vld [vmem:[%s302] sm:$0xff]
        %v304 = vld [vmem:[%s302 + $0x8] sm:$0xff]
        %v305 = vld [vmem:[%s302 + $0x10] sm:$0xff]
        %v306 = vld [vmem:[%s302 + $0x18] sm:$0xf]
        %s307 = scalar_lea.vmem %s1, 3
        %v308 = vld [vmem:[%s307] sm:$0x1]
        %310 = vset.pattern.permute.xlu0 0
        %311 = vperm.xlu0 %310, %v303
        %v312 = vpop.permute.xlu0 %311
        %315 = vset.pattern.permute.xlu0 0
        %316 = vperm.xlu0 %315, %v304
        %v317 = vpop.permute.xlu0 %316
        %320 = vset.pattern.permute.xlu0 0
        %321 = vperm.xlu0 %320, %v305
        %v322 = vpop.permute.xlu0 %321
        %325 = vset.pattern.permute.xlu0 0
        %326 = vperm.xlu0 %325, %v306
        %v327 = vpop.permute.xlu0 %326
        %v330 = vlaneseq
        %v331 = vshrl.u32 %v330, 7
        %v332 = vsub.s32 0, %v331
        %v333 = vrot.slane %v308, %v332
        %v335 = vmul.f32 %v312, %v333
        %v336 = vmul.f32 %v317, %v333
        %v337 = vmul.f32 %v322, %v333
        %v338 = vmul.f32 %v327, %v333
        %v339 = vadd.f32 %v296, %v335
        %v340 = vadd.f32 %v297, %v336
        %v341 = vadd.f32 %v298, %v337
        %v342 = vadd.f32 %v299, %v338
        %v343 = vld [vmem:[%s302 + $0x1] sm:$0xff]
        %v344 = vld [vmem:[%s302 + $0x9] sm:$0xff]
        %v345 = vld [vmem:[%s302 + $0x11] sm:$0xff]
        %v346 = vld [vmem:[%s302 + $0x19] sm:$0xf]
        %s347 = scalar_lea.vmem %s1, 4
        %v348 = vld [vmem:[%s347] sm:$0x1]
        %350 = vset.pattern.permute.xlu0 0
        %351 = vperm.xlu0 %350, %v343
        %v352 = vpop.permute.xlu0 %351
        %355 = vset.pattern.permute.xlu0 0
        %356 = vperm.xlu0 %355, %v344
        %v357 = vpop.permute.xlu0 %356
        %360 = vset.pattern.permute.xlu0 0
        %361 = vperm.xlu0 %360, %v345
        %v362 = vpop.permute.xlu0 %361
        %365 = vset.pattern.permute.xlu0 0
        %366 = vperm.xlu0 %365, %v346
        %v367 = vpop.permute.xlu0 %366
        %v370 = vlaneseq
        %v371 = vshrl.u32 %v370, 7
        %v372 = vsub.s32 0, %v371
        %v373 = vrot.slane %v348, %v372
        %v375 = vmul.f32 %v352, %v373
        %v376 = vmul.f32 %v357, %v373
        %v377 = vmul.f32 %v362, %v373
        %v378 = vmul.f32 %v367, %v373
        %v379 = vadd.f32 %v339, %v375
        %v380 = vadd.f32 %v340, %v376
        %v381 = vadd.f32 %v341, %v377
        %v382 = vadd.f32 %v342, %v378
        %v383 = vld [vmem:[%s302 + $0x2] sm:$0xff]
        %v384 = vld [vmem:[%s302 + $0xa] sm:$0xff]
        %v385 = vld [vmem:[%s302 + $0x12] sm:$0xff]
        %v386 = vld [vmem:[%s302 + $0x1a] sm:$0xf]
        %s387 = scalar_lea.vmem %s1, 5
        %v388 = vld [vmem:[%s387] sm:$0x1]
        %390 = vset.pattern.permute.xlu0 0
        %391 = vperm.xlu0 %390, %v383
        %v392 = vpop.permute.xlu0 %391
        %395 = vset.pattern.permute.xlu0 0
        %396 = vperm.xlu0 %395, %v384
        %v397 = vpop.permute.xlu0 %396
        %400 = vset.pattern.permute.xlu0 0
        %401 = vperm.xlu0 %400, %v385
        %v402 = vpop.permute.xlu0 %401
        %405 = vset.pattern.permute.xlu0 0
        %406 = vperm.xlu0 %405, %v386
        %v407 = vpop.permute.xlu0 %406
        %v410 = vlaneseq
        %v411 = vshrl.u32 %v410, 7
        %v412 = vsub.s32 0, %v411
        %v413 = vrot.slane %v388, %v412
        %v415 = vmul.f32 %v392, %v413
        %v416 = vmul.f32 %v397, %v413
        %v417 = vmul.f32 %v402, %v413
        %v418 = vmul.f32 %v407, %v413
        %v419 = vadd.f32 %v379, %v415
        %v420 = vadd.f32 %v380, %v416
        %v421 = vadd.f32 %v381, %v417
        %v422 = vadd.f32 %v382, %v418
        %s423 = sadd.s32 %s178, 2
        %s424 = smul.u32 %s423, 32
        %s425 = scalar_lea.vmem %s165, %s424
        %v426 = vld [vmem:[%s425] sm:$0xff]
        %v427 = vld [vmem:[%s425 + $0x8] sm:$0xff]
        %v428 = vld [vmem:[%s425 + $0x10] sm:$0xff]
        %v429 = vld [vmem:[%s425 + $0x18] sm:$0xf]
        %s430 = scalar_lea.vmem %s1, 6
        %v431 = vld [vmem:[%s430] sm:$0x1]
        %433 = vset.pattern.permute.xlu0 0
        %434 = vperm.xlu0 %433, %v426
        %v435 = vpop.permute.xlu0 %434
        %438 = vset.pattern.permute.xlu0 0
        %439 = vperm.xlu0 %438, %v427
        %v440 = vpop.permute.xlu0 %439
        %443 = vset.pattern.permute.xlu0 0
        %444 = vperm.xlu0 %443, %v428
        %v445 = vpop.permute.xlu0 %444
        %448 = vset.pattern.permute.xlu0 0
        %449 = vperm.xlu0 %448, %v429
        %v450 = vpop.permute.xlu0 %449
        %v453 = vlaneseq
        %v454 = vshrl.u32 %v453, 7
        %v455 = vsub.s32 0, %v454
        %v456 = vrot.slane %v431, %v455
        %v458 = vmul.f32 %v435, %v456
        %v459 = vmul.f32 %v440, %v456
        %v460 = vmul.f32 %v445, %v456
        %v461 = vmul.f32 %v450, %v456
        %v462 = vadd.f32 %v419, %v458
        %v463 = vadd.f32 %v420, %v459
        %v464 = vadd.f32 %v421, %v460
        %v465 = vadd.f32 %v422, %v461
        %v466 = vld [vmem:[%s425 + $0x1] sm:$0xff]
        %v467 = vld [vmem:[%s425 + $0x9] sm:$0xff]
        %v468 = vld [vmem:[%s425 + $0x11] sm:$0xff]
        %v469 = vld [vmem:[%s425 + $0x19] sm:$0xf]
        %s470 = scalar_lea.vmem %s1, 7
        %v471 = vld [vmem:[%s470] sm:$0x1]
        %473 = vset.pattern.permute.xlu0 0
        %474 = vperm.xlu0 %473, %v466
        %v475 = vpop.permute.xlu0 %474
        %478 = vset.pattern.permute.xlu0 0
        %479 = vperm.xlu0 %478, %v467
        %v480 = vpop.permute.xlu0 %479
        %483 = vset.pattern.permute.xlu0 0
        %484 = vperm.xlu0 %483, %v468
        %v485 = vpop.permute.xlu0 %484
        %488 = vset.pattern.permute.xlu0 0
        %489 = vperm.xlu0 %488, %v469
        %v490 = vpop.permute.xlu0 %489
        %v493 = vlaneseq
        %v494 = vshrl.u32 %v493, 7
        %v495 = vsub.s32 0, %v494
        %v496 = vrot.slane %v471, %v495
        %v498 = vmul.f32 %v475, %v496
        %v499 = vmul.f32 %v480, %v496
        %v500 = vmul.f32 %v485, %v496
        %v501 = vmul.f32 %v490, %v496
        %v502 = vadd.f32 %v462, %v498
        %v503 = vadd.f32 %v463, %v499
        %v504 = vadd.f32 %v464, %v500
        %v505 = vadd.f32 %v465, %v501
        %v506 = vld [vmem:[%s425 + $0x2] sm:$0xff]
        %v507 = vld [vmem:[%s425 + $0xa] sm:$0xff]
        %v508 = vld [vmem:[%s425 + $0x12] sm:$0xff]
        %v509 = vld [vmem:[%s425 + $0x1a] sm:$0xf]
        %s510 = scalar_lea.vmem %s1, 8
        %v511 = vld [vmem:[%s510] sm:$0x1]
        %513 = vset.pattern.permute.xlu0 0
        %514 = vperm.xlu0 %513, %v506
        %v515 = vpop.permute.xlu0 %514
        %518 = vset.pattern.permute.xlu0 0
        %519 = vperm.xlu0 %518, %v507
        %v520 = vpop.permute.xlu0 %519
        %523 = vset.pattern.permute.xlu0 0
        %524 = vperm.xlu0 %523, %v508
        %v525 = vpop.permute.xlu0 %524
        %528 = vset.pattern.permute.xlu0 0
        %529 = vperm.xlu0 %528, %v509
        %v530 = vpop.permute.xlu0 %529
        %v533 = vlaneseq
        %v534 = vshrl.u32 %v533, 7
        %v535 = vsub.s32 0, %v534
        %v536 = vrot.slane %v511, %v535
        %v538 = vmul.f32 %v515, %v536
        %v539 = vmul.f32 %v520, %v536
        %v540 = vmul.f32 %v525, %v536
        %v541 = vmul.f32 %v530, %v536
        %v542 = vadd.f32 %v502, %v538
        %v543 = vadd.f32 %v503, %v539
        %v544 = vadd.f32 %v504, %v540
        %v545 = vadd.f32 %v505, %v541
        %v546 = vmul.f32 %v312, %v210
        %v547 = vmul.f32 %v317, %v210
        %v548 = vmul.f32 %v322, %v210
        %v549 = vmul.f32 %v327, %v210
        %v550 = vadd.f32 %v546, 0.0
        %v551 = vadd.f32 %v547, 0.0
        %v552 = vadd.f32 %v548, 0.0
        %v553 = vadd.f32 %v549, 0.0
        %v554 = vmul.f32 %v352, %v250
        %v555 = vmul.f32 %v357, %v250
        %v556 = vmul.f32 %v362, %v250
        %v557 = vmul.f32 %v367, %v250
        %v558 = vadd.f32 %v550, %v554
        %v559 = vadd.f32 %v551, %v555
        %v560 = vadd.f32 %v552, %v556
        %v561 = vadd.f32 %v553, %v557
        %v562 = vmul.f32 %v392, %v290
        %v563 = vmul.f32 %v397, %v290
        %v564 = vmul.f32 %v402, %v290
        %v565 = vmul.f32 %v407, %v290
        %v566 = vadd.f32 %v558, %v562
        %v567 = vadd.f32 %v559, %v563
        %v568 = vadd.f32 %v560, %v564
        %v569 = vadd.f32 %v561, %v565
        %v570 = vmul.f32 %v435, %v333
        %v571 = vmul.f32 %v440, %v333
        %v572 = vmul.f32 %v445, %v333
        %v573 = vmul.f32 %v450, %v333
        %v574 = vadd.f32 %v566, %v570
        %v575 = vadd.f32 %v567, %v571
        %v576 = vadd.f32 %v568, %v572
        %v577 = vadd.f32 %v569, %v573
        %v578 = vmul.f32 %v475, %v373
        %v579 = vmul.f32 %v480, %v373
        %v580 = vmul.f32 %v485, %v373
        %v581 = vmul.f32 %v490, %v373
        %v582 = vadd.f32 %v574, %v578
        %v583 = vadd.f32 %v575, %v579
        %v584 = vadd.f32 %v576, %v580
        %v585 = vadd.f32 %v577, %v581
        %v586 = vmul.f32 %v515, %v413
        %v587 = vmul.f32 %v520, %v413
        %v588 = vmul.f32 %v525, %v413
        %v589 = vmul.f32 %v530, %v413
        %v590 = vadd.f32 %v582, %v586
        %v591 = vadd.f32 %v583, %v587
        %v592 = vadd.f32 %v584, %v588
        %v593 = vadd.f32 %v585, %v589
        %s594 = sadd.s32 %s178, 3
        %s595 = smul.u32 %s594, 32
        %s596 = scalar_lea.vmem %s165, %s595
        %v597 = vld [vmem:[%s596] sm:$0xff]
        %v598 = vld [vmem:[%s596 + $0x8] sm:$0xff]
        %v599 = vld [vmem:[%s596 + $0x10] sm:$0xff]
        %v600 = vld [vmem:[%s596 + $0x18] sm:$0xf]
        %602 = vset.pattern.permute.xlu0 0
        %603 = vperm.xlu0 %602, %v597
        %v604 = vpop.permute.xlu0 %603
        %607 = vset.pattern.permute.xlu0 0
        %608 = vperm.xlu0 %607, %v598
        %v609 = vpop.permute.xlu0 %608
        %612 = vset.pattern.permute.xlu0 0
        %613 = vperm.xlu0 %612, %v599
        %v614 = vpop.permute.xlu0 %613
        %617 = vset.pattern.permute.xlu0 0
        %618 = vperm.xlu0 %617, %v600
        %v619 = vpop.permute.xlu0 %618
        %v621 = vmul.f32 %v604, %v456
        %v622 = vmul.f32 %v609, %v456
        %v623 = vmul.f32 %v614, %v456
        %v624 = vmul.f32 %v619, %v456
        %v625 = vadd.f32 %v590, %v621
        %v626 = vadd.f32 %v591, %v622
        %v627 = vadd.f32 %v592, %v623
        %v628 = vadd.f32 %v593, %v624
        %v629 = vld [vmem:[%s596 + $0x1] sm:$0xff]
        %v630 = vld [vmem:[%s596 + $0x9] sm:$0xff]
        %v631 = vld [vmem:[%s596 + $0x11] sm:$0xff]
        %v632 = vld [vmem:[%s596 + $0x19] sm:$0xf]
        %634 = vset.pattern.permute.xlu0 0
        %635 = vperm.xlu0 %634, %v629
        %v636 = vpop.permute.xlu0 %635
        %639 = vset.pattern.permute.xlu0 0
        %640 = vperm.xlu0 %639, %v630
        %v641 = vpop.permute.xlu0 %640
        %644 = vset.pattern.permute.xlu0 0
        %645 = vperm.xlu0 %644, %v631
        %v646 = vpop.permute.xlu0 %645
        %649 = vset.pattern.permute.xlu0 0
        %650 = vperm.xlu0 %649, %v632
        %v651 = vpop.permute.xlu0 %650
        %v653 = vmul.f32 %v636, %v496
        %v654 = vmul.f32 %v641, %v496
        %v655 = vmul.f32 %v646, %v496
        %v656 = vmul.f32 %v651, %v496
        %v657 = vadd.f32 %v625, %v653
        %v658 = vadd.f32 %v626, %v654
        %v659 = vadd.f32 %v627, %v655
        %v660 = vadd.f32 %v628, %v656
        %v661 = vld [vmem:[%s596 + $0x2] sm:$0xff]
        %v662 = vld [vmem:[%s596 + $0xa] sm:$0xff]
        %v663 = vld [vmem:[%s596 + $0x12] sm:$0xff]
        %v664 = vld [vmem:[%s596 + $0x1a] sm:$0xf]
        %666 = vset.pattern.permute.xlu0 0
        %667 = vperm.xlu0 %666, %v661
        %v668 = vpop.permute.xlu0 %667
        %671 = vset.pattern.permute.xlu0 0
        %672 = vperm.xlu0 %671, %v662
        %v673 = vpop.permute.xlu0 %672
        %676 = vset.pattern.permute.xlu0 0
        %677 = vperm.xlu0 %676, %v663
        %v678 = vpop.permute.xlu0 %677
        %681 = vset.pattern.permute.xlu0 0
        %682 = vperm.xlu0 %681, %v664
        %v683 = vpop.permute.xlu0 %682
        %v685 = vmul.f32 %v668, %v536
        %v686 = vmul.f32 %v673, %v536
        %v687 = vmul.f32 %v678, %v536
        %v688 = vmul.f32 %v683, %v536
        %v689 = vadd.f32 %v657, %v685
        %v690 = vadd.f32 %v658, %v686
        %v691 = vadd.f32 %v659, %v687
        %v692 = vadd.f32 %v660, %v688
        %v693 = vmax.f32 %v542, %v689
        %v694 = vmax.f32 %v543, %v690
        %v695 = vmax.f32 %v544, %v691
        %v696 = vmax.f32 %v545, %v692
        %v698 = vlaneseq
        %v699 = vshrl.u32 %v698, 7
        %v700 = vsub.s32 0, %v699
        %v701 = vrot.slane %v171, %v700
        %v703 = vadd.f32 %v693, %v701
        %v704 = vadd.f32 %v694, %v701
        %v705 = vadd.f32 %v695, %v701
        %v706 = vadd.f32 %v696, %v701
        %v707 = vmax.f32 %v703, 0.0
        %v708 = vmax.f32 %v704, 0.0
        %v709 = vmax.f32 %v705, 0.0
        %v710 = vmax.f32 %v706, 0.0
        %vm711 = vcmask 261120
        %712 = vst.msk [vmem:[#allocation2] sm:$0xff] %vm711, %v707
        %713 = vst.msk [vmem:[#allocation2 + $0x8] sm:$0xff] %vm711, %v708
        %714 = vst.msk [vmem:[#allocation2 + $0x10] sm:$0xff] %vm711, %v709
        %vm715 = vcmask 257024
        %716 = vst.msk [vmem:[#allocation2 + $0x18] sm:$0xf] %vm715, %v710
        %v717 = vld [vmem:[#allocation2] ss:$2 sm:$0xff]
        %s718 = scalar_lea.vmem [#allocation2], 16
        %v719 = vld [vmem:[%s718] ss:$2 sm:$0x3f]
        %s720 = scalar_lea.vmem [#allocation2], 1
        %v721 = vld [vmem:[%s720] ss:$2 sm:$0xff]
        %s722 = scalar_lea.vmem [#allocation2], 17
        %v723 = vld [vmem:[%s722] ss:$2 sm:$0x3f]
        %v724 = vmax.f32 %v717, %v721
        %v725 = vmax.f32 %v719, %v723
        %s726 = smul.u32 %s173, 16
        %s727 = scalar_lea.vmem %s170, %s726
        %728 = vst.msk [vmem:[%s727] sm:$0xff] %vm711, %v724
        %vm729 = vcmask 259072
        %730 = vst.msk [vmem:[%s727 + $0x8] sm:$0x3f] %vm729, %v725
      $region37: #{conv_test_net_forward.3} parent=31 // loop_footer
        %s177 = sadd.s32 1, %s173
      $region38: #{conv_test_net_forward.3} parent=31 // loop_footer_branch
        %172 = sbr.rel target = $region34
      $region39: #{conv_test_net_forward.3} parent=31 // loop_exit
        _
      %p731 = scmp.lt.s32.totalorder %s14, 1
      %s732 = scalar_select %p731, %s14, 1
      %s733 = smul.addr %s732, 28
      %s734 = smul.addr %s733, 8
      %s735 = scalar_lea.vmem %s3, %s734
      // Predicated region
      $region40: #{conv_test_net_forward.3} parent=31 // pred_check
        %p736 = pneg %p100
      $region41: #{conv_test_net_forward.3} parent=31 // pred_check_branch
        %738 = sbr.rel (%p736) target = $region43
      $region42: #{conv_test_net_forward.3} parent=31 // pred_region
        _
      $region43: #{conv_test_net_forward.3} parent=31 // pred_fallthru
        _
    $region32: #{conv_test_net_forward.3} parent=5 // pred_fallthru
      _
    %p739 = scmp.le.s32.totalorder 2, %s9
    // Predicated region
    $region44: #{conv_test_net_forward.3} parent=5 // pred_check
      %p740 = pneg %p739
    $region45: #{conv_test_net_forward.3} parent=5 // pred_check_branch
      %742 = sbr.rel (%p740) target = $region47
    $region46: #{conv_test_net_forward.3} parent=5 // pred_region
      %s743 = ssub.s32 %s9, 2
      // Predicated region
      $region48: #{conv_test_net_forward.3} parent=46 // pred_check
        %p744 = pneg %p106
      $region49: #{conv_test_net_forward.3} parent=46 // pred_check_branch
        %746 = sbr.rel (%p744) target = $region51
      $region50: #{conv_test_net_forward.3} parent=46 // pred_region
        %p747 = scmp.lt.s32.totalorder %s15, 1
        %s748 = scalar_select %p747, %s15, 1
        %s749 = smul.addr %s748, 28
        %s750 = smul.addr %s749, 8
        %s751 = scalar_lea.vmem %s3, %s750
      $region51: #{conv_test_net_forward.3} parent=46 // pred_fallthru
        _
    $region47: #{conv_test_net_forward.3} parent=5 // pred_fallthru
      _
  $region6: #{conv_test_net_forward.3} parent=0 // loop_footer
    %s13 = sadd.s32 1, %s9
  $region7: #{conv_test_net_forward.3} parent=0 // loop_footer_branch
    %8 = sbr.rel target = $region3
  $region8: #{conv_test_net_forward.3} parent=0 // loop_exit
    _

// kernel: conv_test_net_forward.4
$region0: #{conv_test_net_forward.4}
  #allocation0 [shape = 'u32[]', space=smem, size = 0x4, offset = 0x4, fixed_abs, tag = 'smem constant byte address 0x4 - core index']
  #allocation1 [shape = 'u32[144,128]{1,0:T(1,128)}', space=vmem, size = 0x12000, scoped, tag = 'internal scratch']
  #allocation2 [shape = 'f32[14,64]{1,0:T(8,128)}', space=vmem, size = 0x2000, scoped, tag = 'scratch operand']
  %s0 = inlined_call_operand.vmem [shape: f32[2,16,16,32], index: 0, kind: input, shape index: {}]
  %s1 = inlined_call_operand.vmem [shape: f32[3,3,32,64], index: 1, kind: input, shape index: {}]
  %s2 = inlined_call_operand.vmem [shape: f32[1,64], index: 2, kind: input, shape index: {}]
  %s3 = inlined_call_operand.vmem [shape: f32[2,7,7,64], index: 3, kind: output, shape index: {}]
  %s4 = sld [smem:[#allocation0]]
  $region52: #{conv_test_net_forward.4} parent=0
    _
  %s6 = ssub.s32 1, %s4
  %s7 = scalar_select 0, %s6, %s4
  loop: start=0, step=1, limit=4
  $region2: #{conv_test_net_forward.4} parent=0 // loop_pre_header
    _
  $region3: #{conv_test_net_forward.4} parent=0 // loop_header
    %s9 = sphi 0, %s13
    %p10 = scmp.ge.s32.totalorder %s9, 4
    %s19 = sphi 0, %s21
    %s22 = sphi 0, %s19
    %s23 = sphi 0, %s22
    %s39 = sphi 0, %s23
    %s43 = sphi 0, %s43
    %s45 = sphi 0, %s43
    %s46 = sphi 0, %s45
    %s60 = sphi 0, %s46
    %s64 = sphi 0, %s64
    %s66 = sphi 0, %s64
    %s67 = sphi 0, %s66
    %s81 = sphi 0, %s67
    %s87 = sphi 0, %s89
    %s90 = sphi 0, %s87
    %s91 = sphi 0, %s90
    %s107 = sphi 0, %s91
  $region4: #{conv_test_net_forward.4} parent=0 // loop_header_branch
    %12 = sbr.rel (%p10) target = $region8
  $region5: #{conv_test_net_forward.4} parent=0 // loop_body
    %s14 = ssub.s32 %s9, 1
    %s15 = ssub.s32 %s9, 2
    %s16 = sadd.s32 %s9, 1
    %s17 = ssub.s32 %s9, %s16
    %p18 = scmp.eq.s32.totalorder %s17, 0
    %s20 = sadd.s32 %s19, 1
    %s21 = scalar_select %p18, %s19, %s20
    %p24 = pneg %p18
    %p25 = scmp.eq.s32.totalorder %s9, 1
    %p26 = por %p24, %p25
    %p27 = scmp.ne.s32.totalorder %s19, %s22
    %p28 = scmp.eq.s32.totalorder %s9, 0
    %p29 = por %p27, %p28
    %p30 = scmp.ne.s32.totalorder %s19, %s22
    %p31 = scmp.eq.s32.totalorder %s14, 1
    %p32 = por %p30, %p31
    %p33 = scmp.ne.s32.totalorder %s22, %s23
    %p34 = scmp.eq.s32.totalorder %s14, 0
    %p35 = por %p33, %p34
    %p36 = scmp.ne.s32.totalorder %s22, %s23
    %p37 = scmp.eq.s32.totalorder %s15, 1
    %p38 = por %p36, %p37
    %p40 = scmp.ne.s32.totalorder %s23, %s39
    %p41 = scmp.eq.s32.totalorder %s15, 0
    %p42 = por %p40, %p41
    %s44 = sadd.s32 %s43, 1
    %p47 = scmp.eq.s32.totalorder %s9, 1
    %p48 = scmp.ne.s32.totalorder %s43, %s45
    %p49 = scmp.eq.s32.totalorder %s9, 0
    %p50 = por %p48, %p49
    %p51 = scmp.ne.s32.totalorder %s43, %s45
    %p52 = scmp.eq.s32.totalorder %s14, 1
    %p53 = por %p51, %p52
    %p54 = scmp.ne.s32.totalorder %s45, %s46
    %p55 = scmp.eq.s32.totalorder %s14, 0
    %p56 = por %p54, %p55
    %p57 = scmp.ne.s32.totalorder %s45, %s46
    %p58 = scmp.eq.s32.totalorder %s15, 1
    %p59 = por %p57, %p58
    %p61 = scmp.ne.s32.totalorder %s46, %s60
    %p62 = scmp.eq.s32.totalorder %s15, 0
    %p63 = por %p61, %p62
    %s65 = sadd.s32 %s64, 1
    %p68 = scmp.eq.s32.totalorder %s9, 1
    %p69 = scmp.ne.s32.totalorder %s64, %s66
    %p70 = scmp.eq.s32.totalorder %s9, 0
    %p71 = por %p69, %p70
    %p72 = scmp.ne.s32.totalorder %s64, %s66
    %p73 = scmp.eq.s32.totalorder %s14, 1
    %p74 = por %p72, %p73
    %p75 = scmp.ne.s32.totalorder %s66, %s67
    %p76 = scmp.eq.s32.totalorder %s14, 0
    %p77 = por %p75, %p76
    %p78 = scmp.ne.s32.totalorder %s66, %s67
    %p79 = scmp.eq.s32.totalorder %s15, 1
    %p80 = por %p78, %p79
    %p82 = scmp.ne.s32.totalorder %s67, %s81
    %p83 = scmp.eq.s32.totalorder %s15, 0
    %p84 = por %p82, %p83
    %s85 = ssub.s32 %s9, %s16
    %p86 = scmp.eq.s32.totalorder %s85, 0
    %s88 = sadd.s32 %s87, 1
    %s89 = scalar_select %p86, %s87, %s88
    %p92 = pneg %p86
    %p93 = scmp.eq.s32.totalorder %s9, 1
    %p94 = por %p92, %p93
    %p95 = scmp.ne.s32.totalorder %s87, %s90
    %p96 = scmp.eq.s32.totalorder %s9, 0
    %p97 = por %p95, %p96
    %p98 = scmp.ne.s32.totalorder %s87, %s90
    %p99 = scmp.eq.s32.totalorder %s14, 1
    %p100 = por %p98, %p99
    %p101 = scmp.ne.s32.totalorder %s90, %s91
    %p102 = scmp.eq.s32.totalorder %s14, 0
    %p103 = por %p101, %p102
    %p104 = scmp.ne.s32.totalorder %s90, %s91
    %p105 = scmp.eq.s32.totalorder %s15, 1
    %p106 = por %p104, %p105
    %p108 = scmp.ne.s32.totalorder %s91, %s107
    %p109 = scmp.eq.s32.totalorder %s15, 0
    %p110 = por %p108, %p109
    %p111 = scmp.le.s32.totalorder 1, %s9
    %p112 = scmp.lt.s32.totalorder %s9, 3
    %p113 = pnand %p111, %p112
    %p114 = pneg %p113
    // Predicated region
    $region9: #{conv_test_net_forward.4} parent=5 // pred_check
      _
    $region10: #{conv_test_net_forward.4} parent=5 // pred_check_branch
      %116 = sbr.rel (%p113) target = $region12
    $region11: #{conv_test_net_forward.4} parent=5 // pred_region
      %s117 = ssub.s32 %s9, 1
      // Predicated region
      $region13: #{conv_test_net_forward.4} parent=11 // pred_check
        %p118 = pneg %p56
      $region14: #{conv_test_net_forward.4} parent=11 // pred_check_branch
        %120 = sbr.rel (%p118) target = $region16
      $region15: #{conv_test_net_forward.4} parent=11 // pred_region
        _
      $region16: #{conv_test_net_forward.4} parent=11 // pred_fallthru
        _
      // Predicated region
      $region17: #{conv_test_net_forward.4} parent=11 // pred_check
        %p121 = pneg %p77
      $region18: #{conv_test_net_forward.4} parent=11 // pred_check_branch
        %123 = sbr.rel (%p121) target = $region20
      $region19: #{conv_test_net_forward.4} parent=11 // pred_region
        _
      $region20: #{conv_test_net_forward.4} parent=11 // pred_fallthru
        _
    $region12: #{conv_test_net_forward.4} parent=5 // pred_fallthru
      _
    %p124 = scmp.lt.s32.totalorder %s9, 2
    // Predicated region
    $region21: #{conv_test_net_forward.4} parent=5 // pred_check
      %p125 = pneg %p124
    $region22: #{conv_test_net_forward.4} parent=5 // pred_check_branch
      %127 = sbr.rel (%p125) target = $region24
    $region23: #{conv_test_net_forward.4} parent=5 // pred_region
      // Predicated region
      $region25: #{conv_test_net_forward.4} parent=23 // pred_check
        %p128 = pneg %p29
      $region26: #{conv_test_net_forward.4} parent=23 // pred_check_branch
        %130 = sbr.rel (%p128) target = $region28
      $region27: #{conv_test_net_forward.4} parent=23 // pred_region
        %p131 = scmp.lt.s32.totalorder %s9, 1
        %s132 = scalar_select %p131, %s9, 1
        %s133 = smul.addr %s132, 32
        %s134 = smul.addr %s133, 8
        %s135 = scalar_lea.vmem %s0, %s134
      $region28: #{conv_test_net_forward.4} parent=23 // pred_fallthru
        _
    $region24: #{conv_test_net_forward.4} parent=5 // pred_fallthru
      _
    %p136 = scmp.le.s32.totalorder 1, %s9
    %p137 = scmp.lt.s32.totalorder %s9, 3
    %p138 = pnand %p136, %p137
    %p139 = pneg %p138
    // Predicated region
    $region29: #{conv_test_net_forward.4} parent=5 // pred_check
      _
    $region30: #{conv_test_net_forward.4} parent=5 // pred_check_branch
      %141 = sbr.rel (%p138) target = $region32
    $region31: #{conv_test_net_forward.4} parent=5 // pred_region
      %s142 = ssub.s32 %s9, 1
      %p143 = scmp.lt.s32.totalorder %s14, 1
      %s144 = scalar_select %p143, %s14, 1
      %s145 = smul.addr %s144, 32
      %s146 = smul.addr %s145, 8
      %s147 = scalar_lea.vmem %s0, %s146
      %p148 = pneg %p35
      %p149 = pneg %p32
      %p150 = pneg %p56
      %p151 = pneg %p53
      %p152 = pneg %p77
      %p153 = pneg %p74
      %p154 = pneg %p103
      %p155 = pneg %p100
      %p156 = scmp.lt.s32.totalorder %s14, 1
      %s157 = scalar_select %p156, %s14, 1
      %s158 = smul.addr %s157, 7
      %s159 = smul.addr %s158, 8
      %s160 = scalar_lea.vmem %s3, %s159
      %p161 = scmp.lt.s32.totalorder %s14, 1
      %s162 = scalar_select %p161, %s14, 1
      %s163 = smul.addr %s162, 32
      %s164 = smul.addr %s163, 8
      %s165 = scalar_lea.vmem %s0, %s164
      %p166 = scmp.lt.s32.totalorder %s14, 1
      %s167 = scalar_select %p166, %s14, 1
      %s168 = smul.addr %s167, 7
      %s169 = smul.addr %s168, 8
      %s170 = scalar_lea.vmem %s3, %s169
      %v171 = vld [vmem:[%s2] sm:$0x1]
      loop: start=0, step=1, limit=7
      $region33: #{conv_test_net_forward.4} parent=31 // loop_pre_header
        _
      $region34: #{conv_test_net_forward.4} parent=31 // loop_header
        %s173 = sphi 0, %s177
        %p174 = scmp.ge.s32.totalorder %s173, 7
      $region35: #{conv_test_net_forward.4} parent=31 // loop_header_branch
        %176 = sbr.rel (%p174) target = $region39
      $region36: #{conv_test_net_forward.4} parent=31 // loop_body
        %s178 = smul.u32 %s173, 2
        %s179 = smul.u32 %s178, 16
        %s180 = scalar_lea.vmem %s165, %s179
        %v181 = vld [vmem:[%s180] sm:$0xff]
        %v182 = vld [vmem:[%s180 + $0x8] sm:$0x3f]
        %v183 = vld [vmem:[%s1] sm:$0xff]
        %v184 = vld [vmem:[%s1 + $0x8] sm:$0xff]
        %v185 = vld [vmem:[%s1 + $0x10] sm:$0xff]
        %v186 = vld [vmem:[%s1 + $0x18] sm:$0xff]
        %v187 = vld [vmem:[%s180 + $0x1] sm:$0xff]
        %v188 = vld [vmem:[%s180 + $0x9] sm:$0x3f]
        %s189 = scalar_lea.vmem %s1, 32
        %v190 = vld [vmem:[%s189] sm:$0xff]
        %v191 = vld [vmem:[%s189 + $0x8] sm:$0xff]
        %v192 = vld [vmem:[%s189 + $0x10] sm:$0xff]
        %v193 = vld [vmem:[%s189 + $0x18] sm:$0xff]
        %vm194 = vcmask 261120
        %v196 = vsel %vm194, %v187, 0
        %v199 = vsel %vm194, %v188, 0
        %201 = vmatprep.subr.mxu0 0.0
        %202 = vmatpush1.msra.mxu0 0.0
        %203 = vmatprep.subr.mxu0 0.0
        %204 = vmatpush1.msra.mxu0 0.0
        %205 = vmatprep.subr.mxu0 0.0
        %206 = vmatpush1.msra.mxu0 0.0
        %207 = vmatprep.subr.mxu0 0.0
        %208 = vmatpush1.msra.mxu0 0.0
        %209 = vmatprep.subr.mxu0 0.0
        %210 = vmatpush1.msra.mxu0 0.0
        %211 = vmatprep.subr.mxu0 0.0
        %212 = vmatpush1.msra.mxu0 0.0
        %213 = vmatprep.subr.mxu0 0.0
        %214 = vmatpush1.msra.mxu0 0.0
        %215 = vmatprep.subr.mxu0 0.0
        %216 = vmatpush1.msra.mxu0 0.0
        %217 = vmatprep.subr.mxu0 0.0
        %218 = vmatpush1.msra.mxu0 0.0
        %219 = vmatprep.subr.mxu0 0.0
        %220 = vmatpush1.msra.mxu0 0.0
        %221 = vmatprep.subr.mxu0 0.0
        %222 = vmatpush1.msra.mxu0 0.0
        %223 = vmatprep.subr.mxu0 0.0
        %224 = vmatpush1.msra.mxu0 0.0
        %225 = vmatprep.subr.mxu0 0.0
        %226 = vmatpush1.msra.mxu0 %v193
        %227 = vmatprep.subr.mxu0 0.0
        %228 = vmatpush1.msra.mxu0 %v192
        %229 = vmatprep.subr.mxu0 0.0
        %230 = vmatpush1.msra.mxu0 %v191
        %231 = vmatprep.subr.mxu0 0.0
        %232 = vmatpush1.msra.mxu0 %v190
        %233 = vmatprep.subr.mxu0 0.0
        %234 = vmatpush2.msra.mxu0 0.0
        %235 = vmatprep.subr.mxu0 0.0
        %236 = vmatpush2.msra.mxu0 0.0
        %237 = vmatprep.subr.mxu0 0.0
        %238 = vmatpush2.msra.mxu0 0.0
        %239 = vmatprep.subr.mxu0 0.0
        %240 = vmatpush2.msra.mxu0 0.0
        %241 = vmatprep.subr.mxu0 0.0
        %242 = vmatpush2.msra.mxu0 0.0
        %243 = vmatprep.subr.mxu0 0.0
        %244 = vmatpush2.msra.mxu0 0.0
        %245 = vmatprep.subr.mxu0 0.0
        %246 = vmatpush2.msra.mxu0 0.0
        %247 = vmatprep.subr.mxu0 0.0
        %248 = vmatpush2.msra.mxu0 0.0
        %249 = vmatprep.subr.mxu0 0.0
        %250 = vmatpush2.msra.mxu0 0.0
        %251 = vmatprep.subr.mxu0 0.0
        %252 = vmatpush2.msra.mxu0 0.0
        %253 = vmatprep.subr.mxu0 0.0
        %254 = vmatpush2.msra.mxu0 0.0
        %255 = vmatprep.subr.mxu0 0.0
        %256 = vmatpush2.msra.mxu0 0.0
        %257 = vmatprep.subr.mxu0 0.0
        %258 = vmatpush2.msra.mxu0 0.0
        %259 = vmatprep.subr.mxu0 0.0
        %260 = vmatpush2.msra.mxu0 0.0
        %261 = vmatprep.subr.mxu0 0.0
        %262 = vmatpush2.msra.mxu0 0.0
        %263 = vmatprep.subr.mxu0 0.0
        %264 = vmatpush2.msra.mxu0 0.0
        %265 = vmatprep.mubr.f32.mxu0 0.0
        %266 = vmatmul.mubr.f32.gmra.mxu0 %v196
        %v267 = vpop.f32.mrf.mxu0
        %v268 = vadd.f32 0.0, %v267
        %v269 = vpop.f32.mrf.mxu0
        %270 = vmatprep.mubr.f32.mxu0 0.0
        %271 = vmatmul.mubr.f32.gmra.mxu0 %v199
        %v272 = vpop.f32.mrf.mxu0
        %v273 = vadd.f32 0.0, %v272
        %v274 = vpop.f32.mrf.mxu0
        %275 = vdwg.mxu0
        %v277 = vsel %vm194, %v181, 0
        %v280 = vsel %vm194, %v182, 0
        %282 = vmatprep.subr.mxu0 0.0
        %283 = vmatpush1.msra.mxu0 0.0
        %284 = vmatprep.subr.mxu0 0.0
        %285 = vmatpush1.msra.mxu0 0.0
        %286 = vmatprep.subr.mxu0 0.0
        %287 = vmatpush1.msra.mxu0 0.0
        %288 = vmatprep.subr.mxu0 0.0
        %289 = vmatpush1.msra.mxu0 0.0
        %290 = vmatprep.subr.mxu0 0.0
        %291 = vmatpush1.msra.mxu0 0.0
        %292 = vmatprep.subr.mxu0 0.0
        %293 = vmatpush1.msra.mxu0 0.0
        %294 = vmatprep.subr.mxu0 0.0
        %295 = vmatpush1.msra.mxu0 0.0
        %296 = vmatprep.subr.mxu0 0.0
        %297 = vmatpush1.msra.mxu0 0.0
        %298 = vmatprep.subr.mxu0 0.0
        %299 = vmatpush1.msra.mxu0 0.0
        %300 = vmatprep.subr.mxu0 0.0
        %301 = vmatpush1.msra.mxu0 0.0
        %302 = vmatprep.subr.mxu0 0.0
        %303 = vmatpush1.msra.mxu0 0.0
        %304 = vmatprep.subr.mxu0 0.0
        %305 = vmatpush1.msra.mxu0 0.0
        %306 = vmatprep.subr.mxu0 0.0
        %307 = vmatpush1.msra.mxu0 %v186
        %308 = vmatprep.subr.mxu0 0.0
        %309 = vmatpush1.msra.mxu0 %v185
        %310 = vmatprep.subr.mxu0 0.0
        %311 = vmatpush1.msra.mxu0 %v184
        %312 = vmatprep.subr.mxu0 0.0
        %313 = vmatpush1.msra.mxu0 %v183
        %314 = vmatprep.subr.mxu0 0.0
        %315 = vmatpush2.msra.mxu0 0.0
        %316 = vmatprep.subr.mxu0 0.0
        %317 = vmatpush2.msra.mxu0 0.0
        %318 = vmatprep.subr.mxu0 0.0
        %319 = vmatpush2.msra.mxu0 0.0
        %320 = vmatprep.subr.mxu0 0.0
        %321 = vmatpush2.msra.mxu0 0.0
        %322 = vmatprep.subr.mxu0 0.0
        %323 = vmatpush2.msra.mxu0 0.0
        %324 = vmatprep.subr.mxu0 0.0
        %325 = vmatpush2.msra.mxu0 0.0
        %326 = vmatprep.subr.mxu0 0.0
        %327 = vmatpush2.msra.mxu0 0.0
        %328 = vmatprep.subr.mxu0 0.0
        %329 = vmatpush2.msra.mxu0 0.0
        %330 = vmatprep.subr.mxu0 0.0
        %331 = vmatpush2.msra.mxu0 0.0
        %332 = vmatprep.subr.mxu0 0.0
        %333 = vmatpush2.msra.mxu0 0.0
        %334 = vmatprep.subr.mxu0 0.0
        %335 = vmatpush2.msra.mxu0 0.0
        %336 = vmatprep.subr.mxu0 0.0
        %337 = vmatpush2.msra.mxu0 0.0
        %338 = vmatprep.subr.mxu0 0.0
        %339 = vmatpush2.msra.mxu0 0.0
        %340 = vmatprep.subr.mxu0 0.0
        %341 = vmatpush2.msra.mxu0 0.0
        %342 = vmatprep.subr.mxu0 0.0
        %343 = vmatpush2.msra.mxu0 0.0
        %344 = vmatprep.subr.mxu0 0.0
        %345 = vmatpush2.msra.mxu0 0.0
        %346 = vmatprep.mubr.f32.mxu0 0.0
        %347 = vmatmul.mubr.f32.gmra.mxu0 %v277
        %v348 = vpop.f32.mrf.mxu0
        %v349 = vadd.f32 %v268, %v348
        %v350 = vpop.f32.mrf.mxu0
        %351 = vmatprep.mubr.f32.mxu0 0.0
        %352 = vmatmul.mubr.f32.gmra.mxu0 %v280
        %v353 = vpop.f32.mrf.mxu0
        %v354 = vadd.f32 %v273, %v353
        %v355 = vpop.f32.mrf.mxu0
        %356 = vdwg.mxu0
        %v357 = vld [vmem:[%s180 + $0x2] sm:$0xff]
        %v358 = vld [vmem:[%s180 + $0xa] sm:$0x3f]
        %s359 = scalar_lea.vmem %s1, 64
        %v360 = vld [vmem:[%s359] sm:$0xff]
        %v361 = vld [vmem:[%s359 + $0x8] sm:$0xff]
        %v362 = vld [vmem:[%s359 + $0x10] sm:$0xff]
        %v363 = vld [vmem:[%s359 + $0x18] sm:$0xff]
        %v365 = vsel %vm194, %v357, 0
        %v368 = vsel %vm194, %v358, 0
        %370 = vmatprep.subr.mxu0 0.0
        %371 = vmatpush1.msra.mxu0 0.0
        %372 = vmatprep.subr.mxu0 0.0
        %373 = vmatpush1.msra.mxu0 0.0
        %374 = vmatprep.subr.mxu0 0.0
        %375 = vmatpush1.msra.mxu0 0.0
        %376 = vmatprep.subr.mxu0 0.0
        %377 = vmatpush1.msra.mxu0 0.0
        %378 = vmatprep.subr.mxu0 0.0
        %379 = vmatpush1.msra.mxu0 0.0
        %380 = vmatprep.subr.mxu0 0.0
        %381 = vmatpush1.msra.mxu0 0.0
        %382 = vmatprep.subr.mxu0 0.0
        %383 = vmatpush1.msra.mxu0 0.0
        %384 = vmatprep.subr.mxu0 0.0
        %385 = vmatpush1.msra.mxu0 0.0
        %386 = vmatprep.subr.mxu0 0.0
        %387 = vmatpush1.msra.mxu0 0.0
        %388 = vmatprep.subr.mxu0 0.0
        %389 = vmatpush1.msra.mxu0 0.0
        %390 = vmatprep.subr.mxu0 0.0
        %391 = vmatpush1.msra.mxu0 0.0
        %392 = vmatprep.subr.mxu0 0.0
        %393 = vmatpush1.msra.mxu0 0.0
        %394 = vmatprep.subr.mxu0 0.0
        %395 = vmatpush1.msra.mxu0 %v363
        %396 = vmatprep.subr.mxu0 0.0
        %397 = vmatpush1.msra.mxu0 %v362
        %398 = vmatprep.subr.mxu0 0.0
        %399 = vmatpush1.msra.mxu0 %v361
        %400 = vmatprep.subr.mxu0 0.0
        %401 = vmatpush1.msra.mxu0 %v360
        %402 = vmatprep.subr.mxu0 0.0
        %403 = vmatpush2.msra.mxu0 0.0
        %404 = vmatprep.subr.mxu0 0.0
        %405 = vmatpush2.msra.mxu0 0.0
        %406 = vmatprep.subr.mxu0 0.0
        %407 = vmatpush2.msra.mxu0 0.0
        %408 = vmatprep.subr.mxu0 0.0
        %409 = vmatpush2.msra.mxu0 0.0
        %410 = vmatprep.subr.mxu0 0.0
        %411 = vmatpush2.msra.mxu0 0.0
        %412 = vmatprep.subr.mxu0 0.0
        %413 = vmatpush2.msra.mxu0 0.0
        %414 = vmatprep.subr.mxu0 0.0
        %415 = vmatpush2.msra.mxu0 0.0
        %416 = vmatprep.subr.mxu0 0.0
        %417 = vmatpush2.msra.mxu0 0.0
        %418 = vmatprep.subr.mxu0 0.0
        %419 = vmatpush2.msra.mxu0 0.0
        %420 = vmatprep.subr.mxu0 0.0
        %421 = vmatpush2.msra.mxu0 0.0
        %422 = vmatprep.subr.mxu0 0.0
        %423 = vmatpush2.msra.mxu0 0.0
        %424 = vmatprep.subr.mxu0 0.0
        %425 = vmatpush2.msra.mxu0 0.0
        %426 = vmatprep.subr.mxu0 0.0
        %427 = vmatpush2.msra.mxu0 0.0
        %428 = vmatprep.subr.mxu0 0.0
        %429 = vmatpush2.msra.mxu0 0.0
        %430 = vmatprep.subr.mxu0 0.0
        %431 = vmatpush2.msra.mxu0 0.0
        %432 = vmatprep.subr.mxu0 0.0
        %433 = vmatpush2.msra.mxu0 0.0
        %434 = vmatprep.mubr.f32.mxu0 0.0
        %435 = vmatmul.mubr.f32.gmra.mxu0 %v365
        %v436 = vpop.f32.mrf.mxu0
        %v437 = vadd.f32 0.0, %v436
        %v438 = vpop.f32.mrf.mxu0
        %439 = vmatprep.mubr.f32.mxu0 0.0
        %440 = vmatmul.mubr.f32.gmra.mxu0 %v368
        %v441 = vpop.f32.mrf.mxu0
        %v442 = vadd.f32 0.0, %v441
        %v443 = vpop.f32.mrf.mxu0
        %444 = vdwg.mxu0
        %v445 = vadd.f32 %v349, %v437
        %v446 = vadd.f32 %v354, %v442
        %s447 = sadd.s32 %s178, 1
        %s448 = smul.u32 %s447, 16
        %s449 = scalar_lea.vmem %s165, %s448
        %v450 = vld [vmem:[%s449] sm:$0xff]
        %v451 = vld [vmem:[%s449 + $0x8] sm:$0x3f]
        %s452 = scalar_lea.vmem %s1, 96
        %v453 = vld [vmem:[%s452] sm:$0xff]
        %v454 = vld [vmem:[%s452 + $0x8] sm:$0xff]
        %v455 = vld [vmem:[%s452 + $0x10] sm:$0xff]
        %v456 = vld [vmem:[%s452 + $0x18] sm:$0xff]
        %v458 = vsel %vm194, %v450, 0
        %v461 = vsel %vm194, %v451, 0
        %463 = vmatprep.subr.mxu0 0.0
        %464 = vmatpush1.msra.mxu0 0.0
        %465 = vmatprep.subr.mxu0 0.0
        %466 = vmatpush1.msra.mxu0 0.0
        %467 = vmatprep.subr.mxu0 0.0
        %468 = vmatpush1.msra.mxu0 0.0
        %469 = vmatprep.subr.mxu0 0.0
        %470 = vmatpush1.msra.mxu0 0.0
        %471 = vmatprep.subr.mxu0 0.0
        %472 = vmatpush1.msra.mxu0 0.0
        %473 = vmatprep.subr.mxu0 0.0
        %474 = vmatpush1.msra.mxu0 0.0
        %475 = vmatprep.subr.mxu0 0.0
        %476 = vmatpush1.msra.mxu0 0.0
        %477 = vmatprep.subr.mxu0 0.0
        %478 = vmatpush1.msra.mxu0 0.0
        %479 = vmatprep.subr.mxu0 0.0
        %480 = vmatpush1.msra.mxu0 0.0
        %481 = vmatprep.subr.mxu0 0.0
        %482 = vmatpush1.msra.mxu0 0.0
        %483 = vmatprep.subr.mxu0 0.0
        %484 = vmatpush1.msra.mxu0 0.0
        %485 = vmatprep.subr.mxu0 0.0
        %486 = vmatpush1.msra.mxu0 0.0
        %487 = vmatprep.subr.mxu0 0.0
        %488 = vmatpush1.msra.mxu0 %v456
        %489 = vmatprep.subr.mxu0 0.0
        %490 = vmatpush1.msra.mxu0 %v455
        %491 = vmatprep.subr.mxu0 0.0
        %492 = vmatpush1.msra.mxu0 %v454
        %493 = vmatprep.subr.mxu0 0.0
        %494 = vmatpush1.msra.mxu0 %v453
        %495 = vmatprep.subr.mxu0 0.0
        %496 = vmatpush2.msra.mxu0 0.0
        %497 = vmatprep.subr.mxu0 0.0
        %498 = vmatpush2.msra.mxu0 0.0
        %499 = vmatprep.subr.mxu0 0.0
        %500 = vmatpush2.msra.mxu0 0.0
        %501 = vmatprep.subr.mxu0 0.0
        %502 = vmatpush2.msra.mxu0 0.0
        %503 = vmatprep.subr.mxu0 0.0
        %504 = vmatpush2.msra.mxu0 0.0
        %505 = vmatprep.subr.mxu0 0.0
        %506 = vmatpush2.msra.mxu0 0.0
        %507 = vmatprep.subr.mxu0 0.0
        %508 = vmatpush2.msra.mxu0 0.0
        %509 = vmatprep.subr.mxu0 0.0
        %510 = vmatpush2.msra.mxu0 0.0
        %511 = vmatprep.subr.mxu0 0.0
        %512 = vmatpush2.msra.mxu0 0.0
        %513 = vmatprep.subr.mxu0 0.0
        %514 = vmatpush2.msra.mxu0 0.0
        %515 = vmatprep.subr.mxu0 0.0
        %516 = vmatpush2.msra.mxu0 0.0
        %517 = vmatprep.subr.mxu0 0.0
        %518 = vmatpush2.msra.mxu0 0.0
        %519 = vmatprep.subr.mxu0 0.0
        %520 = vmatpush2.msra.mxu0 0.0
        %521 = vmatprep.subr.mxu0 0.0
        %522 = vmatpush2.msra.mxu0 0.0
        %523 = vmatprep.subr.mxu0 0.0
        %524 = vmatpush2.msra.mxu0 0.0
        %525 = vmatprep.subr.mxu0 0.0
        %526 = vmatpush2.msra.mxu0 0.0
        %527 = vmatprep.mubr.f32.mxu0 0.0
        %528 = vmatmul.mubr.f32.gmra.mxu0 %v458
        %v529 = vpop.f32.mrf.mxu0
        %v530 = vadd.f32 0.0, %v529
        %v531 = vpop.f32.mrf.mxu0
        %532 = vmatprep.mubr.f32.mxu0 0.0
        %533 = vmatmul.mubr.f32.gmra.mxu0 %v461
        %v534 = vpop.f32.mrf.mxu0
        %v535 = vadd.f32 0.0, %v534
        %v536 = vpop.f32.mrf.mxu0
        %537 = vdwg.mxu0
        %v538 = vadd.f32 %v445, %v530
        %v539 = vadd.f32 %v446, %v535
        %v540 = vld [vmem:[%s449 + $0x1] sm:$0xff]
        %v541 = vld [vmem:[%s449 + $0x9] sm:$0x3f]
        %s542 = scalar_lea.vmem %s1, 128
        %v543 = vld [vmem:[%s542] sm:$0xff]
        %v544 = vld [vmem:[%s542 + $0x8] sm:$0xff]
        %v545 = vld [vmem:[%s542 + $0x10] sm:$0xff]
        %v546 = vld [vmem:[%s542 + $0x18] sm:$0xff]
        %v548 = vsel %vm194, %v540, 0
        %v551 = vsel %vm194, %v541, 0
        %553 = vmatprep.subr.mxu0 0.0
        %554 = vmatpush1.msra.mxu0 0.0
        %555 = vmatprep.subr.mxu0 0.0
        %556 = vmatpush1.msra.mxu0 0.0
        %557 = vmatprep.subr.mxu0 0.0
        %558 = vmatpush1.msra.mxu0 0.0
        %559 = vmatprep.subr.mxu0 0.0
        %560 = vmatpush1.msra.mxu0 0.0
        %561 = vmatprep.subr.mxu0 0.0
        %562 = vmatpush1.msra.mxu0 0.0
        %563 = vmatprep.subr.mxu0 0.0
        %564 = vmatpush1.msra.mxu0 0.0
        %565 = vmatprep.subr.mxu0 0.0
        %566 = vmatpush1.msra.mxu0 0.0
        %567 = vmatprep.subr.mxu0 0.0
        %568 = vmatpush1.msra.mxu0 0.0
        %569 = vmatprep.subr.mxu0 0.0
        %570 = vmatpush1.msra.mxu0 0.0
        %571 = vmatprep.subr.mxu0 0.0
        %572 = vmatpush1.msra.mxu0 0.0
        %573 = vmatprep.subr.mxu0 0.0
        %574 = vmatpush1.msra.mxu0 0.0
        %575 = vmatprep.subr.mxu0 0.0
        %576 = vmatpush1.msra.mxu0 0.0
        %577 = vmatprep.subr.mxu0 0.0
        %578 = vmatpush1.msra.mxu0 %v546
        %579 = vmatprep.subr.mxu0 0.0
        %580 = vmatpush1.msra.mxu0 %v545
        %581 = vmatprep.subr.mxu0 0.0
        %582 = vmatpush1.msra.mxu0 %v544
        %583 = vmatprep.subr.mxu0 0.0
        %584 = vmatpush1.msra.mxu0 %v543
        %585 = vmatprep.subr.mxu0 0.0
        %586 = vmatpush2.msra.mxu0 0.0
        %587 = vmatprep.subr.mxu0 0.0
        %588 = vmatpush2.msra.mxu0 0.0
        %589 = vmatprep.subr.mxu0 0.0
        %590 = vmatpush2.msra.mxu0 0.0
        %591 = vmatprep.subr.mxu0 0.0
        %592 = vmatpush2.msra.mxu0 0.0
        %593 = vmatprep.subr.mxu0 0.0
        %594 = vmatpush2.msra.mxu0 0.0
        %595 = vmatprep.subr.mxu0 0.0
        %596 = vmatpush2.msra.mxu0 0.0
        %597 = vmatprep.subr.mxu0 0.0
        %598 = vmatpush2.msra.mxu0 0.0
        %599 = vmatprep.subr.mxu0 0.0
        %600 = vmatpush2.msra.mxu0 0.0
        %601 = vmatprep.subr.mxu0 0.0
        %602 = vmatpush2.msra.mxu0 0.0
        %603 = vmatprep.subr.mxu0 0.0
        %604 = vmatpush2.msra.mxu0 0.0
        %605 = vmatprep.subr.mxu0 0.0
        %606 = vmatpush2.msra.mxu0 0.0
        %607 = vmatprep.subr.mxu0 0.0
        %608 = vmatpush2.msra.mxu0 0.0
        %609 = vmatprep.subr.mxu0 0.0
        %610 = vmatpush2.msra.mxu0 0.0
        %611 = vmatprep.subr.mxu0 0.0
        %612 = vmatpush2.msra.mxu0 0.0
        %613 = vmatprep.subr.mxu0 0.0
        %614 = vmatpush2.msra.mxu0 0.0
        %615 = vmatprep.subr.mxu0 0.0
        %616 = vmatpush2.msra.mxu0 0.0
        %617 = vmatprep.mubr.f32.mxu0 0.0
        %618 = vmatmul.mubr.f32.gmra.mxu0 %v548
        %v619 = vpop.f32.mrf.mxu0
        %v620 = vadd.f32 0.0, %v619
        %v621 = vpop.f32.mrf.mxu0
        %622 = vmatprep.mubr.f32.mxu0 0.0
        %623 = vmatmul.mubr.f32.gmra.mxu0 %v551
        %v624 = vpop.f32.mrf.mxu0
        %v625 = vadd.f32 0.0, %v624
        %v626 = vpop.f32.mrf.mxu0
        %627 = vdwg.mxu0
        %v628 = vadd.f32 %v538, %v620
        %v629 = vadd.f32 %v539, %v625
        %v630 = vld [vmem:[%s449 + $0x2] sm:$0xff]
        %v631 = vld [vmem:[%s449 + $0xa] sm:$0x3f]
        %s632 = scalar_lea.vmem %s1, 160
        %v633 = vld [vmem:[%s632] sm:$0xff]
        %v634 = vld [vmem:[%s632 + $0x8] sm:$0xff]
        %v635 = vld [vmem:[%s632 + $0x10] sm:$0xff]
        %v636 = vld [vmem:[%s632 + $0x18] sm:$0xff]
        %v638 = vsel %vm194, %v630, 0
        %v641 = vsel %vm194, %v631, 0
        %643 = vmatprep.subr.mxu0 0.0
        %644 = vmatpush1.msra.mxu0 0.0
        %645 = vmatprep.subr.mxu0 0.0
        %646 = vmatpush1.msra.mxu0 0.0
        %647 = vmatprep.subr.mxu0 0.0
        %648 = vmatpush1.msra.mxu0 0.0
        %649 = vmatprep.subr.mxu0 0.0
        %650 = vmatpush1.msra.mxu0 0.0
        %651 = vmatprep.subr.mxu0 0.0
        %652 = vmatpush1.msra.mxu0 0.0
        %653 = vmatprep.subr.mxu0 0.0
        %654 = vmatpush1.msra.mxu0 0.0
        %655 = vmatprep.subr.mxu0 0.0
        %656 = vmatpush1.msra.mxu0 0.0
        %657 = vmatprep.subr.mxu0 0.0
        %658 = vmatpush1.msra.mxu0 0.0
        %659 = vmatprep.subr.mxu0 0.0
        %660 = vmatpush1.msra.mxu0 0.0
        %661 = vmatprep.subr.mxu0 0.0
        %662 = vmatpush1.msra.mxu0 0.0
        %663 = vmatprep.subr.mxu0 0.0
        %664 = vmatpush1.msra.mxu0 0.0
        %665 = vmatprep.subr.mxu0 0.0
        %666 = vmatpush1.msra.mxu0 0.0
        %667 = vmatprep.subr.mxu0 0.0
        %668 = vmatpush1.msra.mxu0 %v636
        %669 = vmatprep.subr.mxu0 0.0
        %670 = vmatpush1.msra.mxu0 %v635
        %671 = vmatprep.subr.mxu0 0.0
        %672 = vmatpush1.msra.mxu0 %v634
        %673 = vmatprep.subr.mxu0 0.0
        %674 = vmatpush1.msra.mxu0 %v633
        %675 = vmatprep.subr.mxu0 0.0
        %676 = vmatpush2.msra.mxu0 0.0
        %677 = vmatprep.subr.mxu0 0.0
        %678 = vmatpush2.msra.mxu0 0.0
        %679 = vmatprep.subr.mxu0 0.0
        %680 = vmatpush2.msra.mxu0 0.0
        %681 = vmatprep.subr.mxu0 0.0
        %682 = vmatpush2.msra.mxu0 0.0
        %683 = vmatprep.subr.mxu0 0.0
        %684 = vmatpush2.msra.mxu0 0.0
        %685 = vmatprep.subr.mxu0 0.0
        %686 = vmatpush2.msra.mxu0 0.0
        %687 = vmatprep.subr.mxu0 0.0
        %688 = vmatpush2.msra.mxu0 0.0
        %689 = vmatprep.subr.mxu0 0.0
        %690 = vmatpush2.msra.mxu0 0.0
        %691 = vmatprep.subr.mxu0 0.0
        %692 = vmatpush2.msra.mxu0 0.0
        %693 = vmatprep.subr.mxu0 0.0
        %694 = vmatpush2.msra.mxu0 0.0
        %695 = vmatprep.subr.mxu0 0.0
        %696 = vmatpush2.msra.mxu0 0.0
        %697 = vmatprep.subr.mxu0 0.0
        %698 = vmatpush2.msra.mxu0 0.0
        %699 = vmatprep.subr.mxu0 0.0
        %700 = vmatpush2.msra.mxu0 0.0
        %701 = vmatprep.subr.mxu0 0.0
        %702 = vmatpush2.msra.mxu0 0.0
        %703 = vmatprep.subr.mxu0 0.0
        %704 = vmatpush2.msra.mxu0 0.0
        %705 = vmatprep.subr.mxu0 0.0
        %706 = vmatpush2.msra.mxu0 0.0
        %707 = vmatprep.mubr.f32.mxu0 0.0
        %708 = vmatmul.mubr.f32.gmra.mxu0 %v638
        %v709 = vpop.f32.mrf.mxu0
        %v710 = vadd.f32 0.0, %v709
        %v711 = vpop.f32.mrf.mxu0
        %712 = vmatprep.mubr.f32.mxu0 0.0
        %713 = vmatmul.mubr.f32.gmra.mxu0 %v641
        %v714 = vpop.f32.mrf.mxu0
        %v715 = vadd.f32 0.0, %v714
        %v716 = vpop.f32.mrf.mxu0
        %717 = vdwg.mxu0
        %v718 = vadd.f32 %v628, %v710
        %v719 = vadd.f32 %v629, %v715
        %s720 = sadd.s32 %s178, 2
        %s721 = smul.u32 %s720, 16
        %s722 = scalar_lea.vmem %s165, %s721
        %v723 = vld [vmem:[%s722] sm:$0xff]
        %v724 = vld [vmem:[%s722 + $0x8] sm:$0x3f]
        %s725 = scalar_lea.vmem %s1, 192
        %v726 = vld [vmem:[%s725] sm:$0xff]
        %v727 = vld [vmem:[%s725 + $0x8] sm:$0xff]
        %v728 = vld [vmem:[%s725 + $0x10] sm:$0xff]
        %v729 = vld [vmem:[%s725 + $0x18] sm:$0xff]
        %v731 = vsel %vm194, %v723, 0
        %v734 = vsel %vm194, %v724, 0
        %736 = vmatprep.subr.mxu0 0.0
        %737 = vmatpush1.msra.mxu0 0.0
        %738 = vmatprep.subr.mxu0 0.0
        %739 = vmatpush1.msra.mxu0 0.0
        %740 = vmatprep.subr.mxu0 0.0
        %741 = vmatpush1.msra.mxu0 0.0
        %742 = vmatprep.subr.mxu0 0.0
        %743 = vmatpush1.msra.mxu0 0.0
        %744 = vmatprep.subr.mxu0 0.0
        %745 = vmatpush1.msra.mxu0 0.0
        %746 = vmatprep.subr.mxu0 0.0
        %747 = vmatpush1.msra.mxu0 0.0
        %748 = vmatprep.subr.mxu0 0.0
        %749 = vmatpush1.msra.mxu0 0.0
        %750 = vmatprep.subr.mxu0 0.0
        %751 = vmatpush1.msra.mxu0 0.0
        %752 = vmatprep.subr.mxu0 0.0
        %753 = vmatpush1.msra.mxu0 0.0
        %754 = vmatprep.subr.mxu0 0.0
        %755 = vmatpush1.msra.mxu0 0.0
        %756 = vmatprep.subr.mxu0 0.0
        %757 = vmatpush1.msra.mxu0 0.0
        %758 = vmatprep.subr.mxu0 0.0
        %759 = vmatpush1.msra.mxu0 0.0
        %760 = vmatprep.subr.mxu0 0.0
        %761 = vmatpush1.msra.mxu0 %v729
        %762 = vmatprep.subr.mxu0 0.0
        %763 = vmatpush1.msra.mxu0 %v728
        %764 = vmatprep.subr.mxu0 0.0
        %765 = vmatpush1.msra.mxu0 %v727
        %766 = vmatprep.subr.mxu0 0.0
        %767 = vmatpush1.msra.mxu0 %v726
        %768 = vmatprep.subr.mxu0 0.0
        %769 = vmatpush2.msra.mxu0 0.0
        %770 = vmatprep.subr.mxu0 0.0
        %771 = vmatpush2.msra.mxu0 0.0
        %772 = vmatprep.subr.mxu0 0.0
        %773 = vmatpush2.msra.mxu0 0.0
        %774 = vmatprep.subr.mxu0 0.0
        %775 = vmatpush2.msra.mxu0 0.0
        %776 = vmatprep.subr.mxu0 0.0
        %777 = vmatpush2.msra.mxu0 0.0
        %778 = vmatprep.subr.mxu0 0.0
        %779 = vmatpush2.msra.mxu0 0.0
        %780 = vmatprep.subr.mxu0 0.0
        %781 = vmatpush2.msra.mxu0 0.0
        %782 = vmatprep.subr.mxu0 0.0
        %783 = vmatpush2.msra.mxu0 0.0
        %784 = vmatprep.subr.mxu0 0.0
        %785 = vmatpush2.msra.mxu0 0.0
        %786 = vmatprep.subr.mxu0 0.0
        %787 = vmatpush2.msra.mxu0 0.0
        %788 = vmatprep.subr.mxu0 0.0
        %789 = vmatpush2.msra.mxu0 0.0
        %790 = vmatprep.subr.mxu0 0.0
        %791 = vmatpush2.msra.mxu0 0.0
        %792 = vmatprep.subr.mxu0 0.0
        %793 = vmatpush2.msra.mxu0 0.0
        %794 = vmatprep.subr.mxu0 0.0
        %795 = vmatpush2.msra.mxu0 0.0
        %796 = vmatprep.subr.mxu0 0.0
        %797 = vmatpush2.msra.mxu0 0.0
        %798 = vmatprep.subr.mxu0 0.0
        %799 = vmatpush2.msra.mxu0 0.0
        %800 = vmatprep.mubr.f32.mxu0 0.0
        %801 = vmatmul.mubr.f32.gmra.mxu0 %v731
        %v802 = vpop.f32.mrf.mxu0
        %v803 = vadd.f32 0.0, %v802
        %v804 = vpop.f32.mrf.mxu0
        %805 = vmatprep.mubr.f32.mxu0 0.0
        %806 = vmatmul.mubr.f32.gmra.mxu0 %v734
        %v807 = vpop.f32.mrf.mxu0
        %v808 = vadd.f32 0.0, %v807
        %v809 = vpop.f32.mrf.mxu0
        %810 = vdwg.mxu0
        %v811 = vadd.f32 %v718, %v803
        %v812 = vadd.f32 %v719, %v808
        %v813 = vld [vmem:[%s722 + $0x1] sm:$0xff]
        %v814 = vld [vmem:[%s722 + $0x9] sm:$0x3f]
        %s815 = scalar_lea.vmem %s1, 224
        %v816 = vld [vmem:[%s815] sm:$0xff]
        %v817 = vld [vmem:[%s815 + $0x8] sm:$0xff]
        %v818 = vld [vmem:[%s815 + $0x10] sm:$0xff]
        %v819 = vld [vmem:[%s815 + $0x18] sm:$0xff]
        %v821 = vsel %vm194, %v813, 0
        %v824 = vsel %vm194, %v814, 0
        %826 = vmatprep.subr.mxu0 0.0
        %827 = vmatpush1.msra.mxu0 0.0
        %828 = vmatprep.subr.mxu0 0.0
        %829 = vmatpush1.msra.mxu0 0.0
        %830 = vmatprep.subr.mxu0 0.0
        %831 = vmatpush1.msra.mxu0 0.0
        %832 = vmatprep.subr.mxu0 0.0
        %833 = vmatpush1.msra.mxu0 0.0
        %834 = vmatprep.subr.mxu0 0.0
        %835 = vmatpush1.msra.mxu0 0.0
        %836 = vmatprep.subr.mxu0 0.0
        %837 = vmatpush1.msra.mxu0 0.0
        %838 = vmatprep.subr.mxu0 0.0
        %839 = vmatpush1.msra.mxu0 0.0
        %840 = vmatprep.subr.mxu0 0.0
        %841 = vmatpush1.msra.mxu0 0.0
        %842 = vmatprep.subr.mxu0 0.0
        %843 = vmatpush1.msra.mxu0 0.0
        %844 = vmatprep.subr.mxu0 0.0
        %845 = vmatpush1.msra.mxu0 0.0
        %846 = vmatprep.subr.mxu0 0.0
        %847 = vmatpush1.msra.mxu0 0.0
        %848 = vmatprep.subr.mxu0 0.0
        %849 = vmatpush1.msra.mxu0 0.0
        %850 = vmatprep.subr.mxu0 0.0
        %851 = vmatpush1.msra.mxu0 %v819
        %852 = vmatprep.subr.mxu0 0.0
        %853 = vmatpush1.msra.mxu0 %v818
        %854 = vmatprep.subr.mxu0 0.0
        %855 = vmatpush1.msra.mxu0 %v817
        %856 = vmatprep.subr.mxu0 0.0
        %857 = vmatpush1.msra.mxu0 %v816
        %858 = vmatprep.subr.mxu0 0.0
        %859 = vmatpush2.msra.mxu0 0.0
        %860 = vmatprep.subr.mxu0 0.0
        %861 = vmatpush2.msra.mxu0 0.0
        %862 = vmatprep.subr.mxu0 0.0
        %863 = vmatpush2.msra.mxu0 0.0
        %864 = vmatprep.subr.mxu0 0.0
        %865 = vmatpush2.msra.mxu0 0.0
        %866 = vmatprep.subr.mxu0 0.0
        %867 = vmatpush2.msra.mxu0 0.0
        %868 = vmatprep.subr.mxu0 0.0
        %869 = vmatpush2.msra.mxu0 0.0
        %870 = vmatprep.subr.mxu0 0.0
        %871 = vmatpush2.msra.mxu0 0.0
        %872 = vmatprep.subr.mxu0 0.0
        %873 = vmatpush2.msra.mxu0 0.0
        %874 = vmatprep.subr.mxu0 0.0
        %875 = vmatpush2.msra.mxu0 0.0
        %876 = vmatprep.subr.mxu0 0.0
        %877 = vmatpush2.msra.mxu0 0.0
        %878 = vmatprep.subr.mxu0 0.0
        %879 = vmatpush2.msra.mxu0 0.0
        %880 = vmatprep.subr.mxu0 0.0
        %881 = vmatpush2.msra.mxu0 0.0
        %882 = vmatprep.subr.mxu0 0.0
        %883 = vmatpush2.msra.mxu0 0.0
        %884 = vmatprep.subr.mxu0 0.0
        %885 = vmatpush2.msra.mxu0 0.0
        %886 = vmatprep.subr.mxu0 0.0
        %887 = vmatpush2.msra.mxu0 0.0
        %888 = vmatprep.subr.mxu0 0.0
        %889 = vmatpush2.msra.mxu0 0.0
        %890 = vmatprep.mubr.f32.mxu0 0.0
        %891 = vmatmul.mubr.f32.gmra.mxu0 %v821
        %v892 = vpop.f32.mrf.mxu0
        %v893 = vadd.f32 0.0, %v892
        %v894 = vpop.f32.mrf.mxu0
        %895 = vmatprep.mubr.f32.mxu0 0.0
        %896 = vmatmul.mubr.f32.gmra.mxu0 %v824
        %v897 = vpop.f32.mrf.mxu0
        %v898 = vadd.f32 0.0, %v897
        %v899 = vpop.f32.mrf.mxu0
        %900 = vdwg.mxu0
        %v901 = vadd.f32 %v811, %v893
        %v902 = vadd.f32 %v812, %v898
        %v903 = vld [vmem:[%s722 + $0x2] sm:$0xff]
        %v904 = vld [vmem:[%s722 + $0xa] sm:$0x3f]
        %s905 = scalar_lea.vmem %s1, 256
        %v906 = vld [vmem:[%s905] sm:$0xff]
        %v907 = vld [vmem:[%s905 + $0x8] sm:$0xff]
        %v908 = vld [vmem:[%s905 + $0x10] sm:$0xff]
        %v909 = vld [vmem:[%s905 + $0x18] sm:$0xff]
        %v911 = vsel %vm194, %v903, 0
        %v914 = vsel %vm194, %v904, 0
        %916 = vmatprep.subr.mxu0 0.0
        %917 = vmatpush1.msra.mxu0 0.0
        %918 = vmatprep.subr.mxu0 0.0
        %919 = vmatpush1.msra.mxu0 0.0
        %920 = vmatprep.subr.mxu0 0.0
        %921 = vmatpush1.msra.mxu0 0.0
        %922 = vmatprep.subr.mxu0 0.0
        %923 = vmatpush1.msra.mxu0 0.0
        %924 = vmatprep.subr.mxu0 0.0
        %925 = vmatpush1.msra.mxu0 0.0
        %926 = vmatprep.subr.mxu0 0.0
        %927 = vmatpush1.msra.mxu0 0.0
        %928 = vmatprep.subr.mxu0 0.0
        %929 = vmatpush1.msra.mxu0 0.0
        %930 = vmatprep.subr.mxu0 0.0
        %931 = vmatpush1.msra.mxu0 0.0
        %932 = vmatprep.subr.mxu0 0.0
        %933 = vmatpush1.msra.mxu0 0.0
        %934 = vmatprep.subr.mxu0 0.0
        %935 = vmatpush1.msra.mxu0 0.0
        %936 = vmatprep.subr.mxu0 0.0
        %937 = vmatpush1.msra.mxu0 0.0
        %938 = vmatprep.subr.mxu0 0.0
        %939 = vmatpush1.msra.mxu0 0.0
        %940 = vmatprep.subr.mxu0 0.0
        %941 = vmatpush1.msra.mxu0 %v909
        %942 = vmatprep.subr.mxu0 0.0
        %943 = vmatpush1.msra.mxu0 %v908
        %944 = vmatprep.subr.mxu0 0.0
        %945 = vmatpush1.msra.mxu0 %v907
        %946 = vmatprep.subr.mxu0 0.0
        %947 = vmatpush1.msra.mxu0 %v906
        %948 = vmatprep.subr.mxu0 0.0
        %949 = vmatpush2.msra.mxu0 0.0
        %950 = vmatprep.subr.mxu0 0.0
        %951 = vmatpush2.msra.mxu0 0.0
        %952 = vmatprep.subr.mxu0 0.0
        %953 = vmatpush2.msra.mxu0 0.0
        %954 = vmatprep.subr.mxu0 0.0
        %955 = vmatpush2.msra.mxu0 0.0
        %956 = vmatprep.subr.mxu0 0.0
        %957 = vmatpush2.msra.mxu0 0.0
        %958 = vmatprep.subr.mxu0 0.0
        %959 = vmatpush2.msra.mxu0 0.0
        %960 = vmatprep.subr.mxu0 0.0
        %961 = vmatpush2.msra.mxu0 0.0
        %962 = vmatprep.subr.mxu0 0.0
        %963 = vmatpush2.msra.mxu0 0.0
        %964 = vmatprep.subr.mxu0 0.0
        %965 = vmatpush2.msra.mxu0 0.0
        %966 = vmatprep.subr.mxu0 0.0
        %967 = vmatpush2.msra.mxu0 0.0
        %968 = vmatprep.subr.mxu0 0.0
        %969 = vmatpush2.msra.mxu0 0.0
        %970 = vmatprep.subr.mxu0 0.0
        %971 = vmatpush2.msra.mxu0 0.0
        %972 = vmatprep.subr.mxu0 0.0
        %973 = vmatpush2.msra.mxu0 0.0
        %974 = vmatprep.subr.mxu0 0.0
        %975 = vmatpush2.msra.mxu0 0.0
        %976 = vmatprep.subr.mxu0 0.0
        %977 = vmatpush2.msra.mxu0 0.0
        %978 = vmatprep.subr.mxu0 0.0
        %979 = vmatpush2.msra.mxu0 0.0
        %980 = vmatprep.mubr.f32.mxu0 0.0
        %981 = vmatmul.mubr.f32.gmra.mxu0 %v911
        %v982 = vpop.f32.mrf.mxu0
        %v983 = vadd.f32 0.0, %v982
        %v984 = vpop.f32.mrf.mxu0
        %985 = vmatprep.mubr.f32.mxu0 0.0
        %986 = vmatmul.mubr.f32.gmra.mxu0 %v914
        %v987 = vpop.f32.mrf.mxu0
        %v988 = vadd.f32 0.0, %v987
        %v989 = vpop.f32.mrf.mxu0
        %990 = vdwg.mxu0
        %v991 = vadd.f32 %v901, %v983
        %v992 = vadd.f32 %v902, %v988
        %993 = vmatprep.subr.mxu0 0.0
        %994 = vmatpush1.msra.mxu0 0.0
        %995 = vmatprep.subr.mxu0 0.0
        %996 = vmatpush1.msra.mxu0 0.0
        %997 = vmatprep.subr.mxu0 0.0
        %998 = vmatpush1.msra.mxu0 0.0
        %999 = vmatprep.subr.mxu0 0.0
        %1000 = vmatpush1.msra.mxu0 0.0
        %1001 = vmatprep.subr.mxu0 0.0
        %1002 = vmatpush1.msra.mxu0 0.0
        %1003 = vmatprep.subr.mxu0 0.0
        %1004 = vmatpush1.msra.mxu0 0.0
        %1005 = vmatprep.subr.mxu0 0.0
        %1006 = vmatpush1.msra.mxu0 0.0
        %1007 = vmatprep.subr.mxu0 0.0
        %1008 = vmatpush1.msra.mxu0 0.0
        %1009 = vmatprep.subr.mxu0 0.0
        %1010 = vmatpush1.msra.mxu0 0.0
        %1011 = vmatprep.subr.mxu0 0.0
        %1012 = vmatpush1.msra.mxu0 0.0
        %1013 = vmatprep.subr.mxu0 0.0
        %1014 = vmatpush1.msra.mxu0 0.0
        %1015 = vmatprep.subr.mxu0 0.0
        %1016 = vmatpush1.msra.mxu0 0.0
        %1017 = vmatprep.subr.mxu0 0.0
        %1018 = vmatpush1.msra.mxu0 %v193
        %1019 = vmatprep.subr.mxu0 0.0
        %1020 = vmatpush1.msra.mxu0 %v192
        %1021 = vmatprep.subr.mxu0 0.0
        %1022 = vmatpush1.msra.mxu0 %v191
        %1023 = vmatprep.subr.mxu0 0.0
        %1024 = vmatpush1.msra.mxu0 %v190
        %1025 = vmatprep.subr.mxu0 0.0
        %1026 = vmatpush2.msra.mxu0 0.0
        %1027 = vmatprep.subr.mxu0 0.0
        %1028 = vmatpush2.msra.mxu0 0.0
        %1029 = vmatprep.subr.mxu0 0.0
        %1030 = vmatpush2.msra.mxu0 0.0
        %1031 = vmatprep.subr.mxu0 0.0
        %1032 = vmatpush2.msra.mxu0 0.0
        %1033 = vmatprep.subr.mxu0 0.0
        %1034 = vmatpush2.msra.mxu0 0.0
        %1035 = vmatprep.subr.mxu0 0.0
        %1036 = vmatpush2.msra.mxu0 0.0
        %1037 = vmatprep.subr.mxu0 0.0
        %1038 = vmatpush2.msra.mxu0 0.0
        %1039 = vmatprep.subr.mxu0 0.0
        %1040 = vmatpush2.msra.mxu0 0.0
        %1041 = vmatprep.subr.mxu0 0.0
        %1042 = vmatpush2.msra.mxu0 0.0
        %1043 = vmatprep.subr.mxu0 0.0
        %1044 = vmatpush2.msra.mxu0 0.0
        %1045 = vmatprep.subr.mxu0 0.0
        %1046 = vmatpush2.msra.mxu0 0.0
        %1047 = vmatprep.subr.mxu0 0.0
        %1048 = vmatpush2.msra.mxu0 0.0
        %1049 = vmatprep.subr.mxu0 0.0
        %1050 = vmatpush2.msra.mxu0 0.0
        %1051 = vmatprep.subr.mxu0 0.0
        %1052 = vmatpush2.msra.mxu0 0.0
        %1053 = vmatprep.subr.mxu0 0.0
        %1054 = vmatpush2.msra.mxu0 0.0
        %1055 = vmatprep.subr.mxu0 0.0
        %1056 = vmatpush2.msra.mxu0 0.0
        %1057 = vmatprep.mubr.f32.mxu0 0.0
        %1058 = vmatmul.mubr.f32.gmra.mxu0 %v548
        %v1059 = vpop.f32.mrf.mxu0
        %v1060 = vadd.f32 0.0, %v1059
        %v1061 = vpop.f32.mrf.mxu0
        %1062 = vmatprep.mubr.f32.mxu0 0.0
        %1063 = vmatmul.mubr.f32.gmra.mxu0 %v551
        %v1064 = vpop.f32.mrf.mxu0
        %v1065 = vadd.f32 0.0, %v1064
        %v1066 = vpop.f32.mrf.mxu0
        %1067 = vdwg.mxu0
        %1068 = vmatprep.subr.mxu0 0.0
        %1069 = vmatpush1.msra.mxu0 0.0
        %1070 = vmatprep.subr.mxu0 0.0
        %1071 = vmatpush1.msra.mxu0 0.0
        %1072 = vmatprep.subr.mxu0 0.0
        %1073 = vmatpush1.msra.mxu0 0.0
        %1074 = vmatprep.subr.mxu0 0.0
        %1075 = vmatpush1.msra.mxu0 0.0
        %1076 = vmatprep.subr.mxu0 0.0
        %1077 = vmatpush1.msra.mxu0 0.0
        %1078 = vmatprep.subr.mxu0 0.0
        %1079 = vmatpush1.msra.mxu0 0.0
        %1080 = vmatprep.subr.mxu0 0.0
        %1081 = vmatpush1.msra.mxu0 0.0
        %1082 = vmatprep.subr.mxu0 0.0
        %1083 = vmatpush1.msra.mxu0 0.0
        %1084 = vmatprep.subr.mxu0 0.0
        %1085 = vmatpush1.msra.mxu0 0.0
        %1086 = vmatprep.subr.mxu0 0.0
        %1087 = vmatpush1.msra.mxu0 0.0
        %1088 = vmatprep.subr.mxu0 0.0
        %1089 = vmatpush1.msra.mxu0 0.0
        %1090 = vmatprep.subr.mxu0 0.0
        %1091 = vmatpush1.msra.mxu0 0.0
        %1092 = vmatprep.subr.mxu0 0.0
        %1093 = vmatpush1.msra.mxu0 %v186
        %1094 = vmatprep.subr.mxu0 0.0
        %1095 = vmatpush1.msra.mxu0 %v185
        %1096 = vmatprep.subr.mxu0 0.0
        %1097 = vmatpush1.msra.mxu0 %v184
        %1098 = vmatprep.subr.mxu0 0.0
        %1099 = vmatpush1.msra.mxu0 %v183
        %1100 = vmatprep.subr.mxu0 0.0
        %1101 = vmatpush2.msra.mxu0 0.0
        %1102 = vmatprep.subr.mxu0 0.0
        %1103 = vmatpush2.msra.mxu0 0.0
        %1104 = vmatprep.subr.mxu0 0.0
        %1105 = vmatpush2.msra.mxu0 0.0
        %1106 = vmatprep.subr.mxu0 0.0
        %1107 = vmatpush2.msra.mxu0 0.0
        %1108 = vmatprep.subr.mxu0 0.0
        %1109 = vmatpush2.msra.mxu0 0.0
        %1110 = vmatprep.subr.mxu0 0.0
        %1111 = vmatpush2.msra.mxu0 0.0
        %1112 = vmatprep.subr.mxu0 0.0
        %1113 = vmatpush2.msra.mxu0 0.0
        %1114 = vmatprep.subr.mxu0 0.0
        %1115 = vmatpush2.msra.mxu0 0.0
        %1116 = vmatprep.subr.mxu0 0.0
        %1117 = vmatpush2.msra.mxu0 0.0
        %1118 = vmatprep.subr.mxu0 0.0
        %1119 = vmatpush2.msra.mxu0 0.0
        %1120 = vmatprep.subr.mxu0 0.0
        %1121 = vmatpush2.msra.mxu0 0.0
        %1122 = vmatprep.subr.mxu0 0.0
        %1123 = vmatpush2.msra.mxu0 0.0
        %1124 = vmatprep.subr.mxu0 0.0
        %1125 = vmatpush2.msra.mxu0 0.0
        %1126 = vmatprep.subr.mxu0 0.0
        %1127 = vmatpush2.msra.mxu0 0.0
        %1128 = vmatprep.subr.mxu0 0.0
        %1129 = vmatpush2.msra.mxu0 0.0
        %1130 = vmatprep.subr.mxu0 0.0
        %1131 = vmatpush2.msra.mxu0 0.0
        %1132 = vmatprep.mubr.f32.mxu0 0.0
        %1133 = vmatmul.mubr.f32.gmra.mxu0 %v458
        %v1134 = vpop.f32.mrf.mxu0
        %v1135 = vadd.f32 %v1060, %v1134
        %v1136 = vpop.f32.mrf.mxu0
        %1137 = vmatprep.mubr.f32.mxu0 0.0
        %1138 = vmatmul.mubr.f32.gmra.mxu0 %v461
        %v1139 = vpop.f32.mrf.mxu0
        %v1140 = vadd.f32 %v1065, %v1139
        %v1141 = vpop.f32.mrf.mxu0
        %1142 = vdwg.mxu0
        %1143 = vmatprep.subr.mxu0 0.0
        %1144 = vmatpush1.msra.mxu0 0.0
        %1145 = vmatprep.subr.mxu0 0.0
        %1146 = vmatpush1.msra.mxu0 0.0
        %1147 = vmatprep.subr.mxu0 0.0
        %1148 = vmatpush1.msra.mxu0 0.0
        %1149 = vmatprep.subr.mxu0 0.0
        %1150 = vmatpush1.msra.mxu0 0.0
        %1151 = vmatprep.subr.mxu0 0.0
        %1152 = vmatpush1.msra.mxu0 0.0
        %1153 = vmatprep.subr.mxu0 0.0
        %1154 = vmatpush1.msra.mxu0 0.0
        %1155 = vmatprep.subr.mxu0 0.0
        %1156 = vmatpush1.msra.mxu0 0.0
        %1157 = vmatprep.subr.mxu0 0.0
        %1158 = vmatpush1.msra.mxu0 0.0
        %1159 = vmatprep.subr.mxu0 0.0
        %1160 = vmatpush1.msra.mxu0 0.0
        %1161 = vmatprep.subr.mxu0 0.0
        %1162 = vmatpush1.msra.mxu0 0.0
        %1163 = vmatprep.subr.mxu0 0.0
        %1164 = vmatpush1.msra.mxu0 0.0
        %1165 = vmatprep.subr.mxu0 0.0
        %1166 = vmatpush1.msra.mxu0 0.0
        %1167 = vmatprep.subr.mxu0 0.0
        %1168 = vmatpush1.msra.mxu0 %v363
        %1169 = vmatprep.subr.mxu0 0.0
        %1170 = vmatpush1.msra.mxu0 %v362
        %1171 = vmatprep.subr.mxu0 0.0
        %1172 = vmatpush1.msra.mxu0 %v361
        %1173 = vmatprep.subr.mxu0 0.0
        %1174 = vmatpush1.msra.mxu0 %v360
        %1175 = vmatprep.subr.mxu0 0.0
        %1176 = vmatpush2.msra.mxu0 0.0
        %1177 = vmatprep.subr.mxu0 0.0
        %1178 = vmatpush2.msra.mxu0 0.0
        %1179 = vmatprep.subr.mxu0 0.0
        %1180 = vmatpush2.msra.mxu0 0.0
        %1181 = vmatprep.subr.mxu0 0.0
        %1182 = vmatpush2.msra.mxu0 0.0
        %1183 = vmatprep.subr.mxu0 0.0
        %1184 = vmatpush2.msra.mxu0 0.0
        %1185 = vmatprep.subr.mxu0 0.0
        %1186 = vmatpush2.msra.mxu0 0.0
        %1187 = vmatprep.subr.mxu0 0.0
        %1188 = vmatpush2.msra.mxu0 0.0
        %1189 = vmatprep.subr.mxu0 0.0
        %1190 = vmatpush2.msra.mxu0 0.0
        %1191 = vmatprep.subr.mxu0 0.0
        %1192 = vmatpush2.msra.mxu0 0.0
        %1193 = vmatprep.subr.mxu0 0.0
        %1194 = vmatpush2.msra.mxu0 0.0
        %1195 = vmatprep.subr.mxu0 0.0
        %1196 = vmatpush2.msra.mxu0 0.0
        %1197 = vmatprep.subr.mxu0 0.0
        %1198 = vmatpush2.msra.mxu0 0.0
        %1199 = vmatprep.subr.mxu0 0.0
        %1200 = vmatpush2.msra.mxu0 0.0
        %1201 = vmatprep.subr.mxu0 0.0
        %1202 = vmatpush2.msra.mxu0 0.0
        %1203 = vmatprep.subr.mxu0 0.0
        %1204 = vmatpush2.msra.mxu0 0.0
        %1205 = vmatprep.subr.mxu0 0.0
        %1206 = vmatpush2.msra.mxu0 0.0
        %1207 = vmatprep.mubr.f32.mxu0 0.0
        %1208 = vmatmul.mubr.f32.gmra.mxu0 %v638
        %v1209 = vpop.f32.mrf.mxu0
        %v1210 = vadd.f32 0.0, %v1209
        %v1211 = vpop.f32.mrf.mxu0
        %1212 = vmatprep.mubr.f32.mxu0 0.0
        %1213 = vmatmul.mubr.f32.gmra.mxu0 %v641
        %v1214 = vpop.f32.mrf.mxu0
        %v1215 = vadd.f32 0.0, %v1214
        %v1216 = vpop.f32.mrf.mxu0
        %1217 = vdwg.mxu0
        %v1218 = vadd.f32 %v1135, %v1210
        %v1219 = vadd.f32 %v1140, %v1215
        %1220 = vmatprep.subr.mxu0 0.0
        %1221 = vmatpush1.msra.mxu0 0.0
        %1222 = vmatprep.subr.mxu0 0.0
        %1223 = vmatpush1.msra.mxu0 0.0
        %1224 = vmatprep.subr.mxu0 0.0
        %1225 = vmatpush1.msra.mxu0 0.0
        %1226 = vmatprep.subr.mxu0 0.0
        %1227 = vmatpush1.msra.mxu0 0.0
        %1228 = vmatprep.subr.mxu0 0.0
        %1229 = vmatpush1.msra.mxu0 0.0
        %1230 = vmatprep.subr.mxu0 0.0
        %1231 = vmatpush1.msra.mxu0 0.0
        %1232 = vmatprep.subr.mxu0 0.0
        %1233 = vmatpush1.msra.mxu0 0.0
        %1234 = vmatprep.subr.mxu0 0.0
        %1235 = vmatpush1.msra.mxu0 0.0
        %1236 = vmatprep.subr.mxu0 0.0
        %1237 = vmatpush1.msra.mxu0 0.0
        %1238 = vmatprep.subr.mxu0 0.0
        %1239 = vmatpush1.msra.mxu0 0.0
        %1240 = vmatprep.subr.mxu0 0.0
        %1241 = vmatpush1.msra.mxu0 0.0
        %1242 = vmatprep.subr.mxu0 0.0
        %1243 = vmatpush1.msra.mxu0 0.0
        %1244 = vmatprep.subr.mxu0 0.0
        %1245 = vmatpush1.msra.mxu0 %v456
        %1246 = vmatprep.subr.mxu0 0.0
        %1247 = vmatpush1.msra.mxu0 %v455
        %1248 = vmatprep.subr.mxu0 0.0
        %1249 = vmatpush1.msra.mxu0 %v454
        %1250 = vmatprep.subr.mxu0 0.0
        %1251 = vmatpush1.msra.mxu0 %v453
        %1252 = vmatprep.subr.mxu0 0.0
        %1253 = vmatpush2.msra.mxu0 0.0
        %1254 = vmatprep.subr.mxu0 0.0
        %1255 = vmatpush2.msra.mxu0 0.0
        %1256 = vmatprep.subr.mxu0 0.0
        %1257 = vmatpush2.msra.mxu0 0.0
        %1258 = vmatprep.subr.mxu0 0.0
        %1259 = vmatpush2.msra.mxu0 0.0
        %1260 = vmatprep.subr.mxu0 0.0
        %1261 = vmatpush2.msra.mxu0 0.0
        %1262 = vmatprep.subr.mxu0 0.0
        %1263 = vmatpush2.msra.mxu0 0.0
        %1264 = vmatprep.subr.mxu0 0.0
        %1265 = vmatpush2.msra.mxu0 0.0
        %1266 = vmatprep.subr.mxu0 0.0
        %1267 = vmatpush2.msra.mxu0 0.0
        %1268 = vmatprep.subr.mxu0 0.0
        %1269 = vmatpush2.msra.mxu0 0.0
        %1270 = vmatprep.subr.mxu0 0.0
        %1271 = vmatpush2.msra.mxu0 0.0
        %1272 = vmatprep.subr.mxu0 0.0
        %1273 = vmatpush2.msra.mxu0 0.0
        %1274 = vmatprep.subr.mxu0 0.0
        %1275 = vmatpush2.msra.mxu0 0.0
        %1276 = vmatprep.subr.mxu0 0.0
        %1277 = vmatpush2.msra.mxu0 0.0
        %1278 = vmatprep.subr.mxu0 0.0
        %1279 = vmatpush2.msra.mxu0 0.0
        %1280 = vmatprep.subr.mxu0 0.0
        %1281 = vmatpush2.msra.mxu0 0.0
        %1282 = vmatprep.subr.mxu0 0.0
        %1283 = vmatpush2.msra.mxu0 0.0
        %1284 = vmatprep.mubr.f32.mxu0 0.0
        %1285 = vmatmul.mubr.f32.gmra.mxu0 %v731
        %v1286 = vpop.f32.mrf.mxu0
        %v1287 = vadd.f32 0.0, %v1286
        %v1288 = vpop.f32.mrf.mxu0
        %1289 = vmatprep.mubr.f32.mxu0 0.0
        %1290 = vmatmul.mubr.f32.gmra.mxu0 %v734
        %v1291 = vpop.f32.mrf.mxu0
        %v1292 = vadd.f32 0.0, %v1291
        %v1293 = vpop.f32.mrf.mxu0
        %1294 = vdwg.mxu0
        %v1295 = vadd.f32 %v1218, %v1287
        %v1296 = vadd.f32 %v1219, %v1292
        %1297 = vmatprep.subr.mxu0 0.0
        %1298 = vmatpush1.msra.mxu0 0.0
        %1299 = vmatprep.subr.mxu0 0.0
        %1300 = vmatpush1.msra.mxu0 0.0
        %1301 = vmatprep.subr.mxu0 0.0
        %1302 = vmatpush1.msra.mxu0 0.0
        %1303 = vmatprep.subr.mxu0 0.0
        %1304 = vmatpush1.msra.mxu0 0.0
        %1305 = vmatprep.subr.mxu0 0.0
        %1306 = vmatpush1.msra.mxu0 0.0
        %1307 = vmatprep.subr.mxu0 0.0
        %1308 = vmatpush1.msra.mxu0 0.0
        %1309 = vmatprep.subr.mxu0 0.0
        %1310 = vmatpush1.msra.mxu0 0.0
        %1311 = vmatprep.subr.mxu0 0.0
        %1312 = vmatpush1.msra.mxu0 0.0
        %1313 = vmatprep.subr.mxu0 0.0
        %1314 = vmatpush1.msra.mxu0 0.0
        %1315 = vmatprep.subr.mxu0 0.0
        %1316 = vmatpush1.msra.mxu0 0.0
        %1317 = vmatprep.subr.mxu0 0.0
        %1318 = vmatpush1.msra.mxu0 0.0
        %1319 = vmatprep.subr.mxu0 0.0
        %1320 = vmatpush1.msra.mxu0 0.0
        %1321 = vmatprep.subr.mxu0 0.0
        %1322 = vmatpush1.msra.mxu0 %v546
        %1323 = vmatprep.subr.mxu0 0.0
        %1324 = vmatpush1.msra.mxu0 %v545
        %1325 = vmatprep.subr.mxu0 0.0
        %1326 = vmatpush1.msra.mxu0 %v544
        %1327 = vmatprep.subr.mxu0 0.0
        %1328 = vmatpush1.msra.mxu0 %v543
        %1329 = vmatprep.subr.mxu0 0.0
        %1330 = vmatpush2.msra.mxu0 0.0
        %1331 = vmatprep.subr.mxu0 0.0
        %1332 = vmatpush2.msra.mxu0 0.0
        %1333 = vmatprep.subr.mxu0 0.0
        %1334 = vmatpush2.msra.mxu0 0.0
        %1335 = vmatprep.subr.mxu0 0.0
        %1336 = vmatpush2.msra.mxu0 0.0
        %1337 = vmatprep.subr.mxu0 0.0
        %1338 = vmatpush2.msra.mxu0 0.0
        %1339 = vmatprep.subr.mxu0 0.0
        %1340 = vmatpush2.msra.mxu0 0.0
        %1341 = vmatprep.subr.mxu0 0.0
        %1342 = vmatpush2.msra.mxu0 0.0
        %1343 = vmatprep.subr.mxu0 0.0
        %1344 = vmatpush2.msra.mxu0 0.0
        %1345 = vmatprep.subr.mxu0 0.0
        %1346 = vmatpush2.msra.mxu0 0.0
        %1347 = vmatprep.subr.mxu0 0.0
        %1348 = vmatpush2.msra.mxu0 0.0
        %1349 = vmatprep.subr.mxu0 0.0
        %1350 = vmatpush2.msra.mxu0 0.0
        %1351 = vmatprep.subr.mxu0 0.0
        %1352 = vmatpush2.msra.mxu0 0.0
        %1353 = vmatprep.subr.mxu0 0.0
        %1354 = vmatpush2.msra.mxu0 0.0
        %1355 = vmatprep.subr.mxu0 0.0
        %1356 = vmatpush2.msra.mxu0 0.0
        %1357 = vmatprep.subr.mxu0 0.0
        %1358 = vmatpush2.msra.mxu0 0.0
        %1359 = vmatprep.subr.mxu0 0.0
        %1360 = vmatpush2.msra.mxu0 0.0
        %1361 = vmatprep.mubr.f32.mxu0 0.0
        %1362 = vmatmul.mubr.f32.gmra.mxu0 %v821
        %v1363 = vpop.f32.mrf.mxu0
        %v1364 = vadd.f32 0.0, %v1363
        %v1365 = vpop.f32.mrf.mxu0
        %1366 = vmatprep.mubr.f32.mxu0 0.0
        %1367 = vmatmul.mubr.f32.gmra.mxu0 %v824
        %v1368 = vpop.f32.mrf.mxu0
        %v1369 = vadd.f32 0.0, %v1368
        %v1370 = vpop.f32.mrf.mxu0
        %1371 = vdwg.mxu0
        %v1372 = vadd.f32 %v1295, %v1364
        %v1373 = vadd.f32 %v1296, %v1369
        %1374 = vmatprep.subr.mxu0 0.0
        %1375 = vmatpush1.msra.mxu0 0.0
        %1376 = vmatprep.subr.mxu0 0.0
        %1377 = vmatpush1.msra.mxu0 0.0
        %1378 = vmatprep.subr.mxu0 0.0
        %1379 = vmatpush1.msra.mxu0 0.0
        %1380 = vmatprep.subr.mxu0 0.0
        %1381 = vmatpush1.msra.mxu0 0.0
        %1382 = vmatprep.subr.mxu0 0.0
        %1383 = vmatpush1.msra.mxu0 0.0
        %1384 = vmatprep.subr.mxu0 0.0
        %1385 = vmatpush1.msra.mxu0 0.0
        %1386 = vmatprep.subr.mxu0 0.0
        %1387 = vmatpush1.msra.mxu0 0.0
        %1388 = vmatprep.subr.mxu0 0.0
        %1389 = vmatpush1.msra.mxu0 0.0
        %1390 = vmatprep.subr.mxu0 0.0
        %1391 = vmatpush1.msra.mxu0 0.0
        %1392 = vmatprep.subr.mxu0 0.0
        %1393 = vmatpush1.msra.mxu0 0.0
        %1394 = vmatprep.subr.mxu0 0.0
        %1395 = vmatpush1.msra.mxu0 0.0
        %1396 = vmatprep.subr.mxu0 0.0
        %1397 = vmatpush1.msra.mxu0 0.0
        %1398 = vmatprep.subr.mxu0 0.0
        %1399 = vmatpush1.msra.mxu0 %v636
        %1400 = vmatprep.subr.mxu0 0.0
        %1401 = vmatpush1.msra.mxu0 %v635
        %1402 = vmatprep.subr.mxu0 0.0
        %1403 = vmatpush1.msra.mxu0 %v634
        %1404 = vmatprep.subr.mxu0 0.0
        %1405 = vmatpush1.msra.mxu0 %v633
        %1406 = vmatprep.subr.mxu0 0.0
        %1407 = vmatpush2.msra.mxu0 0.0
        %1408 = vmatprep.subr.mxu0 0.0
        %1409 = vmatpush2.msra.mxu0 0.0
        %1410 = vmatprep.subr.mxu0 0.0
        %1411 = vmatpush2.msra.mxu0 0.0
        %1412 = vmatprep.subr.mxu0 0.0
        %1413 = vmatpush2.msra.mxu0 0.0
        %1414 = vmatprep.subr.mxu0 0.0
        %1415 = vmatpush2.msra.mxu0 0.0
        %1416 = vmatprep.subr.mxu0 0.0
        %1417 = vmatpush2.msra.mxu0 0.0
        %1418 = vmatprep.subr.mxu0 0.0
        %1419 = vmatpush2.msra.mxu0 0.0
        %1420 = vmatprep.subr.mxu0 0.0
        %1421 = vmatpush2.msra.mxu0 0.0
        %1422 = vmatprep.subr.mxu0 0.0
        %1423 = vmatpush2.msra.mxu0 0.0
        %1424 = vmatprep.subr.mxu0 0.0
        %1425 = vmatpush2.msra.mxu0 0.0
        %1426 = vmatprep.subr.mxu0 0.0
        %1427 = vmatpush2.msra.mxu0 0.0
        %1428 = vmatprep.subr.mxu0 0.0
        %1429 = vmatpush2.msra.mxu0 0.0
        %1430 = vmatprep.subr.mxu0 0.0
        %1431 = vmatpush2.msra.mxu0 0.0
        %1432 = vmatprep.subr.mxu0 0.0
        %1433 = vmatpush2.msra.mxu0 0.0
        %1434 = vmatprep.subr.mxu0 0.0
        %1435 = vmatpush2.msra.mxu0 0.0
        %1436 = vmatprep.subr.mxu0 0.0
        %1437 = vmatpush2.msra.mxu0 0.0
        %1438 = vmatprep.mubr.f32.mxu0 0.0
        %1439 = vmatmul.mubr.f32.gmra.mxu0 %v911
        %v1440 = vpop.f32.mrf.mxu0
        %v1441 = vadd.f32 0.0, %v1440
        %v1442 = vpop.f32.mrf.mxu0
        %1443 = vmatprep.mubr.f32.mxu0 0.0
        %1444 = vmatmul.mubr.f32.gmra.mxu0 %v914
        %v1445 = vpop.f32.mrf.mxu0
        %v1446 = vadd.f32 0.0, %v1445
        %v1447 = vpop.f32.mrf.mxu0
        %1448 = vdwg.mxu0
        %v1449 = vadd.f32 %v1372, %v1441
        %v1450 = vadd.f32 %v1373, %v1446
        %s1451 = sadd.s32 %s178, 3
        %s1452 = smul.u32 %s1451, 16
        %s1453 = scalar_lea.vmem %s165, %s1452
        %v1454 = vld [vmem:[%s1453] sm:$0xff]
        %v1455 = vld [vmem:[%s1453 + $0x8] sm:$0x3f]
        %v1457 = vsel %vm194, %v1454, 0
        %v1460 = vsel %vm194, %v1455, 0
        %1462 = vmatprep.subr.mxu0 0.0
        %1463 = vmatpush1.msra.mxu0 0.0
        %1464 = vmatprep.subr.mxu0 0.0
        %1465 = vmatpush1.msra.mxu0 0.0
        %1466 = vmatprep.subr.mxu0 0.0
        %1467 = vmatpush1.msra.mxu0 0.0
        %1468 = vmatprep.subr.mxu0 0.0
        %1469 = vmatpush1.msra.mxu0 0.0
        %1470 = vmatprep.subr.mxu0 0.0
        %1471 = vmatpush1.msra.mxu0 0.0
        %1472 = vmatprep.subr.mxu0 0.0
        %1473 = vmatpush1.msra.mxu0 0.0
        %1474 = vmatprep.subr.mxu0 0.0
        %1475 = vmatpush1.msra.mxu0 0.0
        %1476 = vmatprep.subr.mxu0 0.0
        %1477 = vmatpush1.msra.mxu0 0.0
        %1478 = vmatprep.subr.mxu0 0.0
        %1479 = vmatpush1.msra.mxu0 0.0
        %1480 = vmatprep.subr.mxu0 0.0
        %1481 = vmatpush1.msra.mxu0 0.0
        %1482 = vmatprep.subr.mxu0 0.0
        %1483 = vmatpush1.msra.mxu0 0.0
        %1484 = vmatprep.subr.mxu0 0.0
        %1485 = vmatpush1.msra.mxu0 0.0
        %1486 = vmatprep.subr.mxu0 0.0
        %1487 = vmatpush1.msra.mxu0 %v729
        %1488 = vmatprep.subr.mxu0 0.0
        %1489 = vmatpush1.msra.mxu0 %v728
        %1490 = vmatprep.subr.mxu0 0.0
        %1491 = vmatpush1.msra.mxu0 %v727
        %1492 = vmatprep.subr.mxu0 0.0
        %1493 = vmatpush1.msra.mxu0 %v726
        %1494 = vmatprep.subr.mxu0 0.0
        %1495 = vmatpush2.msra.mxu0 0.0
        %1496 = vmatprep.subr.mxu0 0.0
        %1497 = vmatpush2.msra.mxu0 0.0
        %1498 = vmatprep.subr.mxu0 0.0
        %1499 = vmatpush2.msra.mxu0 0.0
        %1500 = vmatprep.subr.mxu0 0.0
        %1501 = vmatpush2.msra.mxu0 0.0
        %1502 = vmatprep.subr.mxu0 0.0
        %1503 = vmatpush2.msra.mxu0 0.0
        %1504 = vmatprep.subr.mxu0 0.0
        %1505 = vmatpush2.msra.mxu0 0.0
        %1506 = vmatprep.subr.mxu0 0.0
        %1507 = vmatpush2.msra.mxu0 0.0
        %1508 = vmatprep.subr.mxu0 0.0
        %1509 = vmatpush2.msra.mxu0 0.0
        %1510 = vmatprep.subr.mxu0 0.0
        %1511 = vmatpush2.msra.mxu0 0.0
        %1512 = vmatprep.subr.mxu0 0.0
        %1513 = vmatpush2.msra.mxu0 0.0
        %1514 = vmatprep.subr.mxu0 0.0
        %1515 = vmatpush2.msra.mxu0 0.0
        %1516 = vmatprep.subr.mxu0 0.0
        %1517 = vmatpush2.msra.mxu0 0.0
        %1518 = vmatprep.subr.mxu0 0.0
        %1519 = vmatpush2.msra.mxu0 0.0
        %1520 = vmatprep.subr.mxu0 0.0
        %1521 = vmatpush2.msra.mxu0 0.0
        %1522 = vmatprep.subr.mxu0 0.0
        %1523 = vmatpush2.msra.mxu0 0.0
        %1524 = vmatprep.subr.mxu0 0.0
        %1525 = vmatpush2.msra.mxu0 0.0
        %1526 = vmatprep.mubr.f32.mxu0 0.0
        %1527 = vmatmul.mubr.f32.gmra.mxu0 %v1457
        %v1528 = vpop.f32.mrf.mxu0
        %v1529 = vadd.f32 0.0, %v1528
        %v1530 = vpop.f32.mrf.mxu0
        %1531 = vmatprep.mubr.f32.mxu0 0.0
        %1532 = vmatmul.mubr.f32.gmra.mxu0 %v1460
        %v1533 = vpop.f32.mrf.mxu0
        %v1534 = vadd.f32 0.0, %v1533
        %v1535 = vpop.f32.mrf.mxu0
        %1536 = vdwg.mxu0
        %v1537 = vadd.f32 %v1449, %v1529
        %v1538 = vadd.f32 %v1450, %v1534
        %v1539 = vld [vmem:[%s1453 + $0x1] sm:$0xff]
        %v1540 = vld [vmem:[%s1453 + $0x9] sm:$0x3f]
        %v1542 = vsel %vm194, %v1539, 0
        %v1545 = vsel %vm194, %v1540, 0
        %1547 = vmatprep.subr.mxu0 0.0
        %1548 = vmatpush1.msra.mxu0 0.0
        %1549 = vmatprep.subr.mxu0 0.0
        %1550 = vmatpush1.msra.mxu0 0.0
        %1551 = vmatprep.subr.mxu0 0.0
        %1552 = vmatpush1.msra.mxu0 0.0
        %1553 = vmatprep.subr.mxu0 0.0
        %1554 = vmatpush1.msra.mxu0 0.0
        %1555 = vmatprep.subr.mxu0 0.0
        %1556 = vmatpush1.msra.mxu0 0.0
        %1557 = vmatprep.subr.mxu0 0.0
        %1558 = vmatpush1.msra.mxu0 0.0
        %1559 = vmatprep.subr.mxu0 0.0
        %1560 = vmatpush1.msra.mxu0 0.0
        %1561 = vmatprep.subr.mxu0 0.0
        %1562 = vmatpush1.msra.mxu0 0.0
        %1563 = vmatprep.subr.mxu0 0.0
        %1564 = vmatpush1.msra.mxu0 0.0
        %1565 = vmatprep.subr.mxu0 0.0
        %1566 = vmatpush1.msra.mxu0 0.0
        %1567 = vmatprep.subr.mxu0 0.0
        %1568 = vmatpush1.msra.mxu0 0.0
        %1569 = vmatprep.subr.mxu0 0.0
        %1570 = vmatpush1.msra.mxu0 0.0
        %1571 = vmatprep.subr.mxu0 0.0
        %1572 = vmatpush1.msra.mxu0 %v819
        %1573 = vmatprep.subr.mxu0 0.0
        %1574 = vmatpush1.msra.mxu0 %v818
        %1575 = vmatprep.subr.mxu0 0.0
        %1576 = vmatpush1.msra.mxu0 %v817
        %1577 = vmatprep.subr.mxu0 0.0
        %1578 = vmatpush1.msra.mxu0 %v816
        %1579 = vmatprep.subr.mxu0 0.0
        %1580 = vmatpush2.msra.mxu0 0.0
        %1581 = vmatprep.subr.mxu0 0.0
        %1582 = vmatpush2.msra.mxu0 0.0
        %1583 = vmatprep.subr.mxu0 0.0
        %1584 = vmatpush2.msra.mxu0 0.0
        %1585 = vmatprep.subr.mxu0 0.0
        %1586 = vmatpush2.msra.mxu0 0.0
        %1587 = vmatprep.subr.mxu0 0.0
        %1588 = vmatpush2.msra.mxu0 0.0
        %1589 = vmatprep.subr.mxu0 0.0
        %1590 = vmatpush2.msra.mxu0 0.0
        %1591 = vmatprep.subr.mxu0 0.0
        %1592 = vmatpush2.msra.mxu0 0.0
        %1593 = vmatprep.subr.mxu0 0.0
        %1594 = vmatpush2.msra.mxu0 0.0
        %1595 = vmatprep.subr.mxu0 0.0
        %1596 = vmatpush2.msra.mxu0 0.0
        %1597 = vmatprep.subr.mxu0 0.0
        %1598 = vmatpush2.msra.mxu0 0.0
        %1599 = vmatprep.subr.mxu0 0.0
        %1600 = vmatpush2.msra.mxu0 0.0
        %1601 = vmatprep.subr.mxu0 0.0
        %1602 = vmatpush2.msra.mxu0 0.0
        %1603 = vmatprep.subr.mxu0 0.0
        %1604 = vmatpush2.msra.mxu0 0.0
        %1605 = vmatprep.subr.mxu0 0.0
        %1606 = vmatpush2.msra.mxu0 0.0
        %1607 = vmatprep.subr.mxu0 0.0
        %1608 = vmatpush2.msra.mxu0 0.0
        %1609 = vmatprep.subr.mxu0 0.0
        %1610 = vmatpush2.msra.mxu0 0.0
        %1611 = vmatprep.mubr.f32.mxu0 0.0
        %1612 = vmatmul.mubr.f32.gmra.mxu0 %v1542
        %v1613 = vpop.f32.mrf.mxu0
        %v1614 = vadd.f32 0.0, %v1613
        %v1615 = vpop.f32.mrf.mxu0
        %1616 = vmatprep.mubr.f32.mxu0 0.0
        %1617 = vmatmul.mubr.f32.gmra.mxu0 %v1545
        %v1618 = vpop.f32.mrf.mxu0
        %v1619 = vadd.f32 0.0, %v1618
        %v1620 = vpop.f32.mrf.mxu0
        %1621 = vdwg.mxu0
        %v1622 = vadd.f32 %v1537, %v1614
        %v1623 = vadd.f32 %v1538, %v1619
        %v1624 = vld [vmem:[%s1453 + $0x2] sm:$0xff]
        %v1625 = vld [vmem:[%s1453 + $0xa] sm:$0x3f]
        %v1627 = vsel %vm194, %v1624, 0
        %v1630 = vsel %vm194, %v1625, 0
        %1632 = vmatprep.subr.mxu0 0.0
        %1633 = vmatpush1.msra.mxu0 0.0
        %1634 = vmatprep.subr.mxu0 0.0
        %1635 = vmatpush1.msra.mxu0 0.0
        %1636 = vmatprep.subr.mxu0 0.0
        %1637 = vmatpush1.msra.mxu0 0.0
        %1638 = vmatprep.subr.mxu0 0.0
        %1639 = vmatpush1.msra.mxu0 0.0
        %1640 = vmatprep.subr.mxu0 0.0
        %1641 = vmatpush1.msra.mxu0 0.0
        %1642 = vmatprep.subr.mxu0 0.0
        %1643 = vmatpush1.msra.mxu0 0.0
        %1644 = vmatprep.subr.mxu0 0.0
        %1645 = vmatpush1.msra.mxu0 0.0
        %1646 = vmatprep.subr.mxu0 0.0
        %1647 = vmatpush1.msra.mxu0 0.0
        %1648 = vmatprep.subr.mxu0 0.0
        %1649 = vmatpush1.msra.mxu0 0.0
        %1650 = vmatprep.subr.mxu0 0.0
        %1651 = vmatpush1.msra.mxu0 0.0
        %1652 = vmatprep.subr.mxu0 0.0
        %1653 = vmatpush1.msra.mxu0 0.0
        %1654 = vmatprep.subr.mxu0 0.0
        %1655 = vmatpush1.msra.mxu0 0.0
        %1656 = vmatprep.subr.mxu0 0.0
        %1657 = vmatpush1.msra.mxu0 %v909
        %1658 = vmatprep.subr.mxu0 0.0
        %1659 = vmatpush1.msra.mxu0 %v908
        %1660 = vmatprep.subr.mxu0 0.0
        %1661 = vmatpush1.msra.mxu0 %v907
        %1662 = vmatprep.subr.mxu0 0.0
        %1663 = vmatpush1.msra.mxu0 %v906
        %1664 = vmatprep.subr.mxu0 0.0
        %1665 = vmatpush2.msra.mxu0 0.0
        %1666 = vmatprep.subr.mxu0 0.0
        %1667 = vmatpush2.msra.mxu0 0.0
        %1668 = vmatprep.subr.mxu0 0.0
        %1669 = vmatpush2.msra.mxu0 0.0
        %1670 = vmatprep.subr.mxu0 0.0
        %1671 = vmatpush2.msra.mxu0 0.0
        %1672 = vmatprep.subr.mxu0 0.0
        %1673 = vmatpush2.msra.mxu0 0.0
        %1674 = vmatprep.subr.mxu0 0.0
        %1675 = vmatpush2.msra.mxu0 0.0
        %1676 = vmatprep.subr.mxu0 0.0
        %1677 = vmatpush2.msra.mxu0 0.0
        %1678 = vmatprep.subr.mxu0 0.0
        %1679 = vmatpush2.msra.mxu0 0.0
        %1680 = vmatprep.subr.mxu0 0.0
        %1681 = vmatpush2.msra.mxu0 0.0
        %1682 = vmatprep.subr.mxu0 0.0
        %1683 = vmatpush2.msra.mxu0 0.0
        %1684 = vmatprep.subr.mxu0 0.0
        %1685 = vmatpush2.msra.mxu0 0.0
        %1686 = vmatprep.subr.mxu0 0.0
        %1687 = vmatpush2.msra.mxu0 0.0
        %1688 = vmatprep.subr.mxu0 0.0
        %1689 = vmatpush2.msra.mxu0 0.0
        %1690 = vmatprep.subr.mxu0 0.0
        %1691 = vmatpush2.msra.mxu0 0.0
        %1692 = vmatprep.subr.mxu0 0.0
        %1693 = vmatpush2.msra.mxu0 0.0
        %1694 = vmatprep.subr.mxu0 0.0
        %1695 = vmatpush2.msra.mxu0 0.0
        %1696 = vmatprep.mubr.f32.mxu0 0.0
        %1697 = vmatmul.mubr.f32.gmra.mxu0 %v1627
        %v1698 = vpop.f32.mrf.mxu0
        %v1699 = vadd.f32 0.0, %v1698
        %v1700 = vpop.f32.mrf.mxu0
        %1701 = vmatprep.mubr.f32.mxu0 0.0
        %1702 = vmatmul.mubr.f32.gmra.mxu0 %v1630
        %v1703 = vpop.f32.mrf.mxu0
        %v1704 = vadd.f32 0.0, %v1703
        %v1705 = vpop.f32.mrf.mxu0
        %1706 = vdwg.mxu0
        %v1707 = vadd.f32 %v1622, %v1699
        %v1708 = vadd.f32 %v1623, %v1704
        %v1709 = vmax.f32 %v991, %v1707
        %v1710 = vmax.f32 %v992, %v1708
        %v1712 = vlaneseq
        %v1713 = vshrl.u32 %v1712, 7
        %v1714 = vsub.s32 0, %v1713
        %v1715 = vrot.slane %v171, %v1714
        %v1717 = vadd.f32 %v1709, %v1715
        %v1718 = vadd.f32 %v1710, %v1715
        %v1719 = vmax.f32 %v1717, 0.0
        %v1720 = vmax.f32 %v1718, 0.0
        %vm1721 = vcmask 523264
        %1722 = vst.msk [vmem:[#allocation2] sm:$0xff] %vm1721, %v1719
        %vm1723 = vcmask 521216
        %1724 = vst.msk [vmem:[#allocation2 + $0x8] sm:$0x3f] %vm1723, %v1720
        %v1725 = vld [vmem:[#allocation2] ss:$2 sm:$0x7f]
        %s1726 = scalar_lea.vmem [#allocation2], 1
        %v1727 = vld [vmem:[%s1726] ss:$2 sm:$0x7f]
        %v1728 = vmax.f32 %v1725, %v1727
        %s1729 = smul.u32 %s173, 8
        %s1730 = scalar_lea.vmem %s170, %s1729
        %vm1731 = vcmask 522240
        %1732 = vst.msk [vmem:[%s1730] sm:$0x7f] %vm1731, %v1728
      $region37: #{conv_test_net_forward.4} parent=31 // loop_footer
        %s177 = sadd.s32 1, %s173
      $region38: #{conv_test_net_forward.4} parent=31 // loop_footer_branch
        %172 = sbr.rel target = $region34
      $region39: #{conv_test_net_forward.4} parent=31 // loop_exit
        _
      %p1733 = scmp.lt.s32.totalorder %s14, 1
      %s1734 = scalar_select %p1733, %s14, 1
      %s1735 = smul.addr %s1734, 7
      %s1736 = smul.addr %s1735, 8
      %s1737 = scalar_lea.vmem %s3, %s1736
      // Predicated region
      $region40: #{conv_test_net_forward.4} parent=31 // pred_check
        %p1738 = pneg %p100
      $region41: #{conv_test_net_forward.4} parent=31 // pred_check_branch
        %1740 = sbr.rel (%p1738) target = $region43
      $region42: #{conv_test_net_forward.4} parent=31 // pred_region
        _
      $region43: #{conv_test_net_forward.4} parent=31 // pred_fallthru
        _
    $region32: #{conv_test_net_forward.4} parent=5 // pred_fallthru
      _
    %p1741 = scmp.le.s32.totalorder 2, %s9
    // Predicated region
    $region44: #{conv_test_net_forward.4} parent=5 // pred_check
      %p1742 = pneg %p1741
    $region45: #{conv_test_net_forward.4} parent=5 // pred_check_branch
      %1744 = sbr.rel (%p1742) target = $region47
    $region46: #{conv_test_net_forward.4} parent=5 // pred_region
      %s1745 = ssub.s32 %s9, 2
      // Predicated region
      $region48: #{conv_test_net_forward.4} parent=46 // pred_check
        %p1746 = pneg %p106
      $region49: #{conv_test_net_forward.4} parent=46 // pred_check_branch
        %1748 = sbr.rel (%p1746) target = $region51
      $region50: #{conv_test_net_forward.4} parent=46 // pred_region
        %p1749 = scmp.lt.s32.totalorder %s15, 1
        %s1750 = scalar_select %p1749, %s15, 1
        %s1751 = smul.addr %s1750, 7
        %s1752 = smul.addr %s1751, 8
        %s1753 = scalar_lea.vmem %s3, %s1752
      $region51: #{conv_test_net_forward.4} parent=46 // pred_fallthru
        _
    $region47: #{conv_test_net_forward.4} parent=5 // pred_fallthru
      _
  $region6: #{conv_test_net_forward.4} parent=0 // loop_footer
    %s13 = sadd.s32 1, %s9
  $region7: #{conv_test_net_forward.4} parent=0 // loop_footer_branch
    %8 = sbr.rel target = $region3
  $region8: #{conv_test_net_forward.4} parent=0 // loop_exit
    _

// kernel: conv_test_net_forward.5
$region0: #{conv_test_net_forward.5}
  #allocation0 [shape = 'u32[]', space=smem, size = 0x4, offset = 0x4, fixed_abs, tag = 'smem constant byte address 0x4 - core index']
  #allocation1 [shape = 'u32[144,128]{1,0:T(1,128)}', space=vmem, size = 0x12000, scoped, tag = 'internal scratch']
  %s0 = inlined_call_operand.vmem [shape: f32[16,3136], index: 0, kind: input, shape index: {}]
  %s1 = inlined_call_operand.vmem [shape: f32[3136,128], index: 1, kind: input, shape index: {}]
  %s2 = inlined_call_operand.vmem [shape: f32[1,128], index: 2, kind: input, shape index: {}]
  %s3 = inlined_call_operand.vmem [shape: f32[128,10], index: 3, kind: input, shape index: {}]
  %s4 = inlined_call_operand.vmem [shape: f32[1,10], index: 4, kind: input, shape index: {}]
  %s5 = inlined_call_operand.vmem [shape: f32[16,10], index: 5, kind: output, shape index: {}]
  %s6 = sld [smem:[#allocation0]]
  $region53: #{conv_test_net_forward.5} parent=0
    _
  %s8 = ssub.s32 1, %s6
  %s9 = scalar_select 0, %s8, %s6
  loop: start=0, step=1, limit=4
  $region2: #{conv_test_net_forward.5} parent=0 // loop_pre_header
    _
  $region3: #{conv_test_net_forward.5} parent=0 // loop_header
    %s11 = sphi 0, %s15
    %p12 = scmp.ge.s32.totalorder %s11, 4
    %s21 = sphi 0, %s23
    %s24 = sphi 0, %s21
    %s25 = sphi 0, %s24
    %s41 = sphi 0, %s25
    %s45 = sphi 0, %s45
    %s47 = sphi 0, %s45
    %s48 = sphi 0, %s47
    %s62 = sphi 0, %s48
    %s66 = sphi 0, %s66
    %s68 = sphi 0, %s66
    %s69 = sphi 0, %s68
    %s83 = sphi 0, %s69
    %s87 = sphi 0, %s87
    %s89 = sphi 0, %s87
    %s90 = sphi 0, %s89
    %s104 = sphi 0, %s90
    %s108 = sphi 0, %s108
    %s110 = sphi 0, %s108
    %s111 = sphi 0, %s110
    %s125 = sphi 0, %s111
    %s131 = sphi 0, %s133
    %s134 = sphi 0, %s131
    %s135 = sphi 0, %s134
    %s151 = sphi 0, %s135
  $region4: #{conv_test_net_forward.5} parent=0 // loop_header_branch
    %14 = sbr.rel (%p12) target = $region8
  $region5: #{conv_test_net_forward.5} parent=0 // loop_body
    %s16 = ssub.s32 %s11, 1
    %s17 = ssub.s32 %s11, 2
    %s18 = sadd.s32 %s11, 1
    %s19 = ssub.s32 %s11, %s18
    %p20 = scmp.eq.s32.totalorder %s19, 0
    %s22 = sadd.s32 %s21, 1
    %s23 = scalar_select %p20, %s21, %s22
    %p26 = pneg %p20
    %p27 = scmp.eq.s32.totalorder %s11, 1
    %p28 = por %p26, %p27
    %p29 = scmp.ne.s32.totalorder %s21, %s24
    %p30 = scmp.eq.s32.totalorder %s11, 0
    %p31 = por %p29, %p30
    %p32 = scmp.ne.s32.totalorder %s21, %s24
    %p33 = scmp.eq.s32.totalorder %s16, 1
    %p34 = por %p32, %p33
    %p35 = scmp.ne.s32.totalorder %s24, %s25
    %p36 = scmp.eq.s32.totalorder %s16, 0
    %p37 = por %p35, %p36
    %p38 = scmp.ne.s32.totalorder %s24, %s25
    %p39 = scmp.eq.s32.totalorder %s17, 1
    %p40 = por %p38, %p39
    %p42 = scmp.ne.s32.totalorder %s25, %s41
    %p43 = scmp.eq.s32.totalorder %s17, 0
    %p44 = por %p42, %p43
    %s46 = sadd.s32 %s45, 1
    %p49 = scmp.eq.s32.totalorder %s11, 1
    %p50 = scmp.ne.s32.totalorder %s45, %s47
    %p51 = scmp.eq.s32.totalorder %s11, 0
    %p52 = por %p50, %p51
    %p53 = scmp.ne.s32.totalorder %s45, %s47
    %p54 = scmp.eq.s32.totalorder %s16, 1
    %p55 = por %p53, %p54
    %p56 = scmp.ne.s32.totalorder %s47, %s48
    %p57 = scmp.eq.s32.totalorder %s16, 0
    %p58 = por %p56, %p57
    %p59 = scmp.ne.s32.totalorder %s47, %s48
    %p60 = scmp.eq.s32.totalorder %s17, 1
    %p61 = por %p59, %p60
    %p63 = scmp.ne.s32.totalorder %s48, %s62
    %p64 = scmp.eq.s32.totalorder %s17, 0
    %p65 = por %p63, %p64
    %s67 = sadd.s32 %s66, 1
    %p70 = scmp.eq.s32.totalorder %s11, 1
    %p71 = scmp.ne.s32.totalorder %s66, %s68
    %p72 = scmp.eq.s32.totalorder %s11, 0
    %p73 = por %p71, %p72
    %p74 = scmp.ne.s32.totalorder %s66, %s68
    %p75 = scmp.eq.s32.totalorder %s16, 1
    %p76 = por %p74, %p75
    %p77 = scmp.ne.s32.totalorder %s68, %s69
    %p78 = scmp.eq.s32.totalorder %s16, 0
    %p79 = por %p77, %p78
    %p80 = scmp.ne.s32.totalorder %s68, %s69
    %p81 = scmp.eq.s32.totalorder %s17, 1
    %p82 = por %p80, %p81
    %p84 = scmp.ne.s32.totalorder %s69, %s83
    %p85 = scmp.eq.s32.totalorder %s17, 0
    %p86 = por %p84, %p85
    %s88 = sadd.s32 %s87, 1
    %p91 = scmp.eq.s32.totalorder %s11, 1
    %p92 = scmp.ne.s32.totalorder %s87, %s89
    %p93 = scmp.eq.s32.totalorder %s11, 0
    %p94 = por %p92, %p93
    %p95 = scmp.ne.s32.totalorder %s87, %s89
    %p96 = scmp.eq.s32.totalorder %s16, 1
    %p97 = por %p95, %p96
    %p98 = scmp.ne.s32.totalorder %s89, %s90
    %p99 = scmp.eq.s32.totalorder %s16, 0
    %p100 = por %p98, %p99
    %p101 = scmp.ne.s32.totalorder %s89, %s90
    %p102 = scmp.eq.s32.totalorder %s17, 1
    %p103 = por %p101, %p102
    %p105 = scmp.ne.s32.totalorder %s90, %s104
    %p106 = scmp.eq.s32.totalorder %s17, 0
    %p107 = por %p105, %p106
    %s109 = sadd.s32 %s108, 1
    %p112 = scmp.eq.s32.totalorder %s11, 1
    %p113 = scmp.ne.s32.totalorder %s108, %s110
    %p114 = scmp.eq.s32.totalorder %s11, 0
    %p115 = por %p113, %p114
    %p116 = scmp.ne.s32.totalorder %s108, %s110
    %p117 = scmp.eq.s32.totalorder %s16, 1
    %p118 = por %p116, %p117
    %p119 = scmp.ne.s32.totalorder %s110, %s111
    %p120 = scmp.eq.s32.totalorder %s16, 0
    %p121 = por %p119, %p120
    %p122 = scmp.ne.s32.totalorder %s110, %s111
    %p123 = scmp.eq.s32.totalorder %s17, 1
    %p124 = por %p122, %p123
    %p126 = scmp.ne.s32.totalorder %s111, %s125
    %p127 = scmp.eq.s32.totalorder %s17, 0
    %p128 = por %p126, %p127
    %s129 = ssub.s32 %s11, %s18
    %p130 = scmp.eq.s32.totalorder %s129, 0
    %s132 = sadd.s32 %s131, 1
    %s133 = scalar_select %p130, %s131, %s132
    %p136 = pneg %p130
    %p137 = scmp.eq.s32.totalorder %s11, 1
    %p138 = por %p136, %p137
    %p139 = scmp.ne.s32.totalorder %s131, %s134
    %p140 = scmp.eq.s32.totalorder %s11, 0
    %p141 = por %p139, %p140
    %p142 = scmp.ne.s32.totalorder %s131, %s134
    %p143 = scmp.eq.s32.totalorder %s16, 1
    %p144 = por %p142, %p143
    %p145 = scmp.ne.s32.totalorder %s134, %s135
    %p146 = scmp.eq.s32.totalorder %s16, 0
    %p147 = por %p145, %p146
    %p148 = scmp.ne.s32.totalorder %s134, %s135
    %p149 = scmp.eq.s32.totalorder %s17, 1
    %p150 = por %p148, %p149
    %p152 = scmp.ne.s32.totalorder %s135, %s151
    %p153 = scmp.eq.s32.totalorder %s17, 0
    %p154 = por %p152, %p153
    %p155 = scmp.le.s32.totalorder 1, %s11
    %p156 = scmp.lt.s32.totalorder %s11, 3
    %p157 = pnand %p155, %p156
    %p158 = pneg %p157
    // Predicated region
    $region9: #{conv_test_net_forward.5} parent=5 // pred_check
      _
    $region10: #{conv_test_net_forward.5} parent=5 // pred_check_branch
      %160 = sbr.rel (%p157) target = $region12
    $region11: #{conv_test_net_forward.5} parent=5 // pred_region
      %s161 = ssub.s32 %s11, 1
      // Predicated region
      $region13: #{conv_test_net_forward.5} parent=11 // pred_check
        %p162 = pneg %p58
      $region14: #{conv_test_net_forward.5} parent=11 // pred_check_branch
        %164 = sbr.rel (%p162) target = $region16
      $region15: #{conv_test_net_forward.5} parent=11 // pred_region
        _
      $region16: #{conv_test_net_forward.5} parent=11 // pred_fallthru
        _
      // Predicated region
      $region17: #{conv_test_net_forward.5} parent=11 // pred_check
        %p165 = pneg %p79
      $region18: #{conv_test_net_forward.5} parent=11 // pred_check_branch
        %167 = sbr.rel (%p165) target = $region20
      $region19: #{conv_test_net_forward.5} parent=11 // pred_region
        _
      $region20: #{conv_test_net_forward.5} parent=11 // pred_fallthru
        _
      // Predicated region
      $region21: #{conv_test_net_forward.5} parent=11 // pred_check
        %p168 = pneg %p100
      $region22: #{conv_test_net_forward.5} parent=11 // pred_check_branch
        %170 = sbr.rel (%p168) target = $region24
      $region23: #{conv_test_net_forward.5} parent=11 // pred_region
        _
      $region24: #{conv_test_net_forward.5} parent=11 // pred_fallthru
        _
      // Predicated region
      $region25: #{conv_test_net_forward.5} parent=11 // pred_check
        %p171 = pneg %p121
      $region26: #{conv_test_net_forward.5} parent=11 // pred_check_branch
        %173 = sbr.rel (%p171) target = $region28
      $region27: #{conv_test_net_forward.5} parent=11 // pred_region
        _
      $region28: #{conv_test_net_forward.5} parent=11 // pred_fallthru
        _
    $region12: #{conv_test_net_forward.5} parent=5 // pred_fallthru
      _
    %p174 = scmp.lt.s32.totalorder %s11, 2
    // Predicated region
    $region29: #{conv_test_net_forward.5} parent=5 // pred_check
      %p175 = pneg %p174
    $region30: #{conv_test_net_forward.5} parent=5 // pred_check_branch
      %177 = sbr.rel (%p175) target = $region32
    $region31: #{conv_test_net_forward.5} parent=5 // pred_region
      // Predicated region
      $region33: #{conv_test_net_forward.5} parent=31 // pred_check
        %p178 = pneg %p31
      $region34: #{conv_test_net_forward.5} parent=31 // pred_check_branch
        %180 = sbr.rel (%p178) target = $region36
      $region35: #{conv_test_net_forward.5} parent=31 // pred_region
        %p181 = scmp.lt.s32.totalorder %s11, 1
        %s182 = scalar_select %p181, %s11, 1
        %s183 = smul.addr %s182, 25
        %s184 = smul.addr %s183, 8
        %s185 = scalar_lea.vmem %s0, %s184
      $region36: #{conv_test_net_forward.5} parent=31 // pred_fallthru
        _
    $region32: #{conv_test_net_forward.5} parent=5 // pred_fallthru
      _
    %p186 = scmp.le.s32.totalorder 1, %s11
    %p187 = scmp.lt.s32.totalorder %s11, 3
    %p188 = pnand %p186, %p187
    %p189 = pneg %p188
    // Predicated region
    $region37: #{conv_test_net_forward.5} parent=5 // pred_check
      _
    $region38: #{conv_test_net_forward.5} parent=5 // pred_check_branch
      %191 = sbr.rel (%p188) target = $region40
    $region39: #{conv_test_net_forward.5} parent=5 // pred_region
      %s192 = ssub.s32 %s11, 1
      %p193 = scmp.lt.s32.totalorder %s16, 1
      %s194 = scalar_select %p193, %s16, 1
      %s195 = smul.addr %s194, 25
      %s196 = smul.addr %s195, 8
      %s197 = scalar_lea.vmem %s0, %s196
      %p198 = pneg %p37
      %p199 = pneg %p34
      %p200 = pneg %p58
      %p201 = pneg %p55
      %p202 = pneg %p79
      %p203 = pneg %p76
      %p204 = pneg %p100
      %p205 = pneg %p97
      %p206 = pneg %p121
      %p207 = pneg %p118
      %p208 = pneg %p147
      %p209 = pneg %p144
      %p210 = scmp.lt.s32.totalorder %s16, 1
      %s211 = scalar_select %p210, %s16, 1
      %s212 = smul.addr %s211, 8
      %s213 = scalar_lea.vmem %s5, %s212
      %p214 = scmp.lt.s32.totalorder %s16, 1
      %s215 = scalar_select %p214, %s16, 1
      %s216 = smul.addr %s215, 25
      %s217 = smul.addr %s216, 8
      %s218 = scalar_lea.vmem %s0, %s217
      %p219 = scmp.lt.s32.totalorder %s16, 1
      %s220 = scalar_select %p219, %s16, 1
      %s221 = smul.addr %s220, 8
      %s222 = scalar_lea.vmem %s5, %s221
      %v223 = vld [vmem:[%s218] sm:$0xff]
      %v224 = vld [vmem:[%s218 + $0x8] sm:$0xff]
      %v225 = vld [vmem:[%s218 + $0x10] sm:$0xff]
      %v226 = vld [vmem:[%s218 + $0x18] sm:$0xff]
      %v227 = vld [vmem:[%s218 + $0x20] sm:$0xff]
      %v228 = vld [vmem:[%s218 + $0x28] sm:$0xff]
      %v229 = vld [vmem:[%s218 + $0x30] sm:$0xff]
      %v230 = vld [vmem:[%s218 + $0x38] sm:$0xff]
      %v231 = vld [vmem:[%s218 + $0x40] sm:$0xff]
      %v232 = vld [vmem:[%s218 + $0x48] sm:$0xff]
      %v233 = vld [vmem:[%s218 + $0x50] sm:$0xff]
      %v234 = vld [vmem:[%s218 + $0x58] sm:$0xff]
      %v235 = vld [vmem:[%s218 + $0x60] sm:$0xff]
      %v236 = vld [vmem:[%s218 + $0x68] sm:$0xff]
      %v237 = vld [vmem:[%s218 + $0x70] sm:$0xff]
      %v238 = vld [vmem:[%s218 + $0x78] sm:$0xff]
      %v239 = vld [vmem:[%s218 + $0x80] sm:$0xff]
      %v240 = vld [vmem:[%s218 + $0x88] sm:$0xff]
      %v241 = vld [vmem:[%s218 + $0x90] sm:$0xff]
      %v242 = vld [vmem:[%s218 + $0x98] sm:$0xff]
      %v243 = vld [vmem:[%s218 + $0xa0] sm:$0xff]
      %v244 = vld [vmem:[%s218 + $0xa8] sm:$0xff]
      %v245 = vld [vmem:[%s218 + $0xb0] sm:$0xff]
      %v246 = vld [vmem:[%s218 + $0xb8] sm:$0xff]
      %v247 = vld [vmem:[%s218 + $0xc0] sm:$0xff]
      %v248 = vld [vmem:[%s1] sm:$0xff]
      %v249 = vld [vmem:[%s1 + $0x8] sm:$0xff]
      %v250 = vld [vmem:[%s1 + $0x10] sm:$0xff]
      %v251 = vld [vmem:[%s1 + $0x18] sm:$0xff]
      %v252 = vld [vmem:[%s1 + $0x20] sm:$0xff]
      %v253 = vld [vmem:[%s1 + $0x28] sm:$0xff]
      %v254 = vld [vmem:[%s1 + $0x30] sm:$0xff]
      %v255 = vld [vmem:[%s1 + $0x38] sm:$0xff]
      %v256 = vld [vmem:[%s1 + $0x40] sm:$0xff]
      %v257 = vld [vmem:[%s1 + $0x48] sm:$0xff]
      %v258 = vld [vmem:[%s1 + $0x50] sm:$0xff]
      %v259 = vld [vmem:[%s1 + $0x58] sm:$0xff]
      %v260 = vld [vmem:[%s1 + $0x60] sm:$0xff]
      %v261 = vld [vmem:[%s1 + $0x68] sm:$0xff]
      %v262 = vld [vmem:[%s1 + $0x70] sm:$0xff]
      %v263 = vld [vmem:[%s1 + $0x78] sm:$0xff]
      %v264 = vld [vmem:[%s1 + $0x80] sm:$0xff]
      %v265 = vld [vmem:[%s1 + $0x88] sm:$0xff]
      %v266 = vld [vmem:[%s1 + $0x90] sm:$0xff]
      %v267 = vld [vmem:[%s1 + $0x98] sm:$0xff]
      %v268 = vld [vmem:[%s1 + $0xa0] sm:$0xff]
      %v269 = vld [vmem:[%s1 + $0xa8] sm:$0xff]
      %v270 = vld [vmem:[%s1 + $0xb0] sm:$0xff]
      %v271 = vld [vmem:[%s1 + $0xb8] sm:$0xff]
      %v272 = vld [vmem:[%s1 + $0xc0] sm:$0xff]
      %v273 = vld [vmem:[%s1 + $0xc8] sm:$0xff]
      %v274 = vld [vmem:[%s1 + $0xd0] sm:$0xff]
      %v275 = vld [vmem:[%s1 + $0xd8] sm:$0xff]
      %v276 = vld [vmem:[%s1 + $0xe0] sm:$0xff]
      %v277 = vld [vmem:[%s1 + $0xe8] sm:$0xff]
      %v278 = vld [vmem:[%s1 + $0xf0] sm:$0xff]
      %v279 = vld [vmem:[%s1 + $0xf8] sm:$0xff]
      %v280 = vld [vmem:[%s1 + $0x100] sm:$0xff]
      %v281 = vld [vmem:[%s1 + $0x108] sm:$0xff]
      %v282 = vld [vmem:[%s1 + $0x110] sm:$0xff]
      %v283 = vld [vmem:[%s1 + $0x118] sm:$0xff]
      %v284 = vld [vmem:[%s1 + $0x120] sm:$0xff]
      %v285 = vld [vmem:[%s1 + $0x128] sm:$0xff]
      %v286 = vld [vmem:[%s1 + $0x130] sm:$0xff]
      %v287 = vld [vmem:[%s1 + $0x138] sm:$0xff]
      %v288 = vld [vmem:[%s1 + $0x140] sm:$0xff]
      %v289 = vld [vmem:[%s1 + $0x148] sm:$0xff]
      %v290 = vld [vmem:[%s1 + $0x150] sm:$0xff]
      %v291 = vld [vmem:[%s1 + $0x158] sm:$0xff]
      %v292 = vld [vmem:[%s1 + $0x160] sm:$0xff]
      %v293 = vld [vmem:[%s1 + $0x168] sm:$0xff]
      %v294 = vld [vmem:[%s1 + $0x170] sm:$0xff]
      %v295 = vld [vmem:[%s1 + $0x178] sm:$0xff]
      %v296 = vld [vmem:[%s1 + $0x180] sm:$0xff]
      %v297 = vld [vmem:[%s1 + $0x188] sm:$0xff]
      %v298 = vld [vmem:[%s1 + $0x190] sm:$0xff]
      %v299 = vld [vmem:[%s1 + $0x198] sm:$0xff]
      %v300 = vld [vmem:[%s1 + $0x1a0] sm:$0xff]
      %v301 = vld [vmem:[%s1 + $0x1a8] sm:$0xff]
      %v302 = vld [vmem:[%s1 + $0x1b0] sm:$0xff]
      %v303 = vld [vmem:[%s1 + $0x1b8] sm:$0xff]
      %v304 = vld [vmem:[%s1 + $0x1c0] sm:$0xff]
      %v305 = vld [vmem:[%s1 + $0x1c8] sm:$0xff]
      %v306 = vld [vmem:[%s1 + $0x1d0] sm:$0xff]
      %v307 = vld [vmem:[%s1 + $0x1d8] sm:$0xff]
      %v308 = vld [vmem:[%s1 + $0x1e0] sm:$0xff]
      %v309 = vld [vmem:[%s1 + $0x1e8] sm:$0xff]
      %v310 = vld [vmem:[%s1 + $0x1f0] sm:$0xff]
      %v311 = vld [vmem:[%s1 + $0x1f8] sm:$0xff]
      %v312 = vld [vmem:[%s1 + $0x200] sm:$0xff]
      %v313 = vld [vmem:[%s1 + $0x208] sm:$0xff]
      %v314 = vld [vmem:[%s1 + $0x210] sm:$0xff]
      %v315 = vld [vmem:[%s1 + $0x218] sm:$0xff]
      %v316 = vld [vmem:[%s1 + $0x220] sm:$0xff]
      %v317 = vld [vmem:[%s1 + $0x228] sm:$0xff]
      %v318 = vld [vmem:[%s1 + $0x230] sm:$0xff]
      %v319 = vld [vmem:[%s1 + $0x238] sm:$0xff]
      %v320 = vld [vmem:[%s1 + $0x240] sm:$0xff]
      %v321 = vld [vmem:[%s1 + $0x248] sm:$0xff]
      %v322 = vld [vmem:[%s1 + $0x250] sm:$0xff]
      %v323 = vld [vmem:[%s1 + $0x258] sm:$0xff]
      %v324 = vld [vmem:[%s1 + $0x260] sm:$0xff]
      %v325 = vld [vmem:[%s1 + $0x268] sm:$0xff]
      %v326 = vld [vmem:[%s1 + $0x270] sm:$0xff]
      %v327 = vld [vmem:[%s1 + $0x278] sm:$0xff]
      %v328 = vld [vmem:[%s1 + $0x280] sm:$0xff]
      %v329 = vld [vmem:[%s1 + $0x288] sm:$0xff]
      %v330 = vld [vmem:[%s1 + $0x290] sm:$0xff]
      %v331 = vld [vmem:[%s1 + $0x298] sm:$0xff]
      %v332 = vld [vmem:[%s1 + $0x2a0] sm:$0xff]
      %v333 = vld [vmem:[%s1 + $0x2a8] sm:$0xff]
      %v334 = vld [vmem:[%s1 + $0x2b0] sm:$0xff]
      %v335 = vld [vmem:[%s1 + $0x2b8] sm:$0xff]
      %v336 = vld [vmem:[%s1 + $0x2c0] sm:$0xff]
      %v337 = vld [vmem:[%s1 + $0x2c8] sm:$0xff]
      %v338 = vld [vmem:[%s1 + $0x2d0] sm:$0xff]
      %v339 = vld [vmem:[%s1 + $0x2d8] sm:$0xff]
      %v340 = vld [vmem:[%s1 + $0x2e0] sm:$0xff]
      %v341 = vld [vmem:[%s1 + $0x2e8] sm:$0xff]
      %v342 = vld [vmem:[%s1 + $0x2f0] sm:$0xff]
      %v343 = vld [vmem:[%s1 + $0x2f8] sm:$0xff]
      %v344 = vld [vmem:[%s1 + $0x300] sm:$0xff]
      %v345 = vld [vmem:[%s1 + $0x308] sm:$0xff]
      %v346 = vld [vmem:[%s1 + $0x310] sm:$0xff]
      %v347 = vld [vmem:[%s1 + $0x318] sm:$0xff]
      %v348 = vld [vmem:[%s1 + $0x320] sm:$0xff]
      %v349 = vld [vmem:[%s1 + $0x328] sm:$0xff]
      %v350 = vld [vmem:[%s1 + $0x330] sm:$0xff]
      %v351 = vld [vmem:[%s1 + $0x338] sm:$0xff]
      %v352 = vld [vmem:[%s1 + $0x340] sm:$0xff]
      %v353 = vld [vmem:[%s1 + $0x348] sm:$0xff]
      %v354 = vld [vmem:[%s1 + $0x350] sm:$0xff]
      %v355 = vld [vmem:[%s1 + $0x358] sm:$0xff]
      %v356 = vld [vmem:[%s1 + $0x360] sm:$0xff]
      %v357 = vld [vmem:[%s1 + $0x368] sm:$0xff]
      %v358 = vld [vmem:[%s1 + $0x370] sm:$0xff]
      %v359 = vld [vmem:[%s1 + $0x378] sm:$0xff]
      %v360 = vld [vmem:[%s1 + $0x380] sm:$0xff]
      %v361 = vld [vmem:[%s1 + $0x388] sm:$0xff]
      %v362 = vld [vmem:[%s1 + $0x390] sm:$0xff]
      %v363 = vld [vmem:[%s1 + $0x398] sm:$0xff]
      %v364 = vld [vmem:[%s1 + $0x3a0] sm:$0xff]
      %v365 = vld [vmem:[%s1 + $0x3a8] sm:$0xff]
      %v366 = vld [vmem:[%s1 + $0x3b0] sm:$0xff]
      %v367 = vld [vmem:[%s1 + $0x3b8] sm:$0xff]
      %v368 = vld [vmem:[%s1 + $0x3c0] sm:$0xff]
      %v369 = vld [vmem:[%s1 + $0x3c8] sm:$0xff]
      %v370 = vld [vmem:[%s1 + $0x3d0] sm:$0xff]
      %v371 = vld [vmem:[%s1 + $0x3d8] sm:$0xff]
      %v372 = vld [vmem:[%s1 + $0x3e0] sm:$0xff]
      %v373 = vld [vmem:[%s1 + $0x3e8] sm:$0xff]
      %v374 = vld [vmem:[%s1 + $0x3f0] sm:$0xff]
      %v375 = vld [vmem:[%s1 + $0x3f8] sm:$0xff]
      %v376 = vld [vmem:[%s1 + $0x400] sm:$0xff]
      %v377 = vld [vmem:[%s1 + $0x408] sm:$0xff]
      %v378 = vld [vmem:[%s1 + $0x410] sm:$0xff]
      %v379 = vld [vmem:[%s1 + $0x418] sm:$0xff]
      %v380 = vld [vmem:[%s1 + $0x420] sm:$0xff]
      %v381 = vld [vmem:[%s1 + $0x428] sm:$0xff]
      %v382 = vld [vmem:[%s1 + $0x430] sm:$0xff]
      %v383 = vld [vmem:[%s1 + $0x438] sm:$0xff]
      %v384 = vld [vmem:[%s1 + $0x440] sm:$0xff]
      %v385 = vld [vmem:[%s1 + $0x448] sm:$0xff]
      %v386 = vld [vmem:[%s1 + $0x450] sm:$0xff]
      %v387 = vld [vmem:[%s1 + $0x458] sm:$0xff]
      %v388 = vld [vmem:[%s1 + $0x460] sm:$0xff]
      %v389 = vld [vmem:[%s1 + $0x468] sm:$0xff]
      %v390 = vld [vmem:[%s1 + $0x470] sm:$0xff]
      %v391 = vld [vmem:[%s1 + $0x478] sm:$0xff]
      %v392 = vld [vmem:[%s1 + $0x480] sm:$0xff]
      %v393 = vld [vmem:[%s1 + $0x488] sm:$0xff]
      %v394 = vld [vmem:[%s1 + $0x490] sm:$0xff]
      %v395 = vld [vmem:[%s1 + $0x498] sm:$0xff]
      %v396 = vld [vmem:[%s1 + $0x4a0] sm:$0xff]
      %v397 = vld [vmem:[%s1 + $0x4a8] sm:$0xff]
      %v398 = vld [vmem:[%s1 + $0x4b0] sm:$0xff]
      %v399 = vld [vmem:[%s1 + $0x4b8] sm:$0xff]
      %v400 = vld [vmem:[%s1 + $0x4c0] sm:$0xff]
      %v401 = vld [vmem:[%s1 + $0x4c8] sm:$0xff]
      %v402 = vld [vmem:[%s1 + $0x4d0] sm:$0xff]
      %v403 = vld [vmem:[%s1 + $0x4d8] sm:$0xff]
      %v404 = vld [vmem:[%s1 + $0x4e0] sm:$0xff]
      %v405 = vld [vmem:[%s1 + $0x4e8] sm:$0xff]
      %v406 = vld [vmem:[%s1 + $0x4f0] sm:$0xff]
      %v407 = vld [vmem:[%s1 + $0x4f8] sm:$0xff]
      %v408 = vld [vmem:[%s1 + $0x500] sm:$0xff]
      %v409 = vld [vmem:[%s1 + $0x508] sm:$0xff]
      %v410 = vld [vmem:[%s1 + $0x510] sm:$0xff]
      %v411 = vld [vmem:[%s1 + $0x518] sm:$0xff]
      %v412 = vld [vmem:[%s1 + $0x520] sm:$0xff]
      %v413 = vld [vmem:[%s1 + $0x528] sm:$0xff]
      %v414 = vld [vmem:[%s1 + $0x530] sm:$0xff]
      %v415 = vld [vmem:[%s1 + $0x538] sm:$0xff]
      %v416 = vld [vmem:[%s1 + $0x540] sm:$0xff]
      %v417 = vld [vmem:[%s1 + $0x548] sm:$0xff]
      %v418 = vld [vmem:[%s1 + $0x550] sm:$0xff]
      %v419 = vld [vmem:[%s1 + $0x558] sm:$0xff]
      %v420 = vld [vmem:[%s1 + $0x560] sm:$0xff]
      %v421 = vld [vmem:[%s1 + $0x568] sm:$0xff]
      %v422 = vld [vmem:[%s1 + $0x570] sm:$0xff]
      %v423 = vld [vmem:[%s1 + $0x578] sm:$0xff]
      %v424 = vld [vmem:[%s1 + $0x580] sm:$0xff]
      %v425 = vld [vmem:[%s1 + $0x588] sm:$0xff]
      %v426 = vld [vmem:[%s1 + $0x590] sm:$0xff]
      %v427 = vld [vmem:[%s1 + $0x598] sm:$0xff]
      %v428 = vld [vmem:[%s1 + $0x5a0] sm:$0xff]
      %v429 = vld [vmem:[%s1 + $0x5a8] sm:$0xff]
      %v430 = vld [vmem:[%s1 + $0x5b0] sm:$0xff]
      %v431 = vld [vmem:[%s1 + $0x5b8] sm:$0xff]
      %v432 = vld [vmem:[%s1 + $0x5c0] sm:$0xff]
      %v433 = vld [vmem:[%s1 + $0x5c8] sm:$0xff]
      %v434 = vld [vmem:[%s1 + $0x5d0] sm:$0xff]
      %v435 = vld [vmem:[%s1 + $0x5d8] sm:$0xff]
      %v436 = vld [vmem:[%s1 + $0x5e0] sm:$0xff]
      %v437 = vld [vmem:[%s1 + $0x5e8] sm:$0xff]
      %v438 = vld [vmem:[%s1 + $0x5f0] sm:$0xff]
      %v439 = vld [vmem:[%s1 + $0x5f8] sm:$0xff]
      %v440 = vld [vmem:[%s1 + $0x600] sm:$0xff]
      %v441 = vld [vmem:[%s1 + $0x608] sm:$0xff]
      %v442 = vld [vmem:[%s1 + $0x610] sm:$0xff]
      %v443 = vld [vmem:[%s1 + $0x618] sm:$0xff]
      %v444 = vld [vmem:[%s1 + $0x620] sm:$0xff]
      %v445 = vld [vmem:[%s1 + $0x628] sm:$0xff]
      %v446 = vld [vmem:[%s1 + $0x630] sm:$0xff]
      %v447 = vld [vmem:[%s1 + $0x638] sm:$0xff]
      %v448 = vld [vmem:[%s1 + $0x640] sm:$0xff]
      %v449 = vld [vmem:[%s1 + $0x648] sm:$0xff]
      %v450 = vld [vmem:[%s1 + $0x650] sm:$0xff]
      %v451 = vld [vmem:[%s1 + $0x658] sm:$0xff]
      %v452 = vld [vmem:[%s1 + $0x660] sm:$0xff]
      %v453 = vld [vmem:[%s1 + $0x668] sm:$0xff]
      %v454 = vld [vmem:[%s1 + $0x670] sm:$0xff]
      %v455 = vld [vmem:[%s1 + $0x678] sm:$0xff]
      %v456 = vld [vmem:[%s1 + $0x680] sm:$0xff]
      %v457 = vld [vmem:[%s1 + $0x688] sm:$0xff]
      %v458 = vld [vmem:[%s1 + $0x690] sm:$0xff]
      %v459 = vld [vmem:[%s1 + $0x698] sm:$0xff]
      %v460 = vld [vmem:[%s1 + $0x6a0] sm:$0xff]
      %v461 = vld [vmem:[%s1 + $0x6a8] sm:$0xff]
      %v462 = vld [vmem:[%s1 + $0x6b0] sm:$0xff]
      %v463 = vld [vmem:[%s1 + $0x6b8] sm:$0xff]
      %v464 = vld [vmem:[%s1 + $0x6c0] sm:$0xff]
      %v465 = vld [vmem:[%s1 + $0x6c8] sm:$0xff]
      %v466 = vld [vmem:[%s1 + $0x6d0] sm:$0xff]
      %v467 = vld [vmem:[%s1 + $0x6d8] sm:$0xff]
      %v468 = vld [vmem:[%s1 + $0x6e0] sm:$0xff]
      %v469 = vld [vmem:[%s1 + $0x6e8] sm:$0xff]
      %v470 = vld [vmem:[%s1 + $0x6f0] sm:$0xff]
      %v471 = vld [vmem:[%s1 + $0x6f8] sm:$0xff]
      %v472 = vld [vmem:[%s1 + $0x700] sm:$0xff]
      %v473 = vld [vmem:[%s1 + $0x708] sm:$0xff]
      %v474 = vld [vmem:[%s1 + $0x710] sm:$0xff]
      %v475 = vld [vmem:[%s1 + $0x718] sm:$0xff]
      %v476 = vld [vmem:[%s1 + $0x720] sm:$0xff]
      %v477 = vld [vmem:[%s1 + $0x728] sm:$0xff]
      %v478 = vld [vmem:[%s1 + $0x730] sm:$0xff]
      %v479 = vld [vmem:[%s1 + $0x738] sm:$0xff]
      %v480 = vld [vmem:[%s1 + $0x740] sm:$0xff]
      %v481 = vld [vmem:[%s1 + $0x748] sm:$0xff]
      %v482 = vld [vmem:[%s1 + $0x750] sm:$0xff]
      %v483 = vld [vmem:[%s1 + $0x758] sm:$0xff]
      %v484 = vld [vmem:[%s1 + $0x760] sm:$0xff]
      %v485 = vld [vmem:[%s1 + $0x768] sm:$0xff]
      %v486 = vld [vmem:[%s1 + $0x770] sm:$0xff]
      %v487 = vld [vmem:[%s1 + $0x778] sm:$0xff]
      %v488 = vld [vmem:[%s1 + $0x780] sm:$0xff]
      %v489 = vld [vmem:[%s1 + $0x788] sm:$0xff]
      %v490 = vld [vmem:[%s1 + $0x790] sm:$0xff]
      %v491 = vld [vmem:[%s1 + $0x798] sm:$0xff]
      %v492 = vld [vmem:[%s1 + $0x7a0] sm:$0xff]
      %v493 = vld [vmem:[%s1 + $0x7a8] sm:$0xff]
      %v494 = vld [vmem:[%s1 + $0x7b0] sm:$0xff]
      %v495 = vld [vmem:[%s1 + $0x7b8] sm:$0xff]
      %v496 = vld [vmem:[%s1 + $0x7c0] sm:$0xff]
      %v497 = vld [vmem:[%s1 + $0x7c8] sm:$0xff]
      %v498 = vld [vmem:[%s1 + $0x7d0] sm:$0xff]
      %v499 = vld [vmem:[%s1 + $0x7d8] sm:$0xff]
      %v500 = vld [vmem:[%s1 + $0x7e0] sm:$0xff]
      %v501 = vld [vmem:[%s1 + $0x7e8] sm:$0xff]
      %v502 = vld [vmem:[%s1 + $0x7f0] sm:$0xff]
      %v503 = vld [vmem:[%s1 + $0x7f8] sm:$0xff]
      %v504 = vld [vmem:[%s1 + $0x800] sm:$0xff]
      %v505 = vld [vmem:[%s1 + $0x808] sm:$0xff]
      %v506 = vld [vmem:[%s1 + $0x810] sm:$0xff]
      %v507 = vld [vmem:[%s1 + $0x818] sm:$0xff]
      %v508 = vld [vmem:[%s1 + $0x820] sm:$0xff]
      %v509 = vld [vmem:[%s1 + $0x828] sm:$0xff]
      %v510 = vld [vmem:[%s1 + $0x830] sm:$0xff]
      %v511 = vld [vmem:[%s1 + $0x838] sm:$0xff]
      %v512 = vld [vmem:[%s1 + $0x840] sm:$0xff]
      %v513 = vld [vmem:[%s1 + $0x848] sm:$0xff]
      %v514 = vld [vmem:[%s1 + $0x850] sm:$0xff]
      %v515 = vld [vmem:[%s1 + $0x858] sm:$0xff]
      %v516 = vld [vmem:[%s1 + $0x860] sm:$0xff]
      %v517 = vld [vmem:[%s1 + $0x868] sm:$0xff]
      %v518 = vld [vmem:[%s1 + $0x870] sm:$0xff]
      %v519 = vld [vmem:[%s1 + $0x878] sm:$0xff]
      %v520 = vld [vmem:[%s1 + $0x880] sm:$0xff]
      %v521 = vld [vmem:[%s1 + $0x888] sm:$0xff]
      %v522 = vld [vmem:[%s1 + $0x890] sm:$0xff]
      %v523 = vld [vmem:[%s1 + $0x898] sm:$0xff]
      %v524 = vld [vmem:[%s1 + $0x8a0] sm:$0xff]
      %v525 = vld [vmem:[%s1 + $0x8a8] sm:$0xff]
      %v526 = vld [vmem:[%s1 + $0x8b0] sm:$0xff]
      %v527 = vld [vmem:[%s1 + $0x8b8] sm:$0xff]
      %v528 = vld [vmem:[%s1 + $0x8c0] sm:$0xff]
      %v529 = vld [vmem:[%s1 + $0x8c8] sm:$0xff]
      %v530 = vld [vmem:[%s1 + $0x8d0] sm:$0xff]
      %v531 = vld [vmem:[%s1 + $0x8d8] sm:$0xff]
      %v532 = vld [vmem:[%s1 + $0x8e0] sm:$0xff]
      %v533 = vld [vmem:[%s1 + $0x8e8] sm:$0xff]
      %v534 = vld [vmem:[%s1 + $0x8f0] sm:$0xff]
      %v535 = vld [vmem:[%s1 + $0x8f8] sm:$0xff]
      %v536 = vld [vmem:[%s1 + $0x900] sm:$0xff]
      %v537 = vld [vmem:[%s1 + $0x908] sm:$0xff]
      %v538 = vld [vmem:[%s1 + $0x910] sm:$0xff]
      %v539 = vld [vmem:[%s1 + $0x918] sm:$0xff]
      %v540 = vld [vmem:[%s1 + $0x920] sm:$0xff]
      %v541 = vld [vmem:[%s1 + $0x928] sm:$0xff]
      %v542 = vld [vmem:[%s1 + $0x930] sm:$0xff]
      %v543 = vld [vmem:[%s1 + $0x938] sm:$0xff]
      %v544 = vld [vmem:[%s1 + $0x940] sm:$0xff]
      %v545 = vld [vmem:[%s1 + $0x948] sm:$0xff]
      %v546 = vld [vmem:[%s1 + $0x950] sm:$0xff]
      %v547 = vld [vmem:[%s1 + $0x958] sm:$0xff]
      %v548 = vld [vmem:[%s1 + $0x960] sm:$0xff]
      %v549 = vld [vmem:[%s1 + $0x968] sm:$0xff]
      %v550 = vld [vmem:[%s1 + $0x970] sm:$0xff]
      %v551 = vld [vmem:[%s1 + $0x978] sm:$0xff]
      %v552 = vld [vmem:[%s1 + $0x980] sm:$0xff]
      %v553 = vld [vmem:[%s1 + $0x988] sm:$0xff]
      %v554 = vld [vmem:[%s1 + $0x990] sm:$0xff]
      %v555 = vld [vmem:[%s1 + $0x998] sm:$0xff]
      %v556 = vld [vmem:[%s1 + $0x9a0] sm:$0xff]
      %v557 = vld [vmem:[%s1 + $0x9a8] sm:$0xff]
      %v558 = vld [vmem:[%s1 + $0x9b0] sm:$0xff]
      %v559 = vld [vmem:[%s1 + $0x9b8] sm:$0xff]
      %v560 = vld [vmem:[%s1 + $0x9c0] sm:$0xff]
      %v561 = vld [vmem:[%s1 + $0x9c8] sm:$0xff]
      %v562 = vld [vmem:[%s1 + $0x9d0] sm:$0xff]
      %v563 = vld [vmem:[%s1 + $0x9d8] sm:$0xff]
      %v564 = vld [vmem:[%s1 + $0x9e0] sm:$0xff]
      %v565 = vld [vmem:[%s1 + $0x9e8] sm:$0xff]
      %v566 = vld [vmem:[%s1 + $0x9f0] sm:$0xff]
      %v567 = vld [vmem:[%s1 + $0x9f8] sm:$0xff]
      %v568 = vld [vmem:[%s1 + $0xa00] sm:$0xff]
      %v569 = vld [vmem:[%s1 + $0xa08] sm:$0xff]
      %v570 = vld [vmem:[%s1 + $0xa10] sm:$0xff]
      %v571 = vld [vmem:[%s1 + $0xa18] sm:$0xff]
      %v572 = vld [vmem:[%s1 + $0xa20] sm:$0xff]
      %v573 = vld [vmem:[%s1 + $0xa28] sm:$0xff]
      %v574 = vld [vmem:[%s1 + $0xa30] sm:$0xff]
      %v575 = vld [vmem:[%s1 + $0xa38] sm:$0xff]
      %v576 = vld [vmem:[%s1 + $0xa40] sm:$0xff]
      %v577 = vld [vmem:[%s1 + $0xa48] sm:$0xff]
      %v578 = vld [vmem:[%s1 + $0xa50] sm:$0xff]
      %v579 = vld [vmem:[%s1 + $0xa58] sm:$0xff]
      %v580 = vld [vmem:[%s1 + $0xa60] sm:$0xff]
      %v581 = vld [vmem:[%s1 + $0xa68] sm:$0xff]
      %v582 = vld [vmem:[%s1 + $0xa70] sm:$0xff]
      %v583 = vld [vmem:[%s1 + $0xa78] sm:$0xff]
      %v584 = vld [vmem:[%s1 + $0xa80] sm:$0xff]
      %v585 = vld [vmem:[%s1 + $0xa88] sm:$0xff]
      %v586 = vld [vmem:[%s1 + $0xa90] sm:$0xff]
      %v587 = vld [vmem:[%s1 + $0xa98] sm:$0xff]
      %v588 = vld [vmem:[%s1 + $0xaa0] sm:$0xff]
      %v589 = vld [vmem:[%s1 + $0xaa8] sm:$0xff]
      %v590 = vld [vmem:[%s1 + $0xab0] sm:$0xff]
      %v591 = vld [vmem:[%s1 + $0xab8] sm:$0xff]
      %v592 = vld [vmem:[%s1 + $0xac0] sm:$0xff]
      %v593 = vld [vmem:[%s1 + $0xac8] sm:$0xff]
      %v594 = vld [vmem:[%s1 + $0xad0] sm:$0xff]
      %v595 = vld [vmem:[%s1 + $0xad8] sm:$0xff]
      %v596 = vld [vmem:[%s1 + $0xae0] sm:$0xff]
      %v597 = vld [vmem:[%s1 + $0xae8] sm:$0xff]
      %v598 = vld [vmem:[%s1 + $0xaf0] sm:$0xff]
      %v599 = vld [vmem:[%s1 + $0xaf8] sm:$0xff]
      %v600 = vld [vmem:[%s1 + $0xb00] sm:$0xff]
      %v601 = vld [vmem:[%s1 + $0xb08] sm:$0xff]
      %v602 = vld [vmem:[%s1 + $0xb10] sm:$0xff]
      %v603 = vld [vmem:[%s1 + $0xb18] sm:$0xff]
      %v604 = vld [vmem:[%s1 + $0xb20] sm:$0xff]
      %v605 = vld [vmem:[%s1 + $0xb28] sm:$0xff]
      %v606 = vld [vmem:[%s1 + $0xb30] sm:$0xff]
      %v607 = vld [vmem:[%s1 + $0xb38] sm:$0xff]
      %v608 = vld [vmem:[%s1 + $0xb40] sm:$0xff]
      %v609 = vld [vmem:[%s1 + $0xb48] sm:$0xff]
      %v610 = vld [vmem:[%s1 + $0xb50] sm:$0xff]
      %v611 = vld [vmem:[%s1 + $0xb58] sm:$0xff]
      %v612 = vld [vmem:[%s1 + $0xb60] sm:$0xff]
      %v613 = vld [vmem:[%s1 + $0xb68] sm:$0xff]
      %v614 = vld [vmem:[%s1 + $0xb70] sm:$0xff]
      %v615 = vld [vmem:[%s1 + $0xb78] sm:$0xff]
      %v616 = vld [vmem:[%s1 + $0xb80] sm:$0xff]
      %v617 = vld [vmem:[%s1 + $0xb88] sm:$0xff]
      %v618 = vld [vmem:[%s1 + $0xb90] sm:$0xff]
      %v619 = vld [vmem:[%s1 + $0xb98] sm:$0xff]
      %v620 = vld [vmem:[%s1 + $0xba0] sm:$0xff]
      %v621 = vld [vmem:[%s1 + $0xba8] sm:$0xff]
      %v622 = vld [vmem:[%s1 + $0xbb0] sm:$0xff]
      %v623 = vld [vmem:[%s1 + $0xbb8] sm:$0xff]
      %v624 = vld [vmem:[%s1 + $0xbc0] sm:$0xff]
      %v625 = vld [vmem:[%s1 + $0xbc8] sm:$0xff]
      %v626 = vld [vmem:[%s1 + $0xbd0] sm:$0xff]
      %v627 = vld [vmem:[%s1 + $0xbd8] sm:$0xff]
      %v628 = vld [vmem:[%s1 + $0xbe0] sm:$0xff]
      %v629 = vld [vmem:[%s1 + $0xbe8] sm:$0xff]
      %v630 = vld [vmem:[%s1 + $0xbf0] sm:$0xff]
      %v631 = vld [vmem:[%s1 + $0xbf8] sm:$0xff]
      %v632 = vld [vmem:[%s1 + $0xc00] sm:$0xff]
      %v633 = vld [vmem:[%s1 + $0xc08] sm:$0xff]
      %v634 = vld [vmem:[%s1 + $0xc10] sm:$0xff]
      %v635 = vld [vmem:[%s1 + $0xc18] sm:$0xff]
      %v636 = vld [vmem:[%s1 + $0xc20] sm:$0xff]
      %v637 = vld [vmem:[%s1 + $0xc28] sm:$0xff]
      %v638 = vld [vmem:[%s1 + $0xc30] sm:$0xff]
      %v639 = vld [vmem:[%s1 + $0xc38] sm:$0xff]
      %v640 = vld [vmem:[%s2] sm:$0x1]
      %v642 = vlaneseq
      %v643 = vshrl.u32 %v642, 7
      %v644 = vsub.s32 0, %v643
      %v645 = vrot.slane %v640, %v644
      %vm647 = vcmask 523264
      %v649 = vsel %vm647, %v247, 0
      %651 = vmatprep.subr.mxu0 0.0
      %652 = vmatpush1.msra.mxu0 %v263
      %653 = vmatprep.subr.mxu0 0.0
      %654 = vmatpush1.msra.mxu0 %v262
      %655 = vmatprep.subr.mxu0 0.0
      %656 = vmatpush1.msra.mxu0 %v261
      %657 = vmatprep.subr.mxu0 0.0
      %658 = vmatpush1.msra.mxu0 %v260
      %659 = vmatprep.subr.mxu0 0.0
      %660 = vmatpush1.msra.mxu0 %v259
      %661 = vmatprep.subr.mxu0 0.0
      %662 = vmatpush1.msra.mxu0 %v258
      %663 = vmatprep.subr.mxu0 0.0
      %664 = vmatpush1.msra.mxu0 %v257
      %665 = vmatprep.subr.mxu0 0.0
      %666 = vmatpush1.msra.mxu0 %v256
      %667 = vmatprep.subr.mxu0 0.0
      %668 = vmatpush1.msra.mxu0 %v255
      %669 = vmatprep.subr.mxu0 0.0
      %670 = vmatpush1.msra.mxu0 %v254
      %671 = vmatprep.subr.mxu0 0.0
      %672 = vmatpush1.msra.mxu0 %v253
      %673 = vmatprep.subr.mxu0 0.0
      %674 = vmatpush1.msra.mxu0 %v252
      %675 = vmatprep.subr.mxu0 0.0
      %676 = vmatpush1.msra.mxu0 %v251
      %677 = vmatprep.subr.mxu0 0.0
      %678 = vmatpush1.msra.mxu0 %v250
      %679 = vmatprep.subr.mxu0 0.0
      %680 = vmatpush1.msra.mxu0 %v249
      %681 = vmatprep.subr.mxu0 0.0
      %682 = vmatpush1.msra.mxu0 %v248
      %683 = vmatprep.subr.mxu0 0.0
      %684 = vmatpush2.msra.mxu0 %v279
      %685 = vmatprep.subr.mxu0 0.0
      %686 = vmatpush2.msra.mxu0 %v278
      %687 = vmatprep.subr.mxu0 0.0
      %688 = vmatpush2.msra.mxu0 %v277
      %689 = vmatprep.subr.mxu0 0.0
      %690 = vmatpush2.msra.mxu0 %v276
      %691 = vmatprep.subr.mxu0 0.0
      %692 = vmatpush2.msra.mxu0 %v275
      %693 = vmatprep.subr.mxu0 0.0
      %694 = vmatpush2.msra.mxu0 %v274
      %695 = vmatprep.subr.mxu0 0.0
      %696 = vmatpush2.msra.mxu0 %v273
      %697 = vmatprep.subr.mxu0 0.0
      %698 = vmatpush2.msra.mxu0 %v272
      %699 = vmatprep.subr.mxu0 0.0
      %700 = vmatpush2.msra.mxu0 %v271
      %701 = vmatprep.subr.mxu0 0.0
      %702 = vmatpush2.msra.mxu0 %v270
      %703 = vmatprep.subr.mxu0 0.0
      %704 = vmatpush2.msra.mxu0 %v269
      %705 = vmatprep.subr.mxu0 0.0
      %706 = vmatpush2.msra.mxu0 %v268
      %707 = vmatprep.subr.mxu0 0.0
      %708 = vmatpush2.msra.mxu0 %v267
      %709 = vmatprep.subr.mxu0 0.0
      %710 = vmatpush2.msra.mxu0 %v266
      %711 = vmatprep.subr.mxu0 0.0
      %712 = vmatpush2.msra.mxu0 %v265
      %713 = vmatprep.subr.mxu0 0.0
      %714 = vmatpush2.msra.mxu0 %v264
      %715 = vmatprep.mubr.f32.mxu0 %v224
      %716 = vmatmul.mubr.f32.gmra.mxu0 %v223
      %v717 = vpop.f32.mrf.mxu0
      %v718 = vadd.f32 %v645, %v717
      %v719 = vpop.f32.mrf.mxu0
      %720 = vdwg.mxu0
      %721 = vmatprep.subr.mxu0 0.0
      %722 = vmatpush1.msra.mxu0 %v295
      %723 = vmatprep.subr.mxu0 0.0
      %724 = vmatpush1.msra.mxu0 %v294
      %725 = vmatprep.subr.mxu0 0.0
      %726 = vmatpush1.msra.mxu0 %v293
      %727 = vmatprep.subr.mxu0 0.0
      %728 = vmatpush1.msra.mxu0 %v292
      %729 = vmatprep.subr.mxu0 0.0
      %730 = vmatpush1.msra.mxu0 %v291
      %731 = vmatprep.subr.mxu0 0.0
      %732 = vmatpush1.msra.mxu0 %v290
      %733 = vmatprep.subr.mxu0 0.0
      %734 = vmatpush1.msra.mxu0 %v289
      %735 = vmatprep.subr.mxu0 0.0
      %736 = vmatpush1.msra.mxu0 %v288
      %737 = vmatprep.subr.mxu0 0.0
      %738 = vmatpush1.msra.mxu0 %v287
      %739 = vmatprep.subr.mxu0 0.0
      %740 = vmatpush1.msra.mxu0 %v286
      %741 = vmatprep.subr.mxu0 0.0
      %742 = vmatpush1.msra.mxu0 %v285
      %743 = vmatprep.subr.mxu0 0.0
      %744 = vmatpush1.msra.mxu0 %v284
      %745 = vmatprep.subr.mxu0 0.0
      %746 = vmatpush1.msra.mxu0 %v283
      %747 = vmatprep.subr.mxu0 0.0
      %748 = vmatpush1.msra.mxu0 %v282
      %749 = vmatprep.subr.mxu0 0.0
      %750 = vmatpush1.msra.mxu0 %v281
      %751 = vmatprep.subr.mxu0 0.0
      %752 = vmatpush1.msra.mxu0 %v280
      %753 = vmatprep.subr.mxu0 0.0
      %754 = vmatpush2.msra.mxu0 %v311
      %755 = vmatprep.subr.mxu0 0.0
      %756 = vmatpush2.msra.mxu0 %v310
      %757 = vmatprep.subr.mxu0 0.0
      %758 = vmatpush2.msra.mxu0 %v309
      %759 = vmatprep.subr.mxu0 0.0
      %760 = vmatpush2.msra.mxu0 %v308
      %761 = vmatprep.subr.mxu0 0.0
      %762 = vmatpush2.msra.mxu0 %v307
      %763 = vmatprep.subr.mxu0 0.0
      %764 = vmatpush2.msra.mxu0 %v306
      %765 = vmatprep.subr.mxu0 0.0
      %766 = vmatpush2.msra.mxu0 %v305
      %767 = vmatprep.subr.mxu0 0.0
      %768 = vmatpush2.msra.mxu0 %v304
      %769 = vmatprep.subr.mxu0 0.0
      %770 = vmatpush2.msra.mxu0 %v303
      %771 = vmatprep.subr.mxu0 0.0
      %772 = vmatpush2.msra.mxu0 %v302
      %773 = vmatprep.subr.mxu0 0.0
      %774 = vmatpush2.msra.mxu0 %v301
      %775 = vmatprep.subr.mxu0 0.0
      %776 = vmatpush2.msra.mxu0 %v300
      %777 = vmatprep.subr.mxu0 0.0
      %778 = vmatpush2.msra.mxu0 %v299
      %779 = vmatprep.subr.mxu0 0.0
      %780 = vmatpush2.msra.mxu0 %v298
      %781 = vmatprep.subr.mxu0 0.0
      %782 = vmatpush2.msra.mxu0 %v297
      %783 = vmatprep.subr.mxu0 0.0
      %784 = vmatpush2.msra.mxu0 %v296
      %785 = vmatprep.mubr.f32.mxu0 %v226
      %786 = vmatmul.mubr.f32.gmra.mxu0 %v225
      %v787 = vpop.f32.mrf.mxu0
      %v788 = vadd.f32 %v718, %v787
      %v789 = vpop.f32.mrf.mxu0
      %790 = vdwg.mxu0
      %791 = vmatprep.subr.mxu0 0.0
      %792 = vmatpush1.msra.mxu0 %v327
      %793 = vmatprep.subr.mxu0 0.0
      %794 = vmatpush1.msra.mxu0 %v326
      %795 = vmatprep.subr.mxu0 0.0
      %796 = vmatpush1.msra.mxu0 %v325
      %797 = vmatprep.subr.mxu0 0.0
      %798 = vmatpush1.msra.mxu0 %v324
      %799 = vmatprep.subr.mxu0 0.0
      %800 = vmatpush1.msra.mxu0 %v323
      %801 = vmatprep.subr.mxu0 0.0
      %802 = vmatpush1.msra.mxu0 %v322
      %803 = vmatprep.subr.mxu0 0.0
      %804 = vmatpush1.msra.mxu0 %v321
      %805 = vmatprep.subr.mxu0 0.0
      %806 = vmatpush1.msra.mxu0 %v320
      %807 = vmatprep.subr.mxu0 0.0
      %808 = vmatpush1.msra.mxu0 %v319
      %809 = vmatprep.subr.mxu0 0.0
      %810 = vmatpush1.msra.mxu0 %v318
      %811 = vmatprep.subr.mxu0 0.0
      %812 = vmatpush1.msra.mxu0 %v317
      %813 = vmatprep.subr.mxu0 0.0
      %814 = vmatpush1.msra.mxu0 %v316
      %815 = vmatprep.subr.mxu0 0.0
      %816 = vmatpush1.msra.mxu0 %v315
      %817 = vmatprep.subr.mxu0 0.0
      %818 = vmatpush1.msra.mxu0 %v314
      %819 = vmatprep.subr.mxu0 0.0
      %820 = vmatpush1.msra.mxu0 %v313
      %821 = vmatprep.subr.mxu0 0.0
      %822 = vmatpush1.msra.mxu0 %v312
      %823 = vmatprep.subr.mxu0 0.0
      %824 = vmatpush2.msra.mxu0 %v343
      %825 = vmatprep.subr.mxu0 0.0
      %826 = vmatpush2.msra.mxu0 %v342
      %827 = vmatprep.subr.mxu0 0.0
      %828 = vmatpush2.msra.mxu0 %v341
      %829 = vmatprep.subr.mxu0 0.0
      %830 = vmatpush2.msra.mxu0 %v340
      %831 = vmatprep.subr.mxu0 0.0
      %832 = vmatpush2.msra.mxu0 %v339
      %833 = vmatprep.subr.mxu0 0.0
      %834 = vmatpush2.msra.mxu0 %v338
      %835 = vmatprep.subr.mxu0 0.0
      %836 = vmatpush2.msra.mxu0 %v337
      %837 = vmatprep.subr.mxu0 0.0
      %838 = vmatpush2.msra.mxu0 %v336
      %839 = vmatprep.subr.mxu0 0.0
      %840 = vmatpush2.msra.mxu0 %v335
      %841 = vmatprep.subr.mxu0 0.0
      %842 = vmatpush2.msra.mxu0 %v334
      %843 = vmatprep.subr.mxu0 0.0
      %844 = vmatpush2.msra.mxu0 %v333
      %845 = vmatprep.subr.mxu0 0.0
      %846 = vmatpush2.msra.mxu0 %v332
      %847 = vmatprep.subr.mxu0 0.0
      %848 = vmatpush2.msra.mxu0 %v331
      %849 = vmatprep.subr.mxu0 0.0
      %850 = vmatpush2.msra.mxu0 %v330
      %851 = vmatprep.subr.mxu0 0.0
      %852 = vmatpush2.msra.mxu0 %v329
      %853 = vmatprep.subr.mxu0 0.0
      %854 = vmatpush2.msra.mxu0 %v328
      %855 = vmatprep.mubr.f32.mxu0 %v228
      %856 = vmatmul.mubr.f32.gmra.mxu0 %v227
      %v857 = vpop.f32.mrf.mxu0
      %v858 = vadd.f32 %v788, %v857
      %v859 = vpop.f32.mrf.mxu0
      %860 = vdwg.mxu0
      %861 = vmatprep.subr.mxu0 0.0
      %862 = vmatpush1.msra.mxu0 %v359
      %863 = vmatprep.subr.mxu0 0.0
      %864 = vmatpush1.msra.mxu0 %v358
      %865 = vmatprep.subr.mxu0 0.0
      %866 = vmatpush1.msra.mxu0 %v357
      %867 = vmatprep.subr.mxu0 0.0
      %868 = vmatpush1.msra.mxu0 %v356
      %869 = vmatprep.subr.mxu0 0.0
      %870 = vmatpush1.msra.mxu0 %v355
      %871 = vmatprep.subr.mxu0 0.0
      %872 = vmatpush1.msra.mxu0 %v354
      %873 = vmatprep.subr.mxu0 0.0
      %874 = vmatpush1.msra.mxu0 %v353
      %875 = vmatprep.subr.mxu0 0.0
      %876 = vmatpush1.msra.mxu0 %v352
      %877 = vmatprep.subr.mxu0 0.0
      %878 = vmatpush1.msra.mxu0 %v351
      %879 = vmatprep.subr.mxu0 0.0
      %880 = vmatpush1.msra.mxu0 %v350
      %881 = vmatprep.subr.mxu0 0.0
      %882 = vmatpush1.msra.mxu0 %v349
      %883 = vmatprep.subr.mxu0 0.0
      %884 = vmatpush1.msra.mxu0 %v348
      %885 = vmatprep.subr.mxu0 0.0
      %886 = vmatpush1.msra.mxu0 %v347
      %887 = vmatprep.subr.mxu0 0.0
      %888 = vmatpush1.msra.mxu0 %v346
      %889 = vmatprep.subr.mxu0 0.0
      %890 = vmatpush1.msra.mxu0 %v345
      %891 = vmatprep.subr.mxu0 0.0
      %892 = vmatpush1.msra.mxu0 %v344
      %893 = vmatprep.subr.mxu0 0.0
      %894 = vmatpush2.msra.mxu0 %v375
      %895 = vmatprep.subr.mxu0 0.0
      %896 = vmatpush2.msra.mxu0 %v374
      %897 = vmatprep.subr.mxu0 0.0
      %898 = vmatpush2.msra.mxu0 %v373
      %899 = vmatprep.subr.mxu0 0.0
      %900 = vmatpush2.msra.mxu0 %v372
      %901 = vmatprep.subr.mxu0 0.0
      %902 = vmatpush2.msra.mxu0 %v371
      %903 = vmatprep.subr.mxu0 0.0
      %904 = vmatpush2.msra.mxu0 %v370
      %905 = vmatprep.subr.mxu0 0.0
      %906 = vmatpush2.msra.mxu0 %v369
      %907 = vmatprep.subr.mxu0 0.0
      %908 = vmatpush2.msra.mxu0 %v368
      %909 = vmatprep.subr.mxu0 0.0
      %910 = vmatpush2.msra.mxu0 %v367
      %911 = vmatprep.subr.mxu0 0.0
      %912 = vmatpush2.msra.mxu0 %v366
      %913 = vmatprep.subr.mxu0 0.0
      %914 = vmatpush2.msra.mxu0 %v365
      %915 = vmatprep.subr.mxu0 0.0
      %916 = vmatpush2.msra.mxu0 %v364
      %917 = vmatprep.subr.mxu0 0.0
      %918 = vmatpush2.msra.mxu0 %v363
      %919 = vmatprep.subr.mxu0 0.0
      %920 = vmatpush2.msra.mxu0 %v362
      %921 = vmatprep.subr.mxu0 0.0
      %922 = vmatpush2.msra.mxu0 %v361
      %923 = vmatprep.subr.mxu0 0.0
      %924 = vmatpush2.msra.mxu0 %v360
      %925 = vmatprep.mubr.f32.mxu0 %v230
      %926 = vmatmul.mubr.f32.gmra.mxu0 %v229
      %v927 = vpop.f32.mrf.mxu0
      %v928 = vadd.f32 %v858, %v927
      %v929 = vpop.f32.mrf.mxu0
      %930 = vdwg.mxu0
      %931 = vmatprep.subr.mxu0 0.0
      %932 = vmatpush1.msra.mxu0 %v391
      %933 = vmatprep.subr.mxu0 0.0
      %934 = vmatpush1.msra.mxu0 %v390
      %935 = vmatprep.subr.mxu0 0.0
      %936 = vmatpush1.msra.mxu0 %v389
      %937 = vmatprep.subr.mxu0 0.0
      %938 = vmatpush1.msra.mxu0 %v388
      %939 = vmatprep.subr.mxu0 0.0
      %940 = vmatpush1.msra.mxu0 %v387
      %941 = vmatprep.subr.mxu0 0.0
      %942 = vmatpush1.msra.mxu0 %v386
      %943 = vmatprep.subr.mxu0 0.0
      %944 = vmatpush1.msra.mxu0 %v385
      %945 = vmatprep.subr.mxu0 0.0
      %946 = vmatpush1.msra.mxu0 %v384
      %947 = vmatprep.subr.mxu0 0.0
      %948 = vmatpush1.msra.mxu0 %v383
      %949 = vmatprep.subr.mxu0 0.0
      %950 = vmatpush1.msra.mxu0 %v382
      %951 = vmatprep.subr.mxu0 0.0
      %952 = vmatpush1.msra.mxu0 %v381
      %953 = vmatprep.subr.mxu0 0.0
      %954 = vmatpush1.msra.mxu0 %v380
      %955 = vmatprep.subr.mxu0 0.0
      %956 = vmatpush1.msra.mxu0 %v379
      %957 = vmatprep.subr.mxu0 0.0
      %958 = vmatpush1.msra.mxu0 %v378
      %959 = vmatprep.subr.mxu0 0.0
      %960 = vmatpush1.msra.mxu0 %v377
      %961 = vmatprep.subr.mxu0 0.0
      %962 = vmatpush1.msra.mxu0 %v376
      %963 = vmatprep.subr.mxu0 0.0
      %964 = vmatpush2.msra.mxu0 %v407
      %965 = vmatprep.subr.mxu0 0.0
      %966 = vmatpush2.msra.mxu0 %v406
      %967 = vmatprep.subr.mxu0 0.0
      %968 = vmatpush2.msra.mxu0 %v405
      %969 = vmatprep.subr.mxu0 0.0
      %970 = vmatpush2.msra.mxu0 %v404
      %971 = vmatprep.subr.mxu0 0.0
      %972 = vmatpush2.msra.mxu0 %v403
      %973 = vmatprep.subr.mxu0 0.0
      %974 = vmatpush2.msra.mxu0 %v402
      %975 = vmatprep.subr.mxu0 0.0
      %976 = vmatpush2.msra.mxu0 %v401
      %977 = vmatprep.subr.mxu0 0.0
      %978 = vmatpush2.msra.mxu0 %v400
      %979 = vmatprep.subr.mxu0 0.0
      %980 = vmatpush2.msra.mxu0 %v399
      %981 = vmatprep.subr.mxu0 0.0
      %982 = vmatpush2.msra.mxu0 %v398
      %983 = vmatprep.subr.mxu0 0.0
      %984 = vmatpush2.msra.mxu0 %v397
      %985 = vmatprep.subr.mxu0 0.0
      %986 = vmatpush2.msra.mxu0 %v396
      %987 = vmatprep.subr.mxu0 0.0
      %988 = vmatpush2.msra.mxu0 %v395
      %989 = vmatprep.subr.mxu0 0.0
      %990 = vmatpush2.msra.mxu0 %v394
      %991 = vmatprep.subr.mxu0 0.0
      %992 = vmatpush2.msra.mxu0 %v393
      %993 = vmatprep.subr.mxu0 0.0
      %994 = vmatpush2.msra.mxu0 %v392
      %995 = vmatprep.mubr.f32.mxu0 %v232
      %996 = vmatmul.mubr.f32.gmra.mxu0 %v231
      %v997 = vpop.f32.mrf.mxu0
      %v998 = vadd.f32 %v928, %v997
      %v999 = vpop.f32.mrf.mxu0
      %1000 = vdwg.mxu0
      %1001 = vmatprep.subr.mxu0 0.0
      %1002 = vmatpush1.msra.mxu0 %v423
      %1003 = vmatprep.subr.mxu0 0.0
      %1004 = vmatpush1.msra.mxu0 %v422
      %1005 = vmatprep.subr.mxu0 0.0
      %1006 = vmatpush1.msra.mxu0 %v421
      %1007 = vmatprep.subr.mxu0 0.0
      %1008 = vmatpush1.msra.mxu0 %v420
      %1009 = vmatprep.subr.mxu0 0.0
      %1010 = vmatpush1.msra.mxu0 %v419
      %1011 = vmatprep.subr.mxu0 0.0
      %1012 = vmatpush1.msra.mxu0 %v418
      %1013 = vmatprep.subr.mxu0 0.0
      %1014 = vmatpush1.msra.mxu0 %v417
      %1015 = vmatprep.subr.mxu0 0.0
      %1016 = vmatpush1.msra.mxu0 %v416
      %1017 = vmatprep.subr.mxu0 0.0
      %1018 = vmatpush1.msra.mxu0 %v415
      %1019 = vmatprep.subr.mxu0 0.0
      %1020 = vmatpush1.msra.mxu0 %v414
      %1021 = vmatprep.subr.mxu0 0.0
      %1022 = vmatpush1.msra.mxu0 %v413
      %1023 = vmatprep.subr.mxu0 0.0
      %1024 = vmatpush1.msra.mxu0 %v412
      %1025 = vmatprep.subr.mxu0 0.0
      %1026 = vmatpush1.msra.mxu0 %v411
      %1027 = vmatprep.subr.mxu0 0.0
      %1028 = vmatpush1.msra.mxu0 %v410
      %1029 = vmatprep.subr.mxu0 0.0
      %1030 = vmatpush1.msra.mxu0 %v409
      %1031 = vmatprep.subr.mxu0 0.0
      %1032 = vmatpush1.msra.mxu0 %v408
      %1033 = vmatprep.subr.mxu0 0.0
      %1034 = vmatpush2.msra.mxu0 %v439
      %1035 = vmatprep.subr.mxu0 0.0
      %1036 = vmatpush2.msra.mxu0 %v438
      %1037 = vmatprep.subr.mxu0 0.0
      %1038 = vmatpush2.msra.mxu0 %v437
      %1039 = vmatprep.subr.mxu0 0.0
      %1040 = vmatpush2.msra.mxu0 %v436
      %1041 = vmatprep.subr.mxu0 0.0
      %1042 = vmatpush2.msra.mxu0 %v435
      %1043 = vmatprep.subr.mxu0 0.0
      %1044 = vmatpush2.msra.mxu0 %v434
      %1045 = vmatprep.subr.mxu0 0.0
      %1046 = vmatpush2.msra.mxu0 %v433
      %1047 = vmatprep.subr.mxu0 0.0
      %1048 = vmatpush2.msra.mxu0 %v432
      %1049 = vmatprep.subr.mxu0 0.0
      %1050 = vmatpush2.msra.mxu0 %v431
      %1051 = vmatprep.subr.mxu0 0.0
      %1052 = vmatpush2.msra.mxu0 %v430
      %1053 = vmatprep.subr.mxu0 0.0
      %1054 = vmatpush2.msra.mxu0 %v429
      %1055 = vmatprep.subr.mxu0 0.0
      %1056 = vmatpush2.msra.mxu0 %v428
      %1057 = vmatprep.subr.mxu0 0.0
      %1058 = vmatpush2.msra.mxu0 %v427
      %1059 = vmatprep.subr.mxu0 0.0
      %1060 = vmatpush2.msra.mxu0 %v426
      %1061 = vmatprep.subr.mxu0 0.0
      %1062 = vmatpush2.msra.mxu0 %v425
      %1063 = vmatprep.subr.mxu0 0.0
      %1064 = vmatpush2.msra.mxu0 %v424
      %1065 = vmatprep.mubr.f32.mxu0 %v234
      %1066 = vmatmul.mubr.f32.gmra.mxu0 %v233
      %v1067 = vpop.f32.mrf.mxu0
      %v1068 = vadd.f32 %v998, %v1067
      %v1069 = vpop.f32.mrf.mxu0
      %1070 = vdwg.mxu0
      %1071 = vmatprep.subr.mxu0 0.0
      %1072 = vmatpush1.msra.mxu0 %v455
      %1073 = vmatprep.subr.mxu0 0.0
      %1074 = vmatpush1.msra.mxu0 %v454
      %1075 = vmatprep.subr.mxu0 0.0
      %1076 = vmatpush1.msra.mxu0 %v453
      %1077 = vmatprep.subr.mxu0 0.0
      %1078 = vmatpush1.msra.mxu0 %v452
      %1079 = vmatprep.subr.mxu0 0.0
      %1080 = vmatpush1.msra.mxu0 %v451
      %1081 = vmatprep.subr.mxu0 0.0
      %1082 = vmatpush1.msra.mxu0 %v450
      %1083 = vmatprep.subr.mxu0 0.0
      %1084 = vmatpush1.msra.mxu0 %v449
      %1085 = vmatprep.subr.mxu0 0.0
      %1086 = vmatpush1.msra.mxu0 %v448
      %1087 = vmatprep.subr.mxu0 0.0
      %1088 = vmatpush1.msra.mxu0 %v447
      %1089 = vmatprep.subr.mxu0 0.0
      %1090 = vmatpush1.msra.mxu0 %v446
      %1091 = vmatprep.subr.mxu0 0.0
      %1092 = vmatpush1.msra.mxu0 %v445
      %1093 = vmatprep.subr.mxu0 0.0
      %1094 = vmatpush1.msra.mxu0 %v444
      %1095 = vmatprep.subr.mxu0 0.0
      %1096 = vmatpush1.msra.mxu0 %v443
      %1097 = vmatprep.subr.mxu0 0.0
      %1098 = vmatpush1.msra.mxu0 %v442
      %1099 = vmatprep.subr.mxu0 0.0
      %1100 = vmatpush1.msra.mxu0 %v441
      %1101 = vmatprep.subr.mxu0 0.0
      %1102 = vmatpush1.msra.mxu0 %v440
      %1103 = vmatprep.subr.mxu0 0.0
      %1104 = vmatpush2.msra.mxu0 %v471
      %1105 = vmatprep.subr.mxu0 0.0
      %1106 = vmatpush2.msra.mxu0 %v470
      %1107 = vmatprep.subr.mxu0 0.0
      %1108 = vmatpush2.msra.mxu0 %v469
      %1109 = vmatprep.subr.mxu0 0.0
      %1110 = vmatpush2.msra.mxu0 %v468
      %1111 = vmatprep.subr.mxu0 0.0
      %1112 = vmatpush2.msra.mxu0 %v467
      %1113 = vmatprep.subr.mxu0 0.0
      %1114 = vmatpush2.msra.mxu0 %v466
      %1115 = vmatprep.subr.mxu0 0.0
      %1116 = vmatpush2.msra.mxu0 %v465
      %1117 = vmatprep.subr.mxu0 0.0
      %1118 = vmatpush2.msra.mxu0 %v464
      %1119 = vmatprep.subr.mxu0 0.0
      %1120 = vmatpush2.msra.mxu0 %v463
      %1121 = vmatprep.subr.mxu0 0.0
      %1122 = vmatpush2.msra.mxu0 %v462
      %1123 = vmatprep.subr.mxu0 0.0
      %1124 = vmatpush2.msra.mxu0 %v461
      %1125 = vmatprep.subr.mxu0 0.0
      %1126 = vmatpush2.msra.mxu0 %v460
      %1127 = vmatprep.subr.mxu0 0.0
      %1128 = vmatpush2.msra.mxu0 %v459
      %1129 = vmatprep.subr.mxu0 0.0
      %1130 = vmatpush2.msra.mxu0 %v458
      %1131 = vmatprep.subr.mxu0 0.0
      %1132 = vmatpush2.msra.mxu0 %v457
      %1133 = vmatprep.subr.mxu0 0.0
      %1134 = vmatpush2.msra.mxu0 %v456
      %1135 = vmatprep.mubr.f32.mxu0 %v236
      %1136 = vmatmul.mubr.f32.gmra.mxu0 %v235
      %v1137 = vpop.f32.mrf.mxu0
      %v1138 = vadd.f32 %v1068, %v1137
      %v1139 = vpop.f32.mrf.mxu0
      %1140 = vdwg.mxu0
      %1141 = vmatprep.subr.mxu0 0.0
      %1142 = vmatpush1.msra.mxu0 %v487
      %1143 = vmatprep.subr.mxu0 0.0
      %1144 = vmatpush1.msra.mxu0 %v486
      %1145 = vmatprep.subr.mxu0 0.0
      %1146 = vmatpush1.msra.mxu0 %v485
      %1147 = vmatprep.subr.mxu0 0.0
      %1148 = vmatpush1.msra.mxu0 %v484
      %1149 = vmatprep.subr.mxu0 0.0
      %1150 = vmatpush1.msra.mxu0 %v483
      %1151 = vmatprep.subr.mxu0 0.0
      %1152 = vmatpush1.msra.mxu0 %v482
      %1153 = vmatprep.subr.mxu0 0.0
      %1154 = vmatpush1.msra.mxu0 %v481
      %1155 = vmatprep.subr.mxu0 0.0
      %1156 = vmatpush1.msra.mxu0 %v480
      %1157 = vmatprep.subr.mxu0 0.0
      %1158 = vmatpush1.msra.mxu0 %v479
      %1159 = vmatprep.subr.mxu0 0.0
      %1160 = vmatpush1.msra.mxu0 %v478
      %1161 = vmatprep.subr.mxu0 0.0
      %1162 = vmatpush1.msra.mxu0 %v477
      %1163 = vmatprep.subr.mxu0 0.0
      %1164 = vmatpush1.msra.mxu0 %v476
      %1165 = vmatprep.subr.mxu0 0.0
      %1166 = vmatpush1.msra.mxu0 %v475
      %1167 = vmatprep.subr.mxu0 0.0
      %1168 = vmatpush1.msra.mxu0 %v474
      %1169 = vmatprep.subr.mxu0 0.0
      %1170 = vmatpush1.msra.mxu0 %v473
      %1171 = vmatprep.subr.mxu0 0.0
      %1172 = vmatpush1.msra.mxu0 %v472
      %1173 = vmatprep.subr.mxu0 0.0
      %1174 = vmatpush2.msra.mxu0 %v503
      %1175 = vmatprep.subr.mxu0 0.0
      %1176 = vmatpush2.msra.mxu0 %v502
      %1177 = vmatprep.subr.mxu0 0.0
      %1178 = vmatpush2.msra.mxu0 %v501
      %1179 = vmatprep.subr.mxu0 0.0
      %1180 = vmatpush2.msra.mxu0 %v500
      %1181 = vmatprep.subr.mxu0 0.0
      %1182 = vmatpush2.msra.mxu0 %v499
      %1183 = vmatprep.subr.mxu0 0.0
      %1184 = vmatpush2.msra.mxu0 %v498
      %1185 = vmatprep.subr.mxu0 0.0
      %1186 = vmatpush2.msra.mxu0 %v497
      %1187 = vmatprep.subr.mxu0 0.0
      %1188 = vmatpush2.msra.mxu0 %v496
      %1189 = vmatprep.subr.mxu0 0.0
      %1190 = vmatpush2.msra.mxu0 %v495
      %1191 = vmatprep.subr.mxu0 0.0
      %1192 = vmatpush2.msra.mxu0 %v494
      %1193 = vmatprep.subr.mxu0 0.0
      %1194 = vmatpush2.msra.mxu0 %v493
      %1195 = vmatprep.subr.mxu0 0.0
      %1196 = vmatpush2.msra.mxu0 %v492
      %1197 = vmatprep.subr.mxu0 0.0
      %1198 = vmatpush2.msra.mxu0 %v491
      %1199 = vmatprep.subr.mxu0 0.0
      %1200 = vmatpush2.msra.mxu0 %v490
      %1201 = vmatprep.subr.mxu0 0.0
      %1202 = vmatpush2.msra.mxu0 %v489
      %1203 = vmatprep.subr.mxu0 0.0
      %1204 = vmatpush2.msra.mxu0 %v488
      %1205 = vmatprep.mubr.f32.mxu0 %v238
      %1206 = vmatmul.mubr.f32.gmra.mxu0 %v237
      %v1207 = vpop.f32.mrf.mxu0
      %v1208 = vadd.f32 %v1138, %v1207
      %v1209 = vpop.f32.mrf.mxu0
      %1210 = vdwg.mxu0
      %1211 = vmatprep.subr.mxu0 0.0
      %1212 = vmatpush1.msra.mxu0 %v519
      %1213 = vmatprep.subr.mxu0 0.0
      %1214 = vmatpush1.msra.mxu0 %v518
      %1215 = vmatprep.subr.mxu0 0.0
      %1216 = vmatpush1.msra.mxu0 %v517
      %1217 = vmatprep.subr.mxu0 0.0
      %1218 = vmatpush1.msra.mxu0 %v516
      %1219 = vmatprep.subr.mxu0 0.0
      %1220 = vmatpush1.msra.mxu0 %v515
      %1221 = vmatprep.subr.mxu0 0.0
      %1222 = vmatpush1.msra.mxu0 %v514
      %1223 = vmatprep.subr.mxu0 0.0
      %1224 = vmatpush1.msra.mxu0 %v513
      %1225 = vmatprep.subr.mxu0 0.0
      %1226 = vmatpush1.msra.mxu0 %v512
      %1227 = vmatprep.subr.mxu0 0.0
      %1228 = vmatpush1.msra.mxu0 %v511
      %1229 = vmatprep.subr.mxu0 0.0
      %1230 = vmatpush1.msra.mxu0 %v510
      %1231 = vmatprep.subr.mxu0 0.0
      %1232 = vmatpush1.msra.mxu0 %v509
      %1233 = vmatprep.subr.mxu0 0.0
      %1234 = vmatpush1.msra.mxu0 %v508
      %1235 = vmatprep.subr.mxu0 0.0
      %1236 = vmatpush1.msra.mxu0 %v507
      %1237 = vmatprep.subr.mxu0 0.0
      %1238 = vmatpush1.msra.mxu0 %v506
      %1239 = vmatprep.subr.mxu0 0.0
      %1240 = vmatpush1.msra.mxu0 %v505
      %1241 = vmatprep.subr.mxu0 0.0
      %1242 = vmatpush1.msra.mxu0 %v504
      %1243 = vmatprep.subr.mxu0 0.0
      %1244 = vmatpush2.msra.mxu0 %v535
      %1245 = vmatprep.subr.mxu0 0.0
      %1246 = vmatpush2.msra.mxu0 %v534
      %1247 = vmatprep.subr.mxu0 0.0
      %1248 = vmatpush2.msra.mxu0 %v533
      %1249 = vmatprep.subr.mxu0 0.0
      %1250 = vmatpush2.msra.mxu0 %v532
      %1251 = vmatprep.subr.mxu0 0.0
      %1252 = vmatpush2.msra.mxu0 %v531
      %1253 = vmatprep.subr.mxu0 0.0
      %1254 = vmatpush2.msra.mxu0 %v530
      %1255 = vmatprep.subr.mxu0 0.0
      %1256 = vmatpush2.msra.mxu0 %v529
      %1257 = vmatprep.subr.mxu0 0.0
      %1258 = vmatpush2.msra.mxu0 %v528
      %1259 = vmatprep.subr.mxu0 0.0
      %1260 = vmatpush2.msra.mxu0 %v527
      %1261 = vmatprep.subr.mxu0 0.0
      %1262 = vmatpush2.msra.mxu0 %v526
      %1263 = vmatprep.subr.mxu0 0.0
      %1264 = vmatpush2.msra.mxu0 %v525
      %1265 = vmatprep.subr.mxu0 0.0
      %1266 = vmatpush2.msra.mxu0 %v524
      %1267 = vmatprep.subr.mxu0 0.0
      %1268 = vmatpush2.msra.mxu0 %v523
      %1269 = vmatprep.subr.mxu0 0.0
      %1270 = vmatpush2.msra.mxu0 %v522
      %1271 = vmatprep.subr.mxu0 0.0
      %1272 = vmatpush2.msra.mxu0 %v521
      %1273 = vmatprep.subr.mxu0 0.0
      %1274 = vmatpush2.msra.mxu0 %v520
      %1275 = vmatprep.mubr.f32.mxu0 %v240
      %1276 = vmatmul.mubr.f32.gmra.mxu0 %v239
      %v1277 = vpop.f32.mrf.mxu0
      %v1278 = vadd.f32 %v1208, %v1277
      %v1279 = vpop.f32.mrf.mxu0
      %1280 = vdwg.mxu0
      %1281 = vmatprep.subr.mxu0 0.0
      %1282 = vmatpush1.msra.mxu0 %v551
      %1283 = vmatprep.subr.mxu0 0.0
      %1284 = vmatpush1.msra.mxu0 %v550
      %1285 = vmatprep.subr.mxu0 0.0
      %1286 = vmatpush1.msra.mxu0 %v549
      %1287 = vmatprep.subr.mxu0 0.0
      %1288 = vmatpush1.msra.mxu0 %v548
      %1289 = vmatprep.subr.mxu0 0.0
      %1290 = vmatpush1.msra.mxu0 %v547
      %1291 = vmatprep.subr.mxu0 0.0
      %1292 = vmatpush1.msra.mxu0 %v546
      %1293 = vmatprep.subr.mxu0 0.0
      %1294 = vmatpush1.msra.mxu0 %v545
      %1295 = vmatprep.subr.mxu0 0.0
      %1296 = vmatpush1.msra.mxu0 %v544
      %1297 = vmatprep.subr.mxu0 0.0
      %1298 = vmatpush1.msra.mxu0 %v543
      %1299 = vmatprep.subr.mxu0 0.0
      %1300 = vmatpush1.msra.mxu0 %v542
      %1301 = vmatprep.subr.mxu0 0.0
      %1302 = vmatpush1.msra.mxu0 %v541
      %1303 = vmatprep.subr.mxu0 0.0
      %1304 = vmatpush1.msra.mxu0 %v540
      %1305 = vmatprep.subr.mxu0 0.0
      %1306 = vmatpush1.msra.mxu0 %v539
      %1307 = vmatprep.subr.mxu0 0.0
      %1308 = vmatpush1.msra.mxu0 %v538
      %1309 = vmatprep.subr.mxu0 0.0
      %1310 = vmatpush1.msra.mxu0 %v537
      %1311 = vmatprep.subr.mxu0 0.0
      %1312 = vmatpush1.msra.mxu0 %v536
      %1313 = vmatprep.subr.mxu0 0.0
      %1314 = vmatpush2.msra.mxu0 %v567
      %1315 = vmatprep.subr.mxu0 0.0
      %1316 = vmatpush2.msra.mxu0 %v566
      %1317 = vmatprep.subr.mxu0 0.0
      %1318 = vmatpush2.msra.mxu0 %v565
      %1319 = vmatprep.subr.mxu0 0.0
      %1320 = vmatpush2.msra.mxu0 %v564
      %1321 = vmatprep.subr.mxu0 0.0
      %1322 = vmatpush2.msra.mxu0 %v563
      %1323 = vmatprep.subr.mxu0 0.0
      %1324 = vmatpush2.msra.mxu0 %v562
      %1325 = vmatprep.subr.mxu0 0.0
      %1326 = vmatpush2.msra.mxu0 %v561
      %1327 = vmatprep.subr.mxu0 0.0
      %1328 = vmatpush2.msra.mxu0 %v560
      %1329 = vmatprep.subr.mxu0 0.0
      %1330 = vmatpush2.msra.mxu0 %v559
      %1331 = vmatprep.subr.mxu0 0.0
      %1332 = vmatpush2.msra.mxu0 %v558
      %1333 = vmatprep.subr.mxu0 0.0
      %1334 = vmatpush2.msra.mxu0 %v557
      %1335 = vmatprep.subr.mxu0 0.0
      %1336 = vmatpush2.msra.mxu0 %v556
      %1337 = vmatprep.subr.mxu0 0.0
      %1338 = vmatpush2.msra.mxu0 %v555
      %1339 = vmatprep.subr.mxu0 0.0
      %1340 = vmatpush2.msra.mxu0 %v554
      %1341 = vmatprep.subr.mxu0 0.0
      %1342 = vmatpush2.msra.mxu0 %v553
      %1343 = vmatprep.subr.mxu0 0.0
      %1344 = vmatpush2.msra.mxu0 %v552
      %1345 = vmatprep.mubr.f32.mxu0 %v242
      %1346 = vmatmul.mubr.f32.gmra.mxu0 %v241
      %v1347 = vpop.f32.mrf.mxu0
      %v1348 = vadd.f32 %v1278, %v1347
      %v1349 = vpop.f32.mrf.mxu0
      %1350 = vdwg.mxu0
      %1351 = vmatprep.subr.mxu0 0.0
      %1352 = vmatpush1.msra.mxu0 %v583
      %1353 = vmatprep.subr.mxu0 0.0
      %1354 = vmatpush1.msra.mxu0 %v582
      %1355 = vmatprep.subr.mxu0 0.0
      %1356 = vmatpush1.msra.mxu0 %v581
      %1357 = vmatprep.subr.mxu0 0.0
      %1358 = vmatpush1.msra.mxu0 %v580
      %1359 = vmatprep.subr.mxu0 0.0
      %1360 = vmatpush1.msra.mxu0 %v579
      %1361 = vmatprep.subr.mxu0 0.0
      %1362 = vmatpush1.msra.mxu0 %v578
      %1363 = vmatprep.subr.mxu0 0.0
      %1364 = vmatpush1.msra.mxu0 %v577
      %1365 = vmatprep.subr.mxu0 0.0
      %1366 = vmatpush1.msra.mxu0 %v576
      %1367 = vmatprep.subr.mxu0 0.0
      %1368 = vmatpush1.msra.mxu0 %v575
      %1369 = vmatprep.subr.mxu0 0.0
      %1370 = vmatpush1.msra.mxu0 %v574
      %1371 = vmatprep.subr.mxu0 0.0
      %1372 = vmatpush1.msra.mxu0 %v573
      %1373 = vmatprep.subr.mxu0 0.0
      %1374 = vmatpush1.msra.mxu0 %v572
      %1375 = vmatprep.subr.mxu0 0.0
      %1376 = vmatpush1.msra.mxu0 %v571
      %1377 = vmatprep.subr.mxu0 0.0
      %1378 = vmatpush1.msra.mxu0 %v570
      %1379 = vmatprep.subr.mxu0 0.0
      %1380 = vmatpush1.msra.mxu0 %v569
      %1381 = vmatprep.subr.mxu0 0.0
      %1382 = vmatpush1.msra.mxu0 %v568
      %1383 = vmatprep.subr.mxu0 0.0
      %1384 = vmatpush2.msra.mxu0 %v599
      %1385 = vmatprep.subr.mxu0 0.0
      %1386 = vmatpush2.msra.mxu0 %v598
      %1387 = vmatprep.subr.mxu0 0.0
      %1388 = vmatpush2.msra.mxu0 %v597
      %1389 = vmatprep.subr.mxu0 0.0
      %1390 = vmatpush2.msra.mxu0 %v596
      %1391 = vmatprep.subr.mxu0 0.0
      %1392 = vmatpush2.msra.mxu0 %v595
      %1393 = vmatprep.subr.mxu0 0.0
      %1394 = vmatpush2.msra.mxu0 %v594
      %1395 = vmatprep.subr.mxu0 0.0
      %1396 = vmatpush2.msra.mxu0 %v593
      %1397 = vmatprep.subr.mxu0 0.0
      %1398 = vmatpush2.msra.mxu0 %v592
      %1399 = vmatprep.subr.mxu0 0.0
      %1400 = vmatpush2.msra.mxu0 %v591
      %1401 = vmatprep.subr.mxu0 0.0
      %1402 = vmatpush2.msra.mxu0 %v590
      %1403 = vmatprep.subr.mxu0 0.0
      %1404 = vmatpush2.msra.mxu0 %v589
      %1405 = vmatprep.subr.mxu0 0.0
      %1406 = vmatpush2.msra.mxu0 %v588
      %1407 = vmatprep.subr.mxu0 0.0
      %1408 = vmatpush2.msra.mxu0 %v587
      %1409 = vmatprep.subr.mxu0 0.0
      %1410 = vmatpush2.msra.mxu0 %v586
      %1411 = vmatprep.subr.mxu0 0.0
      %1412 = vmatpush2.msra.mxu0 %v585
      %1413 = vmatprep.subr.mxu0 0.0
      %1414 = vmatpush2.msra.mxu0 %v584
      %1415 = vmatprep.mubr.f32.mxu0 %v244
      %1416 = vmatmul.mubr.f32.gmra.mxu0 %v243
      %v1417 = vpop.f32.mrf.mxu0
      %v1418 = vadd.f32 %v1348, %v1417
      %v1419 = vpop.f32.mrf.mxu0
      %1420 = vdwg.mxu0
      %1421 = vmatprep.subr.mxu0 0.0
      %1422 = vmatpush1.msra.mxu0 %v615
      %1423 = vmatprep.subr.mxu0 0.0
      %1424 = vmatpush1.msra.mxu0 %v614
      %1425 = vmatprep.subr.mxu0 0.0
      %1426 = vmatpush1.msra.mxu0 %v613
      %1427 = vmatprep.subr.mxu0 0.0
      %1428 = vmatpush1.msra.mxu0 %v612
      %1429 = vmatprep.subr.mxu0 0.0
      %1430 = vmatpush1.msra.mxu0 %v611
      %1431 = vmatprep.subr.mxu0 0.0
      %1432 = vmatpush1.msra.mxu0 %v610
      %1433 = vmatprep.subr.mxu0 0.0
      %1434 = vmatpush1.msra.mxu0 %v609
      %1435 = vmatprep.subr.mxu0 0.0
      %1436 = vmatpush1.msra.mxu0 %v608
      %1437 = vmatprep.subr.mxu0 0.0
      %1438 = vmatpush1.msra.mxu0 %v607
      %1439 = vmatprep.subr.mxu0 0.0
      %1440 = vmatpush1.msra.mxu0 %v606
      %1441 = vmatprep.subr.mxu0 0.0
      %1442 = vmatpush1.msra.mxu0 %v605
      %1443 = vmatprep.subr.mxu0 0.0
      %1444 = vmatpush1.msra.mxu0 %v604
      %1445 = vmatprep.subr.mxu0 0.0
      %1446 = vmatpush1.msra.mxu0 %v603
      %1447 = vmatprep.subr.mxu0 0.0
      %1448 = vmatpush1.msra.mxu0 %v602
      %1449 = vmatprep.subr.mxu0 0.0
      %1450 = vmatpush1.msra.mxu0 %v601
      %1451 = vmatprep.subr.mxu0 0.0
      %1452 = vmatpush1.msra.mxu0 %v600
      %1453 = vmatprep.subr.mxu0 0.0
      %1454 = vmatpush2.msra.mxu0 %v631
      %1455 = vmatprep.subr.mxu0 0.0
      %1456 = vmatpush2.msra.mxu0 %v630
      %1457 = vmatprep.subr.mxu0 0.0
      %1458 = vmatpush2.msra.mxu0 %v629
      %1459 = vmatprep.subr.mxu0 0.0
      %1460 = vmatpush2.msra.mxu0 %v628
      %1461 = vmatprep.subr.mxu0 0.0
      %1462 = vmatpush2.msra.mxu0 %v627
      %1463 = vmatprep.subr.mxu0 0.0
      %1464 = vmatpush2.msra.mxu0 %v626
      %1465 = vmatprep.subr.mxu0 0.0
      %1466 = vmatpush2.msra.mxu0 %v625
      %1467 = vmatprep.subr.mxu0 0.0
      %1468 = vmatpush2.msra.mxu0 %v624
      %1469 = vmatprep.subr.mxu0 0.0
      %1470 = vmatpush2.msra.mxu0 %v623
      %1471 = vmatprep.subr.mxu0 0.0
      %1472 = vmatpush2.msra.mxu0 %v622
      %1473 = vmatprep.subr.mxu0 0.0
      %1474 = vmatpush2.msra.mxu0 %v621
      %1475 = vmatprep.subr.mxu0 0.0
      %1476 = vmatpush2.msra.mxu0 %v620
      %1477 = vmatprep.subr.mxu0 0.0
      %1478 = vmatpush2.msra.mxu0 %v619
      %1479 = vmatprep.subr.mxu0 0.0
      %1480 = vmatpush2.msra.mxu0 %v618
      %1481 = vmatprep.subr.mxu0 0.0
      %1482 = vmatpush2.msra.mxu0 %v617
      %1483 = vmatprep.subr.mxu0 0.0
      %1484 = vmatpush2.msra.mxu0 %v616
      %1485 = vmatprep.mubr.f32.mxu0 %v246
      %1486 = vmatmul.mubr.f32.gmra.mxu0 %v245
      %v1487 = vpop.f32.mrf.mxu0
      %v1488 = vadd.f32 %v1418, %v1487
      %v1489 = vpop.f32.mrf.mxu0
      %1490 = vdwg.mxu0
      %1491 = vmatprep.subr.mxu0 0.0
      %1492 = vmatpush1.msra.mxu0 0.0
      %1493 = vmatprep.subr.mxu0 0.0
      %1494 = vmatpush1.msra.mxu0 0.0
      %1495 = vmatprep.subr.mxu0 0.0
      %1496 = vmatpush1.msra.mxu0 0.0
      %1497 = vmatprep.subr.mxu0 0.0
      %1498 = vmatpush1.msra.mxu0 0.0
      %1499 = vmatprep.subr.mxu0 0.0
      %1500 = vmatpush1.msra.mxu0 0.0
      %1501 = vmatprep.subr.mxu0 0.0
      %1502 = vmatpush1.msra.mxu0 0.0
      %1503 = vmatprep.subr.mxu0 0.0
      %1504 = vmatpush1.msra.mxu0 0.0
      %1505 = vmatprep.subr.mxu0 0.0
      %1506 = vmatpush1.msra.mxu0 0.0
      %1507 = vmatprep.subr.mxu0 0.0
      %1508 = vmatpush1.msra.mxu0 %v639
      %1509 = vmatprep.subr.mxu0 0.0
      %1510 = vmatpush1.msra.mxu0 %v638
      %1511 = vmatprep.subr.mxu0 0.0
      %1512 = vmatpush1.msra.mxu0 %v637
      %1513 = vmatprep.subr.mxu0 0.0
      %1514 = vmatpush1.msra.mxu0 %v636
      %1515 = vmatprep.subr.mxu0 0.0
      %1516 = vmatpush1.msra.mxu0 %v635
      %1517 = vmatprep.subr.mxu0 0.0
      %1518 = vmatpush1.msra.mxu0 %v634
      %1519 = vmatprep.subr.mxu0 0.0
      %1520 = vmatpush1.msra.mxu0 %v633
      %1521 = vmatprep.subr.mxu0 0.0
      %1522 = vmatpush1.msra.mxu0 %v632
      %1523 = vmatprep.subr.mxu0 0.0
      %1524 = vmatpush2.msra.mxu0 0.0
      %1525 = vmatprep.subr.mxu0 0.0
      %1526 = vmatpush2.msra.mxu0 0.0
      %1527 = vmatprep.subr.mxu0 0.0
      %1528 = vmatpush2.msra.mxu0 0.0
      %1529 = vmatprep.subr.mxu0 0.0
      %1530 = vmatpush2.msra.mxu0 0.0
      %1531 = vmatprep.subr.mxu0 0.0
      %1532 = vmatpush2.msra.mxu0 0.0
      %1533 = vmatprep.subr.mxu0 0.0
      %1534 = vmatpush2.msra.mxu0 0.0
      %1535 = vmatprep.subr.mxu0 0.0
      %1536 = vmatpush2.msra.mxu0 0.0
      %1537 = vmatprep.subr.mxu0 0.0
      %1538 = vmatpush2.msra.mxu0 0.0
      %1539 = vmatprep.subr.mxu0 0.0
      %1540 = vmatpush2.msra.mxu0 0.0
      %1541 = vmatprep.subr.mxu0 0.0
      %1542 = vmatpush2.msra.mxu0 0.0
      %1543 = vmatprep.subr.mxu0 0.0
      %1544 = vmatpush2.msra.mxu0 0.0
      %1545 = vmatprep.subr.mxu0 0.0
      %1546 = vmatpush2.msra.mxu0 0.0
      %1547 = vmatprep.subr.mxu0 0.0
      %1548 = vmatpush2.msra.mxu0 0.0
      %1549 = vmatprep.subr.mxu0 0.0
      %1550 = vmatpush2.msra.mxu0 0.0
      %1551 = vmatprep.subr.mxu0 0.0
      %1552 = vmatpush2.msra.mxu0 0.0
      %1553 = vmatprep.subr.mxu0 0.0
      %1554 = vmatpush2.msra.mxu0 0.0
      %1555 = vmatprep.mubr.f32.mxu0 0.0
      %1556 = vmatmul.mubr.f32.gmra.mxu0 %v649
      %v1557 = vpop.f32.mrf.mxu0
      %v1558 = vadd.f32 %v1488, %v1557
      %v1559 = vpop.f32.mrf.mxu0
      %1560 = vdwg.mxu0
      %v1561 = vmax.f32 %v1558, 0.0
      %v1562 = vld [vmem:[%s3] sm:$0xff]
      %v1563 = vld [vmem:[%s3 + $0x8] sm:$0xff]
      %v1564 = vld [vmem:[%s3 + $0x10] sm:$0xff]
      %v1565 = vld [vmem:[%s3 + $0x18] sm:$0xff]
      %v1566 = vld [vmem:[%s3 + $0x20] sm:$0xff]
      %v1567 = vld [vmem:[%s3 + $0x28] sm:$0xff]
      %v1568 = vld [vmem:[%s3 + $0x30] sm:$0xff]
      %v1569 = vld [vmem:[%s3 + $0x38] sm:$0xff]
      %v1570 = vld [vmem:[%s3 + $0x40] sm:$0xff]
      %v1571 = vld [vmem:[%s3 + $0x48] sm:$0xff]
      %v1572 = vld [vmem:[%s3 + $0x50] sm:$0xff]
      %v1573 = vld [vmem:[%s3 + $0x58] sm:$0xff]
      %v1574 = vld [vmem:[%s3 + $0x60] sm:$0xff]
      %v1575 = vld [vmem:[%s3 + $0x68] sm:$0xff]
      %v1576 = vld [vmem:[%s3 + $0x70] sm:$0xff]
      %v1577 = vld [vmem:[%s3 + $0x78] sm:$0xff]
      %v1578 = vld [vmem:[%s4] sm:$0x1]
      %v1580 = vlaneseq
      %v1581 = vshrl.u32 %v1580, 7
      %v1582 = vsub.s32 0, %v1581
      %v1583 = vrot.slane %v1578, %v1582
      %1585 = vmatprep.subr.mxu0 0.0
      %1586 = vmatpush1.msra.mxu0 %v1577
      %1587 = vmatprep.subr.mxu0 0.0
      %1588 = vmatpush1.msra.mxu0 %v1576
      %1589 = vmatprep.subr.mxu0 0.0
      %1590 = vmatpush1.msra.mxu0 %v1575
      %1591 = vmatprep.subr.mxu0 0.0
      %1592 = vmatpush1.msra.mxu0 %v1574
      %1593 = vmatprep.subr.mxu0 0.0
      %1594 = vmatpush1.msra.mxu0 %v1573
      %1595 = vmatprep.subr.mxu0 0.0
      %1596 = vmatpush1.msra.mxu0 %v1572
      %1597 = vmatprep.subr.mxu0 0.0
      %1598 = vmatpush1.msra.mxu0 %v1571
      %1599 = vmatprep.subr.mxu0 0.0
      %1600 = vmatpush1.msra.mxu0 %v1570
      %1601 = vmatprep.subr.mxu0 0.0
      %1602 = vmatpush1.msra.mxu0 %v1569
      %1603 = vmatprep.subr.mxu0 0.0
      %1604 = vmatpush1.msra.mxu0 %v1568
      %1605 = vmatprep.subr.mxu0 0.0
      %1606 = vmatpush1.msra.mxu0 %v1567
      %1607 = vmatprep.subr.mxu0 0.0
      %1608 = vmatpush1.msra.mxu0 %v1566
      %1609 = vmatprep.subr.mxu0 0.0
      %1610 = vmatpush1.msra.mxu0 %v1565
      %1611 = vmatprep.subr.mxu0 0.0
      %1612 = vmatpush1.msra.mxu0 %v1564
      %1613 = vmatprep.subr.mxu0 0.0
      %1614 = vmatpush1.msra.mxu0 %v1563
      %1615 = vmatprep.subr.mxu0 0.0
      %1616 = vmatpush1.msra.mxu0 %v1562
      %1617 = vmatprep.subr.mxu0 0.0
      %1618 = vmatpush2.msra.mxu0 0.0
      %1619 = vmatprep.subr.mxu0 0.0
      %1620 = vmatpush2.msra.mxu0 0.0
      %1621 = vmatprep.subr.mxu0 0.0
      %1622 = vmatpush2.msra.mxu0 0.0
      %1623 = vmatprep.subr.mxu0 0.0
      %1624 = vmatpush2.msra.mxu0 0.0
      %1625 = vmatprep.subr.mxu0 0.0
      %1626 = vmatpush2.msra.mxu0 0.0
      %1627 = vmatprep.subr.mxu0 0.0
      %1628 = vmatpush2.msra.mxu0 0.0
      %1629 = vmatprep.subr.mxu0 0.0
      %1630 = vmatpush2.msra.mxu0 0.0
      %1631 = vmatprep.subr.mxu0 0.0
      %1632 = vmatpush2.msra.mxu0 0.0
      %1633 = vmatprep.subr.mxu0 0.0
      %1634 = vmatpush2.msra.mxu0 0.0
      %1635 = vmatprep.subr.mxu0 0.0
      %1636 = vmatpush2.msra.mxu0 0.0
      %1637 = vmatprep.subr.mxu0 0.0
      %1638 = vmatpush2.msra.mxu0 0.0
      %1639 = vmatprep.subr.mxu0 0.0
      %1640 = vmatpush2.msra.mxu0 0.0
      %1641 = vmatprep.subr.mxu0 0.0
      %1642 = vmatpush2.msra.mxu0 0.0
      %1643 = vmatprep.subr.mxu0 0.0
      %1644 = vmatpush2.msra.mxu0 0.0
      %1645 = vmatprep.subr.mxu0 0.0
      %1646 = vmatpush2.msra.mxu0 0.0
      %1647 = vmatprep.subr.mxu0 0.0
      %1648 = vmatpush2.msra.mxu0 0.0
      %1649 = vmatprep.mubr.f32.mxu0 0.0
      %1650 = vmatmul.mubr.f32.gmra.mxu0 %v1561
      %v1651 = vpop.f32.mrf.mxu0
      %v1652 = vadd.f32 %v1583, %v1651
      %v1653 = vpop.f32.mrf.mxu0
      %1654 = vdwg.mxu0
      %vm1655 = vcmask 80896
      %1656 = vst.msk [vmem:[%s222] sm:$0xff] %vm1655, %v1652
      %p1657 = scmp.lt.s32.totalorder %s16, 1
      %s1658 = scalar_select %p1657, %s16, 1
      %s1659 = smul.addr %s1658, 8
      %s1660 = scalar_lea.vmem %s5, %s1659
      // Predicated region
      $region41: #{conv_test_net_forward.5} parent=39 // pred_check
        %p1661 = pneg %p144
      $region42: #{conv_test_net_forward.5} parent=39 // pred_check_branch
        %1663 = sbr.rel (%p1661) target = $region44
      $region43: #{conv_test_net_forward.5} parent=39 // pred_region
        _
      $region44: #{conv_test_net_forward.5} parent=39 // pred_fallthru
        _
    $region40: #{conv_test_net_forward.5} parent=5 // pred_fallthru
      _
    %p1664 = scmp.le.s32.totalorder 2, %s11
    // Predicated region
    $region45: #{conv_test_net_forward.5} parent=5 // pred_check
      %p1665 = pneg %p1664
    $region46: #{conv_test_net_forward.5} parent=5 // pred_check_branch
      %1667 = sbr.rel (%p1665) target = $region48
    $region47: #{conv_test_net_forward.5} parent=5 // pred_region
      %s1668 = ssub.s32 %s11, 2
      // Predicated region
      $region49: #{conv_test_net_forward.5} parent=47 // pred_check
        %p1669 = pneg %p150
      $region50: #{conv_test_net_forward.5} parent=47 // pred_check_branch
        %1671 = sbr.rel (%p1669) target = $region52
      $region51: #{conv_test_net_forward.5} parent=47 // pred_region
        %p1672 = scmp.lt.s32.totalorder %s17, 1
        %s1673 = scalar_select %p1672, %s17, 1
        %s1674 = smul.addr %s1673, 8
        %s1675 = scalar_lea.vmem %s5, %s1674
      $region52: #{conv_test_net_forward.5} parent=47 // pred_fallthru
        _
    $region48: #{conv_test_net_forward.5} parent=5 // pred_fallthru
      _
  $region6: #{conv_test_net_forward.5} parent=0 // loop_footer
    %s15 = sadd.s32 1, %s11
  $region7: #{conv_test_net_forward.5} parent=0 // loop_footer_branch
    %10 = sbr.rel target = $region3
  $region8: #{conv_test_net_forward.5} parent=0 // loop_exit
    _

</llo_original>
